<compile_context>
chip_gen: v5e
topology: v5e:2x2
jax: 0.10.0
libtpu: 0.0.40
codegen_flags: <defaults>
</compile_context>

<pallas_src>
import functools

import jax
import jax.numpy as jnp
import numpy as np
from jax.experimental import pallas as pl
from jax.experimental.pallas import tpu as pltpu

EPS = 1e-5
LANE = 128          # TPU lane width; feature/class dims padded to this
TK = 256            # column tile of A_hat / row tile of the transformed features


def _round_up(v, m):
    return (v + m - 1) // m * m


# --------------------------------------------------------------------------- #
# kernel
# --------------------------------------------------------------------------- #
def _masked_bn(h, row_mask, n_valid, gamma, beta):
    """Training-mode BatchNorm1d over the node axis (one-pass stats),
    restricted to the first `n_valid` (un-padded) rows."""
    hm = h * row_mask
    s = jnp.sum(hm, axis=0, keepdims=True)
    ss = jnp.sum(hm * h, axis=0, keepdims=True)          # = sum(mask * h^2)
    inv_n = 1.0 / float(n_valid)
    mean = s * inv_n
    var = jnp.maximum(ss * inv_n - mean * mean, 0.0)
    return (h - mean) * jax.lax.rsqrt(var + EPS) * gamma + beta


def gcn_kernel(a_ref, xw1_ref,
               g1_ref, be1_ref,
               w2_ref, g2_ref, be2_ref,
               wh_ref, bh_ref, g3_ref, be3_ref,
               wf_ref, bf_ref,
               out_ref,
               acc_ref, h1w2_ref,
               *, n_valid, out_c, h1_p, h2_p, tk):
    p = pl.program_id(0)                  # 0: conv1 aggregation, 1: conv2 + head
    k = pl.program_id(1)                  # column tile of A_hat
    k_last = pl.num_programs(1) - 1

    @pl.when(k == 0)
    def _zero_acc():
        acc_ref[...] = jnp.zeros_like(acc_ref)

    a_tile = a_ref[...]                   # (n_pad, tk) bf16, one contiguous DMA

    # ------------- phase 0:  acc += A[:, k] @ XW1[k] -------------------------
    @pl.when(p == 0)
    def _conv1_step():
        acc_ref[:, 0:h1_p] = acc_ref[:, 0:h1_p] + jnp.dot(
            a_tile, xw1_ref[...], preferred_element_type=jnp.float32)

    @pl.when(jnp.logical_and(p == 0, k == k_last))
    def _conv1_finish():                  # bn1 -> relu -> (@W2) -> bf16 scratch
        n_pad = out_ref.shape[0]
        row_ids = jax.lax.broadcasted_iota(jnp.int32, (n_pad, 1), 0)
        row_mask = (row_ids < n_valid).astype(jnp.float32)
        h = _masked_bn(acc_ref[:, 0:h1_p], row_mask, n_valid,
                       g1_ref[...], be1_ref[...])
        h = jnp.maximum(h, 0.0)
        # Hoist H1 @ W2 out of the phase-1 loop; keep scratch in bf16.
        h1w2_ref[...] = jnp.dot(h.astype(jnp.bfloat16), w2_ref[...],
                                preferred_element_type=jnp.float32
                                ).astype(jnp.bfloat16)

    # ------------- phase 1:  acc += A[:, k] @ H1W2[k] -------------------------
    @pl.when(p == 1)
    def _conv2_step():
        start = pl.multiple_of(k * tk, tk)
        acc_ref[:, 0:h2_p] = acc_ref[:, 0:h2_p] + jnp.dot(
            a_tile, h1w2_ref[pl.ds(start, tk), :],
            preferred_element_type=jnp.float32)

    @pl.when(jnp.logical_and(p == 1, k == k_last))
    def _head():   # bn2 -> relu -> fc -> relu -> bn3 -> fc -> log_softmax
        n_pad = out_ref.shape[0]
        row_ids = jax.lax.broadcasted_iota(jnp.int32, (n_pad, 1), 0)
        row_mask = (row_ids < n_valid).astype(jnp.float32)

        h = _masked_bn(acc_ref[:, 0:h2_p], row_mask, n_valid,
                       g2_ref[...], be2_ref[...])
        h = jnp.maximum(h, 0.0)

        h = jnp.dot(h, wh_ref[...], preferred_element_type=jnp.float32) + bh_ref[...]
        h = jnp.maximum(h, 0.0)
        h = _masked_bn(h, row_mask, n_valid, g3_ref[...], be3_ref[...])

        logits = jnp.dot(h, wf_ref[...], preferred_element_type=jnp.float32) + bf_ref[...]
        col_ids = jax.lax.broadcasted_iota(jnp.int32, logits.shape, 1)
        logits = jnp.where(col_ids < out_c, logits, -1e30)    # mask padded classes
        m = jnp.max(logits, axis=1, keepdims=True)
        lse = jnp.log(jnp.sum(jnp.exp(logits - m), axis=1, keepdims=True)) + m
        out_ref[...] = logits - lse


# --------------------------------------------------------------------------- #
# wrapper
# --------------------------------------------------------------------------- #
def gcn_forward(a_hat, x, params, *, tk=TK):
    n, in_c = x.shape
    h1c = params["w1"].shape[1]
    h2c = params["w2"].shape[1]
    hoc = params["wh"].shape[1]
    outc = params["wf"].shape[1]

    n_pad = _round_up(max(n, tk), tk)
    h1_p = _round_up(h1c, LANE)
    h2_p = _round_up(h2c, LANE)
    ho_p = _round_up(hoc, LANE)
    out_p = _round_up(outc, LANE)
    acc_w = max(h1_p, h2_p)
    kt = n_pad // tk

    def pad2(a, r, c, fill=0.0):
        a = jnp.asarray(a, jnp.float32)
        return jnp.pad(a, ((0, r - a.shape[0]), (0, c - a.shape[1])),
                       constant_values=fill)

    # A_hat: pad (zeros!) and pre-tile into contiguous (kt, n_pad, tk) bf16 so
    # each streamed tile is one big contiguous DMA.
    a_p = pad2(a_hat, n_pad, n_pad).astype(jnp.bfloat16)
    a_tiled = a_p.reshape(n_pad, kt, tk).transpose(1, 0, 2)   # (kt, n_pad, tk)

    # Precompute XW1 in XLA (f32 HIGHEST), stream bf16 tiles into the kernel.
    x_rows = jnp.pad(jnp.asarray(x, jnp.float32), ((0, n_pad - n), (0, 0)))
    w1_cols = jnp.pad(jnp.asarray(params["w1"], jnp.float32),
                      ((0, 0), (0, h1_p - h1c)))
    xw1 = jnp.dot(x_rows, w1_cols,
                  precision=jax.lax.Precision.HIGHEST).astype(jnp.bfloat16)

    g1 = pad2(params["g1"], 1, h1_p, 1.0)
    be1 = pad2(params["be1"], 1, h1_p)
    w2 = pad2(params["w2"], h1_p, h2_p).astype(jnp.bfloat16)
    g2 = pad2(params["g2"], 1, h2_p, 1.0)
    be2 = pad2(params["be2"], 1, h2_p)
    wh = pad2(params["wh"], h2_p, ho_p)
    bh = pad2(params["bh"], 1, ho_p)
    g3 = pad2(params["g3"], 1, ho_p, 1.0)
    be3 = pad2(params["be3"], 1, ho_p)
    wf = pad2(params["wf"], ho_p, out_p)
    bf = pad2(params["bf"], 1, out_p)

    const = lambda p, k: (0, 0)           # resident blocks (weights, BN params, output)

    kernel = functools.partial(gcn_kernel, n_valid=n, out_c=outc,
                               h1_p=h1_p, h2_p=h2_p, tk=tk)

    in_specs = [
        # A_hat tile k: one contiguous (n_pad, tk) slab per grid step
        pl.BlockSpec((None, n_pad, tk), lambda p, k: (k, 0, 0)),
        # XW1 row tile; phase-aware index so phase 1 does not re-stream tiles
        pl.BlockSpec((tk, h1_p), lambda p, k: (k * (1 - p), 0)),
        pl.BlockSpec((1, h1_p), const),
        pl.BlockSpec((1, h1_p), const),
        pl.BlockSpec((h1_p, h2_p), const),
        pl.BlockSpec((1, h2_p), const),
        pl.BlockSpec((1, h2_p), const),
        pl.BlockSpec((h2_p, ho_p), const),
        pl.BlockSpec((1, ho_p), const),
        pl.BlockSpec((1, ho_p), const),
        pl.BlockSpec((1, ho_p), const),
        pl.BlockSpec((ho_p, out_p), const),
        pl.BlockSpec((1, out_p), const),
    ]

    out = pl.pallas_call(
        kernel,
        out_shape=jax.ShapeDtypeStruct((n_pad, out_p), jnp.float32),
        grid=(2, kt),
        in_specs=in_specs,
        out_specs=pl.BlockSpec((n_pad, out_p), const),
        scratch_shapes=[pltpu.VMEM((n_pad, acc_w), jnp.float32),    # aggregation accumulator
                        pltpu.VMEM((n_pad, h1_p), jnp.bfloat16)],   # bf16 H1 @ W2 activations
        compiler_params=pltpu.CompilerParams(
            dimension_semantics=("arbitrary", "arbitrary"),
            vmem_limit_bytes=64 * 1024 * 1024),
    )(a_tiled, xw1, g1, be1, w2, g2, be2, wh, bh, g3, be3, wf, bf)

    return out[:n, :outc]


# --------------------------------------------------------------------------- #
# glue (plain JAX) + reference
# --------------------------------------------------------------------------- #
def build_normalized_adjacency(edge_index, num_nodes):
    """Dense A_hat = D^-1/2 (A + I) D^-1/2 (PyG GCNConv default, aggr='add')."""
    src, dst = edge_index
    a = jnp.zeros((num_nodes, num_nodes), jnp.float32)
    a = a.at[dst, src].set(1.0)                       # messages flow src -> dst
    a = a + jnp.eye(num_nodes, dtype=jnp.float32)     # self loops
    deg = jnp.sum(a, axis=1)
    dinv = jnp.where(deg > 0, 1.0 / jnp.sqrt(deg), 0.0)
    return dinv[:, None] * a * dinv[None, :]


def init_params(key, in_c, h1, h2, hout, out_c):
    ks = jax.random.split(key, 4)

    def lin(k, fi, fo):
        bound = 1.0 / np.sqrt(fi)
        w = jax.random.uniform(k, (fi, fo), jnp.float32, -bound, bound)
        b = jnp.zeros((1, fo), jnp.float32)
        return w, b

    # conv biases are omitted: exactly cancelled by the training-mode BN that
    # immediately follows each conv.
    w1, _ = lin(ks[0], in_c, h1)
    w2, _ = lin(ks[1], h1, h2)
    wh, bh = lin(ks[2], h2, hout)
    wf, bf = lin(ks[3], hout, out_c)
    return dict(
        w1=w1, g1=jnp.ones((1, h1), jnp.float32), be1=jnp.zeros((1, h1), jnp.float32),
        w2=w2, g2=jnp.ones((1, h2), jnp.float32), be2=jnp.zeros((1, h2), jnp.float32),
        wh=wh, bh=bh, g3=jnp.ones((1, hout), jnp.float32), be3=jnp.zeros((1, hout), jnp.float32),
        wf=wf, bf=bf,
    )


def reference_forward(a_hat, x, p):
    """Pure-JAX reference with the same numerics as the kernel (bf16 A@H
    aggregation, bf16 feature transforms, f32 accumulation, train-mode BN)."""
    hi = jax.lax.Precision.HIGHEST
    a_bf = a_hat.astype(jnp.bfloat16)

    def bn(h, g, b):
        mean = jnp.mean(h, axis=0, keepdims=True)
        var = jnp.mean((h - mean) ** 2, axis=0, keepdims=True)
        return (h - mean) * jax.lax.rsqrt(var + EPS) * g + b

    xw1 = jnp.dot(x, p["w1"], precision=hi).astype(jnp.bfloat16)
    h = jnp.dot(a_bf, xw1, preferred_element_type=jnp.float32)
    h = jnp.maximum(bn(h, p["g1"], p["be1"]), 0.0)

    hw2 = jnp.dot(h.astype(jnp.bfloat16), p["w2"].astype(jnp.bfloat16),
                  preferred_element_type=jnp.float32).astype(jnp.bfloat16)
    h = jnp.dot(a_bf, hw2, preferred_element_type=jnp.float32)
    h = jnp.maximum(bn(h, p["g2"], p["be2"]), 0.0)

    h = jnp.maximum(jnp.dot(h, p["wh"], precision=hi) + p["bh"], 0.0)
    h = bn(h, p["g3"], p["be3"])
    h = jnp.dot(h, p["wf"], precision=hi) + p["bf"]
    return jax.nn.log_softmax(h, axis=1)


if __name__ == "__main__":
    # small, module-consistent shapes
    N = 16                                   # nodes
    IN_C, H1, H2, HOUT, OUT_C = 8, 16, 16, 16, 4

    key = jax.random.PRNGKey(0)
    kx, kp = jax.random.split(key)

    x = jax.random.normal(kx, (N, IN_C), jnp.float32)

    # deterministic ring graph (undirected -> both directions)
    src = np.arange(N)
    dst = (src + 1) % N
    edge_index = jnp.asarray(
        np.stack([np.concatenate([src, dst]), np.concatenate([dst, src])]),
        dtype=jnp.int32)

    a_hat = build_normalized_adjacency(edge_index, N)
    params = init_params(kp, IN_C, H1, H2, HOUT, OUT_C)

    out = jax.block_until_ready(gcn_forward(a_hat, x, params))
    ref = jax.block_until_ready(reference_forward(a_hat, x, params))
    np.testing.assert_allclose(np.asarray(out), np.asarray(ref),
                               rtol=5e-2, atol=5e-2)

    print("KERNEL_OK")
</pallas_src>

<mosaic_0001>
module attributes {stable_mosaic.version = 11 : i64} {
  func.func @gcn_kernel(%arg0: i32, %arg1: i32, %arg2: memref<1x256x256xbf16, #tpu.memory_space<vmem>>, %arg3: memref<256x128xbf16, #tpu.memory_space<vmem>>, %arg4: memref<1x128xf32, #tpu.memory_space<vmem>>, %arg5: memref<1x128xf32, #tpu.memory_space<vmem>>, %arg6: memref<128x128xbf16, #tpu.memory_space<vmem>>, %arg7: memref<1x128xf32, #tpu.memory_space<vmem>>, %arg8: memref<1x128xf32, #tpu.memory_space<vmem>>, %arg9: memref<128x128xf32, #tpu.memory_space<vmem>>, %arg10: memref<1x128xf32, #tpu.memory_space<vmem>>, %arg11: memref<1x128xf32, #tpu.memory_space<vmem>>, %arg12: memref<1x128xf32, #tpu.memory_space<vmem>>, %arg13: memref<128x128xf32, #tpu.memory_space<vmem>>, %arg14: memref<1x128xf32, #tpu.memory_space<vmem>>, %arg15: memref<256x128xf32, #tpu.memory_space<vmem>>, %arg16: memref<256x128xf32, #tpu.memory_space<vmem>>, %arg17: memref<256x128xbf16, #tpu.memory_space<vmem>>) attributes {dimension_semantics = [#tpu.dimension_semantics<arbitrary>, #tpu.dimension_semantics<arbitrary>], iteration_bounds = array<i64: 2, 1>, scalar_prefetch = 0 : i64, scratch_operands = 2 : i64, tpu.core_type = #tpu.core_type<tc>, window_params = [{transform_indices = @transform_0, window_bounds = array<i64: 1, 256, 256>}, {transform_indices = @transform_1, window_bounds = array<i64: 256, 128>}, {pipeline_mode = #tpu.pipeline_mode<synchronous>, transform_indices = @transform_2, window_bounds = array<i64: 1, 128>}, {pipeline_mode = #tpu.pipeline_mode<synchronous>, transform_indices = @transform_3, window_bounds = array<i64: 1, 128>}, {pipeline_mode = #tpu.pipeline_mode<synchronous>, transform_indices = @transform_4, window_bounds = array<i64: 128, 128>}, {pipeline_mode = #tpu.pipeline_mode<synchronous>, transform_indices = @transform_5, window_bounds = array<i64: 1, 128>}, {pipeline_mode = #tpu.pipeline_mode<synchronous>, transform_indices = @transform_6, window_bounds = array<i64: 1, 128>}, {pipeline_mode = #tpu.pipeline_mode<synchronous>, transform_indices = @transform_7, window_bounds = array<i64: 128, 128>}, {pipeline_mode = #tpu.pipeline_mode<synchronous>, transform_indices = @transform_8, window_bounds = array<i64: 1, 128>}, {pipeline_mode = #tpu.pipeline_mode<synchronous>, transform_indices = @transform_9, window_bounds = array<i64: 1, 128>}, {pipeline_mode = #tpu.pipeline_mode<synchronous>, transform_indices = @transform_10, window_bounds = array<i64: 1, 128>}, {pipeline_mode = #tpu.pipeline_mode<synchronous>, transform_indices = @transform_11, window_bounds = array<i64: 128, 128>}, {pipeline_mode = #tpu.pipeline_mode<synchronous>, transform_indices = @transform_12, window_bounds = array<i64: 1, 128>}, {pipeline_mode = #tpu.pipeline_mode<synchronous>, transform_indices = @transform_13, window_bounds = array<i64: 256, 128>}]} {
    %c0_i32 = arith.constant 0 : i32
    %0 = arith.cmpi eq, %arg1, %c0_i32 : i32
    %1 = arith.extui %0 : i1 to i32
    %c0_i32_0 = arith.constant 0 : i32
    %2 = arith.cmpi ne, %1, %c0_i32_0 : i32
    scf.if %2 {
      %cst = arith.constant 0.000000e+00 : f32
      %21 = vector.broadcast %cst : f32 to vector<256x128xf32>
      %c0_12 = arith.constant 0 : index
      %c0_13 = arith.constant 0 : index
      %22 = vector.load %arg16[%c0_12, %c0_13] : memref<256x128xf32, #tpu.memory_space<vmem>>, vector<256x128xf32>
      tpu.vector_store %arg16[%c0_12, %c0_13], %21 {strides = array<i32>} : memref<256x128xf32, #tpu.memory_space<vmem>>, vector<256x128xf32>,
    } else {
    }
    %c0 = arith.constant 0 : index
    %c0_1 = arith.constant 0 : index
    %c0_2 = arith.constant 0 : index
    %3 = vector.load %arg2[%c0, %c0_1, %c0_2] : memref<1x256x256xbf16, #tpu.memory_space<vmem>>, vector<1x256x256xbf16>
    %4 = vector.shape_cast %3 : vector<1x256x256xbf16> to vector<256x256xbf16>
    %c0_i32_3 = arith.constant 0 : i32
    %5 = arith.cmpi eq, %arg0, %c0_i32_3 : i32
    %6 = arith.extui %5 : i1 to i32
    %c0_i32_4 = arith.constant 0 : i32
    %7 = arith.cmpi ne, %6, %c0_i32_4 : i32
    scf.if %7 {
      %c0_12 = arith.constant 0 : index
      %c0_13 = arith.constant 0 : index
      %21 = vector.load %arg16[%c0_12, %c0_13] : memref<256x128xf32, #tpu.memory_space<vmem>>, vector<256x128xf32>
      %c0_14 = arith.constant 0 : index
      %c0_15 = arith.constant 0 : index
      %22 = vector.load %arg3[%c0_14, %c0_15] : memref<256x128xbf16, #tpu.memory_space<vmem>>, vector<256x128xbf16>
      %cst = arith.constant dense<0.000000e+00> : vector<256x128xf32>
      %23 = tpu.matmul %4, %22, %cst {dimension_numbers = #tpu.dot_dimension_numbers<[1], [0], [0], [1], [0, 0, 1, 1], [], []>} : vector<256x256xbf16>, vector<256x128xbf16>, vector<256x128xf32> -> vector<256x128xf32>
      %24 = arith.addf %21, %23 : vector<256x128xf32>
      %c0_16 = arith.constant 0 : index
      %c0_17 = arith.constant 0 : index
      %25 = vector.load %arg16[%c0_16, %c0_17] : memref<256x128xf32, #tpu.memory_space<vmem>>, vector<256x128xf32>
      tpu.vector_store %arg16[%c0_16, %c0_17], %24 {strides = array<i32>} : memref<256x128xf32, #tpu.memory_space<vmem>>, vector<256x128xf32>,
    } else {
    }
    %c0_i32_5 = arith.constant 0 : i32
    %8 = arith.cmpi eq, %arg0, %c0_i32_5 : i32
    %c0_i32_6 = arith.constant 0 : i32
    %9 = arith.cmpi eq, %arg1, %c0_i32_6 : i32
    %10 = arith.andi %8, %9 : i1
    %11 = arith.extui %10 : i1 to i32
    %c0_i32_7 = arith.constant 0 : i32
    %12 = arith.cmpi ne, %11, %c0_i32_7 : i32
    scf.if %12 {
      %21 = tpu.iota {dimensions = array<i32: 0>} : vector<256x1xi32>
      %c16_i32 = arith.constant 16 : i32
      %22 = vector.broadcast %c16_i32 : i32 to vector<256x1xi32>
      %23 = arith.cmpi slt, %21, %22 : vector<256x1xi32>
      %24 = arith.extui %23 : vector<256x1xi1> to vector<256x1xi32>
      %25 = arith.sitofp %24 : vector<256x1xi32> to vector<256x1xf32>
      %c0_12 = arith.constant 0 : index
      %c0_13 = arith.constant 0 : index
      %26 = vector.load %arg16[%c0_12, %c0_13] : memref<256x128xf32, #tpu.memory_space<vmem>>, vector<256x128xf32>
      %c0_14 = arith.constant 0 : index
      %c0_15 = arith.constant 0 : index
      %27 = vector.load %arg4[%c0_14, %c0_15] : memref<1x128xf32, #tpu.memory_space<vmem>>, vector<1x128xf32>
      %c0_16 = arith.constant 0 : index
      %c0_17 = arith.constant 0 : index
      %28 = vector.load %arg5[%c0_16, %c0_17] : memref<1x128xf32, #tpu.memory_space<vmem>>, vector<1x128xf32>
      %29 = vector.broadcast %25 : vector<256x1xf32> to vector<256x128xf32>
      %30 = arith.mulf %26, %29 : vector<256x128xf32>
      %cst = arith.constant dense<0.000000e+00> : vector<128xf32>
      %31 = vector.multi_reduction <add>, %30, %cst [0] : vector<256x128xf32> to vector<128xf32>
      %32 = vector.shape_cast %31 : vector<128xf32> to vector<1x128xf32>
      %33 = arith.mulf %30, %26 : vector<256x128xf32>
      %cst_18 = arith.constant dense<0.000000e+00> : vector<128xf32>
      %34 = vector.multi_reduction <add>, %33, %cst_18 [0] : vector<256x128xf32> to vector<128xf32>
      %35 = vector.shape_cast %34 : vector<128xf32> to vector<1x128xf32>
      %cst_19 = arith.constant 6.250000e-02 : f32
      %36 = vector.broadcast %cst_19 : f32 to vector<1x128xf32>
      %37 = arith.mulf %32, %36 : vector<1x128xf32>
      %cst_20 = arith.constant 6.250000e-02 : f32
      %38 = vector.broadcast %cst_20 : f32 to vector<1x128xf32>
      %39 = arith.mulf %35, %38 : vector<1x128xf32>
      %40 = arith.mulf %37, %37 : vector<1x128xf32>
      %41 = arith.subf %39, %40 : vector<1x128xf32>
      %cst_21 = arith.constant 0.000000e+00 : f32
      %42 = vector.broadcast %cst_21 : f32 to vector<1x128xf32>
      %43 = arith.maximumf %41, %42 : vector<1x128xf32>
      %44 = vector.broadcast %37 : vector<1x128xf32> to vector<256x128xf32>
      %45 = arith.subf %26, %44 : vector<256x128xf32>
      %cst_22 = arith.constant 9.99999974E-6 : f32
      %46 = vector.broadcast %cst_22 : f32 to vector<1x128xf32>
      %47 = arith.addf %43, %46 : vector<1x128xf32>
      %48 = math.rsqrt %47 : vector<1x128xf32>
      %49 = vector.broadcast %48 : vector<1x128xf32> to vector<256x128xf32>
      %50 = arith.mulf %45, %49 : vector<256x128xf32>
      %51 = vector.broadcast %27 : vector<1x128xf32> to vector<256x128xf32>
      %52 = arith.mulf %50, %51 : vector<256x128xf32>
      %53 = vector.broadcast %28 : vector<1x128xf32> to vector<256x128xf32>
      %54 = arith.addf %52, %53 : vector<256x128xf32>
      %cst_23 = arith.constant 0.000000e+00 : f32
      %55 = vector.broadcast %cst_23 : f32 to vector<256x128xf32>
      %56 = arith.maximumf %54, %55 : vector<256x128xf32>
      %57 = arith.truncf %56 : vector<256x128xf32> to vector<256x128xbf16>
      %c0_24 = arith.constant 0 : index
      %c0_25 = arith.constant 0 : index
      %58 = vector.load %arg6[%c0_24, %c0_25] : memref<128x128xbf16, #tpu.memory_space<vmem>>, vector<128x128xbf16>
      %cst_26 = arith.constant dense<0.000000e+00> : vector<256x128xf32>
      %59 = tpu.matmul %57, %58, %cst_26 {dimension_numbers = #tpu.dot_dimension_numbers<[1], [0], [0], [1], [0, 0, 1, 1], [], []>} : vector<256x128xbf16>, vector<128x128xbf16>, vector<256x128xf32> -> vector<256x128xf32>
      %60 = arith.truncf %59 : vector<256x128xf32> to vector<256x128xbf16>
      %c0_27 = arith.constant 0 : index
      %c0_28 = arith.constant 0 : index
      %61 = vector.load %arg17[%c0_27, %c0_28] : memref<256x128xbf16, #tpu.memory_space<vmem>>, vector<256x128xbf16>
      tpu.vector_store %arg17[%c0_27, %c0_28], %60 {strides = array<i32>} : memref<256x128xbf16, #tpu.memory_space<vmem>>, vector<256x128xbf16>,
    } else {
    }
    %c1_i32 = arith.constant 1 : i32
    %13 = arith.cmpi eq, %arg0, %c1_i32 : i32
    %14 = arith.extui %13 : i1 to i32
    %c0_i32_8 = arith.constant 0 : i32
    %15 = arith.cmpi ne, %14, %c0_i32_8 : i32
    scf.if %15 {
      %c256_i32 = arith.constant 256 : i32
      %21 = arith.muli %arg1, %c256_i32 : i32
      %22 = tpu.assume_multiple %21, 256 : i32
      %c0_12 = arith.constant 0 : index
      %c0_13 = arith.constant 0 : index
      %23 = vector.load %arg16[%c0_12, %c0_13] : memref<256x128xf32, #tpu.memory_space<vmem>>, vector<256x128xf32>
      %24 = arith.index_cast %22 : i32 to index
      %c0_14 = arith.constant 0 : index
      %25 = vector.load %arg17[%24, %c0_14] : memref<256x128xbf16, #tpu.memory_space<vmem>>, vector<256x128xbf16>
      %cst = arith.constant dense<0.000000e+00> : vector<256x128xf32>
      %26 = tpu.matmul %4, %25, %cst {dimension_numbers = #tpu.dot_dimension_numbers<[1], [0], [0], [1], [0, 0, 1, 1], [], []>} : vector<256x256xbf16>, vector<256x128xbf16>, vector<256x128xf32> -> vector<256x128xf32>
      %27 = arith.addf %23, %26 : vector<256x128xf32>
      %c0_15 = arith.constant 0 : index
      %c0_16 = arith.constant 0 : index
      %28 = vector.load %arg16[%c0_15, %c0_16] : memref<256x128xf32, #tpu.memory_space<vmem>>, vector<256x128xf32>
      tpu.vector_store %arg16[%c0_15, %c0_16], %27 {strides = array<i32>} : memref<256x128xf32, #tpu.memory_space<vmem>>, vector<256x128xf32>,
    } else {
    }
    %c1_i32_9 = arith.constant 1 : i32
    %16 = arith.cmpi eq, %arg0, %c1_i32_9 : i32
    %c0_i32_10 = arith.constant 0 : i32
    %17 = arith.cmpi eq, %arg1, %c0_i32_10 : i32
    %18 = arith.andi %16, %17 : i1
    %19 = arith.extui %18 : i1 to i32
    %c0_i32_11 = arith.constant 0 : i32
    %20 = arith.cmpi ne, %19, %c0_i32_11 : i32
    scf.if %20 {
      %21 = tpu.iota {dimensions = array<i32: 0>} : vector<256x1xi32>
      %c16_i32 = arith.constant 16 : i32
      %22 = vector.broadcast %c16_i32 : i32 to vector<256x1xi32>
      %23 = arith.cmpi slt, %21, %22 : vector<256x1xi32>
      %24 = arith.extui %23 : vector<256x1xi1> to vector<256x1xi32>
      %25 = arith.sitofp %24 : vector<256x1xi32> to vector<256x1xf32>
      %c0_12 = arith.constant 0 : index
      %c0_13 = arith.constant 0 : index
      %26 = vector.load %arg16[%c0_12, %c0_13] : memref<256x128xf32, #tpu.memory_space<vmem>>, vector<256x128xf32>
      %c0_14 = arith.constant 0 : index
      %c0_15 = arith.constant 0 : index
      %27 = vector.load %arg7[%c0_14, %c0_15] : memref<1x128xf32, #tpu.memory_space<vmem>>, vector<1x128xf32>
      %c0_16 = arith.constant 0 : index
      %c0_17 = arith.constant 0 : index
      %28 = vector.load %arg8[%c0_16, %c0_17] : memref<1x128xf32, #tpu.memory_space<vmem>>, vector<1x128xf32>
      %29 = vector.broadcast %25 : vector<256x1xf32> to vector<256x128xf32>
      %30 = arith.mulf %26, %29 : vector<256x128xf32>
      %cst = arith.constant dense<0.000000e+00> : vector<128xf32>
      %31 = vector.multi_reduction <add>, %30, %cst [0] : vector<256x128xf32> to vector<128xf32>
      %32 = vector.shape_cast %31 : vector<128xf32> to vector<1x128xf32>
      %33 = arith.mulf %30, %26 : vector<256x128xf32>
      %cst_18 = arith.constant dense<0.000000e+00> : vector<128xf32>
      %34 = vector.multi_reduction <add>, %33, %cst_18 [0] : vector<256x128xf32> to vector<128xf32>
      %35 = vector.shape_cast %34 : vector<128xf32> to vector<1x128xf32>
      %cst_19 = arith.constant 6.250000e-02 : f32
      %36 = vector.broadcast %cst_19 : f32 to vector<1x128xf32>
      %37 = arith.mulf %32, %36 : vector<1x128xf32>
      %cst_20 = arith.constant 6.250000e-02 : f32
      %38 = vector.broadcast %cst_20 : f32 to vector<1x128xf32>
      %39 = arith.mulf %35, %38 : vector<1x128xf32>
      %40 = arith.mulf %37, %37 : vector<1x128xf32>
      %41 = arith.subf %39, %40 : vector<1x128xf32>
      %cst_21 = arith.constant 0.000000e+00 : f32
      %42 = vector.broadcast %cst_21 : f32 to vector<1x128xf32>
      %43 = arith.maximumf %41, %42 : vector<1x128xf32>
      %44 = vector.broadcast %37 : vector<1x128xf32> to vector<256x128xf32>
      %45 = arith.subf %26, %44 : vector<256x128xf32>
      %cst_22 = arith.constant 9.99999974E-6 : f32
      %46 = vector.broadcast %cst_22 : f32 to vector<1x128xf32>
      %47 = arith.addf %43, %46 : vector<1x128xf32>
      %48 = math.rsqrt %47 : vector<1x128xf32>
      %49 = vector.broadcast %48 : vector<1x128xf32> to vector<256x128xf32>
      %50 = arith.mulf %45, %49 : vector<256x128xf32>
      %51 = vector.broadcast %27 : vector<1x128xf32> to vector<256x128xf32>
      %52 = arith.mulf %50, %51 : vector<256x128xf32>
      %53 = vector.broadcast %28 : vector<1x128xf32> to vector<256x128xf32>
      %54 = arith.addf %52, %53 : vector<256x128xf32>
      %cst_23 = arith.constant 0.000000e+00 : f32
      %55 = vector.broadcast %cst_23 : f32 to vector<256x128xf32>
      %56 = arith.maximumf %54, %55 : vector<256x128xf32>
      %c0_24 = arith.constant 0 : index
      %c0_25 = arith.constant 0 : index
      %57 = vector.load %arg9[%c0_24, %c0_25] : memref<128x128xf32, #tpu.memory_space<vmem>>, vector<128x128xf32>
      %cst_26 = arith.constant dense<0.000000e+00> : vector<256x128xf32>
      %58 = tpu.matmul %56, %57, %cst_26 {dimension_numbers = #tpu.dot_dimension_numbers<[1], [0], [0], [1], [0, 0, 1, 1], [], []>} : vector<256x128xf32>, vector<128x128xf32>, vector<256x128xf32> -> vector<256x128xf32>
      %c0_27 = arith.constant 0 : index
      %c0_28 = arith.constant 0 : index
      %59 = vector.load %arg10[%c0_27, %c0_28] : memref<1x128xf32, #tpu.memory_space<vmem>>, vector<1x128xf32>
      %60 = vector.broadcast %59 : vector<1x128xf32> to vector<256x128xf32>
      %61 = arith.addf %58, %60 : vector<256x128xf32>
      %cst_29 = arith.constant 0.000000e+00 : f32
      %62 = vector.broadcast %cst_29 : f32 to vector<256x128xf32>
      %63 = arith.maximumf %61, %62 : vector<256x128xf32>
      %c0_30 = arith.constant 0 : index
      %c0_31 = arith.constant 0 : index
      %64 = vector.load %arg11[%c0_30, %c0_31] : memref<1x128xf32, #tpu.memory_space<vmem>>, vector<1x128xf32>
      %c0_32 = arith.constant 0 : index
      %c0_33 = arith.constant 0 : index
      %65 = vector.load %arg12[%c0_32, %c0_33] : memref<1x128xf32, #tpu.memory_space<vmem>>, vector<1x128xf32>
      %66 = vector.broadcast %25 : vector<256x1xf32> to vector<256x128xf32>
      %67 = arith.mulf %63, %66 : vector<256x128xf32>
      %cst_34 = arith.constant dense<0.000000e+00> : vector<128xf32>
      %68 = vector.multi_reduction <add>, %67, %cst_34 [0] : vector<256x128xf32> to vector<128xf32>
      %69 = vector.shape_cast %68 : vector<128xf32> to vector<1x128xf32>
      %70 = arith.mulf %67, %63 : vector<256x128xf32>
      %cst_35 = arith.constant dense<0.000000e+00> : vector<128xf32>
      %71 = vector.multi_reduction <add>, %70, %cst_35 [0] : vector<256x128xf32> to vector<128xf32>
      %72 = vector.shape_cast %71 : vector<128xf32> to vector<1x128xf32>
      %cst_36 = arith.constant 6.250000e-02 : f32
      %73 = vector.broadcast %cst_36 : f32 to vector<1x128xf32>
      %74 = arith.mulf %69, %73 : vector<1x128xf32>
      %cst_37 = arith.constant 6.250000e-02 : f32
      %75 = vector.broadcast %cst_37 : f32 to vector<1x128xf32>
      %76 = arith.mulf %72, %75 : vector<1x128xf32>
      %77 = arith.mulf %74, %74 : vector<1x128xf32>
      %78 = arith.subf %76, %77 : vector<1x128xf32>
      %cst_38 = arith.constant 0.000000e+00 : f32
      %79 = vector.broadcast %cst_38 : f32 to vector<1x128xf32>
      %80 = arith.maximumf %78, %79 : vector<1x128xf32>
      %81 = vector.broadcast %74 : vector<1x128xf32> to vector<256x128xf32>
      %82 = arith.subf %63, %81 : vector<256x128xf32>
      %cst_39 = arith.constant 9.99999974E-6 : f32
      %83 = vector.broadcast %cst_39 : f32 to vector<1x128xf32>
      %84 = arith.addf %80, %83 : vector<1x128xf32>
      %85 = math.rsqrt %84 : vector<1x128xf32>
      %86 = vector.broadcast %85 : vector<1x128xf32> to vector<256x128xf32>
      %87 = arith.mulf %82, %86 : vector<256x128xf32>
      %88 = vector.broadcast %64 : vector<1x128xf32> to vector<256x128xf32>
      %89 = arith.mulf %87, %88 : vector<256x128xf32>
      %90 = vector.broadcast %65 : vector<1x128xf32> to vector<256x128xf32>
      %91 = arith.addf %89, %90 : vector<256x128xf32>
      %c0_40 = arith.constant 0 : index
      %c0_41 = arith.constant 0 : index
      %92 = vector.load %arg13[%c0_40, %c0_41] : memref<128x128xf32, #tpu.memory_space<vmem>>, vector<128x128xf32>
      %cst_42 = arith.constant dense<0.000000e+00> : vector<256x128xf32>
      %93 = tpu.matmul %91, %92, %cst_42 {dimension_numbers = #tpu.dot_dimension_numbers<[1], [0], [0], [1], [0, 0, 1, 1], [], []>} : vector<256x128xf32>, vector<128x128xf32>, vector<256x128xf32> -> vector<256x128xf32>
      %c0_43 = arith.constant 0 : index
      %c0_44 = arith.constant 0 : index
      %94 = vector.load %arg14[%c0_43, %c0_44] : memref<1x128xf32, #tpu.memory_space<vmem>>, vector<1x128xf32>
      %95 = vector.broadcast %94 : vector<1x128xf32> to vector<256x128xf32>
      %96 = arith.addf %93, %95 : vector<256x128xf32>
      %97 = tpu.iota {dimensions = array<i32: 1>} : vector<256x128xi32>
      %c4_i32 = arith.constant 4 : i32
      %98 = vector.broadcast %c4_i32 : i32 to vector<256x128xi32>
      %99 = arith.cmpi slt, %97, %98 : vector<256x128xi32>
      %cst_45 = arith.constant -1.000000e+30 : f32
      %100 = vector.broadcast %cst_45 : f32 to vector<256x128xf32>
      %101 = arith.select %99, %96, %100 : vector<256x128xi1>, vector<256x128xf32>
      %cst_46 = arith.constant dense<0xFF800000> : vector<256xf32>
      %102 = vector.multi_reduction <maximumf>, %101, %cst_46 [1] : vector<256x128xf32> to vector<256xf32>
      %103 = vector.shape_cast %102 : vector<256xf32> to vector<256x1xf32>
      %104 = vector.broadcast %103 : vector<256x1xf32> to vector<256x128xf32>
      %105 = arith.subf %101, %104 : vector<256x128xf32>
      %106 = math.exp %105 : vector<256x128xf32>
      %cst_47 = arith.constant dense<0.000000e+00> : vector<256xf32>
      %107 = vector.multi_reduction <add>, %106, %cst_47 [1] : vector<256x128xf32> to vector<256xf32>
      %108 = vector.shape_cast %107 : vector<256xf32> to vector<256x1xf32>
      %109 = math.log %108 : vector<256x1xf32>
      %110 = arith.addf %109, %103 : vector<256x1xf32>
      %111 = vector.broadcast %110 : vector<256x1xf32> to vector<256x128xf32>
      %112 = arith.subf %101, %111 : vector<256x128xf32>
      %c0_48 = arith.constant 0 : index
      %c0_49 = arith.constant 0 : index
      %113 = vector.load %arg15[%c0_48, %c0_49] : memref<256x128xf32, #tpu.memory_space<vmem>>, vector<256x128xf32>
      tpu.vector_store %arg15[%c0_48, %c0_49], %112 {strides = array<i32>} : memref<256x128xf32, #tpu.memory_space<vmem>>, vector<256x128xf32>,
    } else {
    }
    return
  }
  func.func @transform_0(%arg0: i32, %arg1: i32) -> (i32, i32, i32) {
    %c0_i32 = arith.constant 0 : i32
    %c0_i32_0 = arith.constant 0 : i32
    %c0_i32_1 = arith.constant 0 : i32
    return %arg1, %c0_i32, %c0_i32_0 : i32, i32, i32
  }
  func.func @transform_1(%arg0: i32, %arg1: i32) -> (i32, i32) {
    %c1_i32 = arith.constant 1 : i32
    %0 = arith.subi %c1_i32, %arg0 : i32
    %1 = arith.muli %arg1, %0 : i32
    %c0_i32 = arith.constant 0 : i32
    %c0_i32_0 = arith.constant 0 : i32
    return %1, %c0_i32 : i32, i32
  }
  func.func @transform_2(%arg0: i32, %arg1: i32) -> (i32, i32) {
    %c0_i32 = arith.constant 0 : i32
    %c0_i32_0 = arith.constant 0 : i32
    %c0_i32_1 = arith.constant 0 : i32
    return %c0_i32, %c0_i32_0 : i32, i32
  }
  func.func @transform_3(%arg0: i32, %arg1: i32) -> (i32, i32) {
    %c0_i32 = arith.constant 0 : i32
    %c0_i32_0 = arith.constant 0 : i32
    %c0_i32_1 = arith.constant 0 : i32
    return %c0_i32, %c0_i32_0 : i32, i32
  }
  func.func @transform_4(%arg0: i32, %arg1: i32) -> (i32, i32) {
    %c0_i32 = arith.constant 0 : i32
    %c0_i32_0 = arith.constant 0 : i32
    %c0_i32_1 = arith.constant 0 : i32
    return %c0_i32, %c0_i32_0 : i32, i32
  }
  func.func @transform_5(%arg0: i32, %arg1: i32) -> (i32, i32) {
    %c0_i32 = arith.constant 0 : i32
    %c0_i32_0 = arith.constant 0 : i32
    %c0_i32_1 = arith.constant 0 : i32
    return %c0_i32, %c0_i32_0 : i32, i32
  }
  func.func @transform_6(%arg0: i32, %arg1: i32) -> (i32, i32) {
    %c0_i32 = arith.constant 0 : i32
    %c0_i32_0 = arith.constant 0 : i32
    %c0_i32_1 = arith.constant 0 : i32
    return %c0_i32, %c0_i32_0 : i32, i32
  }
  func.func @transform_7(%arg0: i32, %arg1: i32) -> (i32, i32) {
    %c0_i32 = arith.constant 0 : i32
    %c0_i32_0 = arith.constant 0 : i32
    %c0_i32_1 = arith.constant 0 : i32
    return %c0_i32, %c0_i32_0 : i32, i32
  }
  func.func @transform_8(%arg0: i32, %arg1: i32) -> (i32, i32) {
    %c0_i32 = arith.constant 0 : i32
    %c0_i32_0 = arith.constant 0 : i32
    %c0_i32_1 = arith.constant 0 : i32
    return %c0_i32, %c0_i32_0 : i32, i32
  }
  func.func @transform_9(%arg0: i32, %arg1: i32) -> (i32, i32) {
    %c0_i32 = arith.constant 0 : i32
    %c0_i32_0 = arith.constant 0 : i32
    %c0_i32_1 = arith.constant 0 : i32
    return %c0_i32, %c0_i32_0 : i32, i32
  }
  func.func @transform_10(%arg0: i32, %arg1: i32) -> (i32, i32) {
    %c0_i32 = arith.constant 0 : i32
    %c0_i32_0 = arith.constant 0 : i32
    %c0_i32_1 = arith.constant 0 : i32
    return %c0_i32, %c0_i32_0 : i32, i32
  }
  func.func @transform_11(%arg0: i32, %arg1: i32) -> (i32, i32) {
    %c0_i32 = arith.constant 0 : i32
    %c0_i32_0 = arith.constant 0 : i32
    %c0_i32_1 = arith.constant 0 : i32
    return %c0_i32, %c0_i32_0 : i32, i32
  }
  func.func @transform_12(%arg0: i32, %arg1: i32) -> (i32, i32) {
    %c0_i32 = arith.constant 0 : i32
    %c0_i32_0 = arith.constant 0 : i32
    %c0_i32_1 = arith.constant 0 : i32
    return %c0_i32, %c0_i32_0 : i32, i32
  }
  func.func @transform_13(%arg0: i32, %arg1: i32) -> (i32, i32) {
    %c0_i32 = arith.constant 0 : i32
    %c0_i32_0 = arith.constant 0 : i32
    %c0_i32_1 = arith.constant 0 : i32
    return %c0_i32, %c0_i32_0 : i32, i32
  }
}

</mosaic_0001>

<llo_original>
// kernel: tpu_custom_call.1
$region0: #{tpu_custom_call.1}
  #allocation0 [shape = 'u32[]', space=smem, size = 0x4, offset = 0x4, fixed_abs, tag = 'smem constant byte address 0x4 - core index']
  #allocation1 [shape = 'u32[72,128]{1,0:T(1,128)}', space=vmem, size = 0x9000, scoped, tag = 'internal scratch']
  #allocation2 [shape = 'f32[256,128]{1,0:T(8,128)}', space=vmem, size = 0x20000, scoped, tag = 'scratch operand']
  #allocation3 [shape = 'bf16[256,128]{1,0:T(8,128)(2,1)}', space=vmem, size = 0x10000, scoped, tag = 'scratch operand']
  %s0 = inlined_call_operand.hbm [shape: bf16[1,256,256], index: 0, kind: input, shape index: {}]
  %s1 = inlined_call_operand.hbm [shape: bf16[256,128], index: 1, kind: input, shape index: {}]
  %s2 = inlined_call_operand.vmem [shape: f32[1,128], index: 2, kind: input, shape index: {}]
  %s3 = inlined_call_operand.vmem [shape: f32[1,128], index: 3, kind: input, shape index: {}]
  %s4 = inlined_call_operand.hbm [shape: bf16[128,128], index: 4, kind: input, shape index: {}]
  %s5 = inlined_call_operand.vmem [shape: f32[1,128], index: 5, kind: input, shape index: {}]
  %s6 = inlined_call_operand.vmem [shape: f32[1,128], index: 6, kind: input, shape index: {}]
  %s7 = inlined_call_operand.hbm [shape: f32[128,128], index: 7, kind: input, shape index: {}]
  %s8 = inlined_call_operand.vmem [shape: f32[1,128], index: 8, kind: input, shape index: {}]
  %s9 = inlined_call_operand.vmem [shape: f32[1,128], index: 9, kind: input, shape index: {}]
  %s10 = inlined_call_operand.vmem [shape: f32[1,128], index: 10, kind: input, shape index: {}]
  %s11 = inlined_call_operand.hbm [shape: f32[128,128], index: 11, kind: input, shape index: {}]
  %s12 = inlined_call_operand.vmem [shape: f32[1,128], index: 12, kind: input, shape index: {}]
  %s13 = inlined_call_operand.hbm [shape: f32[256,128], index: 13, kind: output, shape index: {}]
  %s14 = sld [smem:[#allocation0]]
  $region125: #{tpu_custom_call.1} parent=0
    _
  %s16 = ssub.s32 1, %s14
  %s17 = scalar_select 0, %s16, %s14
  $region1: #{tpu_custom_call.1} parent=0
    #allocation4 [shape = 'u8[131072]{0}', space=vmem, size = 0x20000, scoped, tag = 'input window, operand 0, single buffered']
    #allocation5 [shape = 's32[2]{0}', space=sflag, size = 0x8, scoped, tag = 'scoped memory for tpu_custom_call.1']
    #allocation6 [shape = 's32[2]{0}', space=sflag, size = 0x8, scoped, tag = 'scoped memory for tpu_custom_call.1']
    #allocation7 [shape = 'u8[131072]{0}', space=vmem, size = 0x20000, scoped, tag = 'input window, operand 1']
    #allocation8 [shape = 's32[2]{0}', space=sflag, size = 0x8, scoped, tag = 'scoped memory for tpu_custom_call.1']
    #allocation9 [shape = 'u8[32768]{0}', space=vmem, size = 0x8000, scoped, tag = 'input window, operand 4, single buffered']
    #allocation10 [shape = 'u8[65536]{0}', space=vmem, size = 0x10000, scoped, tag = 'input window, operand 7, single buffered']
    #allocation11 [shape = 's32[1]{0}', space=sflag, size = 0x4, scoped, tag = 'scoped memory for tpu_custom_call.1']
    #allocation12 [shape = 'u8[65536]{0}', space=vmem, size = 0x10000, scoped, tag = 'input window, operand 11, single buffered']
    #allocation13 [shape = 'u8[131072]{0}', space=vmem, size = 0x20000, scoped, tag = 'output window, operand 0, single buffered']
    %18 = vsyncpa [#allocation5], 0
    %19 = vsyncpa [#allocation8], 0
    %s20 = scalar_lea.sflag [#allocation8], 1
    %21 = vsyncpa %s20, 0
    %22 = vsyncpa [#allocation11], 0
    %23 = vsyncpa [#allocation6], 0
    loop: start=0, step=1, limit=4
    $region2: #{tpu_custom_call.1} parent=1 // loop_pre_header
      _
    $region3: #{tpu_custom_call.1} parent=1 // loop_header
      %s25 = sphi 0, %s29
      %p26 = scmp.ge.s32.totalorder %s25, 4
      %s32 = sphi 0, %s44
      %s33 = sphi 0, %s40
      %s34 = sphi 0, %s32
      %s35 = sphi 0, %s33
      %s36 = sphi 0, %s34
      %s37 = sphi 0, %s35
      %s47 = sphi 0, %s49
      %s50 = sphi 0, %s47
      %s51 = sphi 0, %s50
      %s67 = sphi 0, %s51
      %s77 = sphi 0, %s79
      %s80 = sphi 0, %s77
      %s81 = sphi 0, %s80
      %s97 = sphi 0, %s81
      %s101 = sphi 0, %s101
      %s103 = sphi 0, %s101
      %s104 = sphi 0, %s103
      %s118 = sphi 0, %s104
      %s122 = sphi 0, %s122
      %s124 = sphi 0, %s122
      %s125 = sphi 0, %s124
      %s139 = sphi 0, %s125
      %s143 = sphi 0, %s143
      %s145 = sphi 0, %s143
      %s146 = sphi 0, %s145
      %s160 = sphi 0, %s146
      %s164 = sphi 0, %s164
      %s166 = sphi 0, %s164
      %s167 = sphi 0, %s166
      %s181 = sphi 0, %s167
      %s185 = sphi 0, %s185
      %s187 = sphi 0, %s185
      %s188 = sphi 0, %s187
      %s202 = sphi 0, %s188
      %s206 = sphi 0, %s206
      %s208 = sphi 0, %s206
      %s209 = sphi 0, %s208
      %s223 = sphi 0, %s209
      %s227 = sphi 0, %s227
      %s229 = sphi 0, %s227
      %s230 = sphi 0, %s229
      %s244 = sphi 0, %s230
      %s248 = sphi 0, %s248
      %s250 = sphi 0, %s248
      %s251 = sphi 0, %s250
      %s265 = sphi 0, %s251
      %s269 = sphi 0, %s269
      %s271 = sphi 0, %s269
      %s272 = sphi 0, %s271
      %s286 = sphi 0, %s272
      %s290 = sphi 0, %s290
      %s292 = sphi 0, %s290
      %s293 = sphi 0, %s292
      %s307 = sphi 0, %s293
      %s311 = sphi 0, %s311
      %s313 = sphi 0, %s311
      %s314 = sphi 0, %s313
      %s328 = sphi 0, %s314
      %s332 = sphi 0, %s332
      %s334 = sphi 0, %s332
      %s335 = sphi 0, %s334
      %s349 = sphi 0, %s335
    $region4: #{tpu_custom_call.1} parent=1 // loop_header_branch
      %28 = sbr.rel (%p26) target = $region8
    $region5: #{tpu_custom_call.1} parent=1 // loop_body
      %s30 = ssub.s32 %s25, 1
      %s31 = ssub.s32 %s25, 2
      %s38 = sadd.s32 1, %s33
      %p39 = scmp.ge.s32.totalorder %s38, 1
      %s40 = scalar_select %p39, 0, %s38
      %s41 = sadd.s32 1, %s32
      %s42 = scalar_select %p39, %s41, %s32
      %p43 = scmp.ge.s32.totalorder %s42, 2
      %s44 = scalar_select %p43, 0, %s42
      %s45 = ssub.s32 %s33, %s40
      %p46 = scmp.eq.s32.totalorder %s45, 0
      %s48 = sadd.s32 %s47, 1
      %s49 = scalar_select %p46, %s47, %s48
      %p52 = pneg %p46
      %p53 = scmp.eq.s32.totalorder %s25, 1
      %p54 = por %p52, %p53
      %p55 = scmp.ne.s32.totalorder %s47, %s50
      %p56 = scmp.eq.s32.totalorder %s25, 0
      %p57 = por %p55, %p56
      %p58 = scmp.ne.s32.totalorder %s47, %s50
      %p59 = scmp.eq.s32.totalorder %s30, 1
      %p60 = por %p58, %p59
      %p61 = scmp.ne.s32.totalorder %s50, %s51
      %p62 = scmp.eq.s32.totalorder %s30, 0
      %p63 = por %p61, %p62
      %p64 = scmp.ne.s32.totalorder %s50, %s51
      %p65 = scmp.eq.s32.totalorder %s31, 1
      %p66 = por %p64, %p65
      %p68 = scmp.ne.s32.totalorder %s51, %s67
      %p69 = scmp.eq.s32.totalorder %s31, 0
      %p70 = por %p68, %p69
      %s71 = ssub.s32 1, %s32
      %s72 = smul.u32 %s33, %s71
      %s73 = ssub.s32 1, %s44
      %s74 = smul.u32 %s40, %s73
      %s75 = ssub.s32 %s72, %s74
      %p76 = scmp.eq.s32.totalorder %s75, 0
      %s78 = sadd.s32 %s77, 1
      %s79 = scalar_select %p76, %s77, %s78
      %p82 = pneg %p76
      %p83 = scmp.eq.s32.totalorder %s25, 1
      %p84 = por %p82, %p83
      %p85 = scmp.ne.s32.totalorder %s77, %s80
      %p86 = scmp.eq.s32.totalorder %s25, 0
      %p87 = por %p85, %p86
      %p88 = scmp.ne.s32.totalorder %s77, %s80
      %p89 = scmp.eq.s32.totalorder %s30, 1
      %p90 = por %p88, %p89
      %p91 = scmp.ne.s32.totalorder %s80, %s81
      %p92 = scmp.eq.s32.totalorder %s30, 0
      %p93 = por %p91, %p92
      %p94 = scmp.ne.s32.totalorder %s80, %s81
      %p95 = scmp.eq.s32.totalorder %s31, 1
      %p96 = por %p94, %p95
      %p98 = scmp.ne.s32.totalorder %s81, %s97
      %p99 = scmp.eq.s32.totalorder %s31, 0
      %p100 = por %p98, %p99
      %s102 = sadd.s32 %s101, 1
      %p105 = scmp.eq.s32.totalorder %s25, 1
      %p106 = scmp.ne.s32.totalorder %s101, %s103
      %p107 = scmp.eq.s32.totalorder %s25, 0
      %p108 = por %p106, %p107
      %p109 = scmp.ne.s32.totalorder %s101, %s103
      %p110 = scmp.eq.s32.totalorder %s30, 1
      %p111 = por %p109, %p110
      %p112 = scmp.ne.s32.totalorder %s103, %s104
      %p113 = scmp.eq.s32.totalorder %s30, 0
      %p114 = por %p112, %p113
      %p115 = scmp.ne.s32.totalorder %s103, %s104
      %p116 = scmp.eq.s32.totalorder %s31, 1
      %p117 = por %p115, %p116
      %p119 = scmp.ne.s32.totalorder %s104, %s118
      %p120 = scmp.eq.s32.totalorder %s31, 0
      %p121 = por %p119, %p120
      %s123 = sadd.s32 %s122, 1
      %p126 = scmp.eq.s32.totalorder %s25, 1
      %p127 = scmp.ne.s32.totalorder %s122, %s124
      %p128 = scmp.eq.s32.totalorder %s25, 0
      %p129 = por %p127, %p128
      %p130 = scmp.ne.s32.totalorder %s122, %s124
      %p131 = scmp.eq.s32.totalorder %s30, 1
      %p132 = por %p130, %p131
      %p133 = scmp.ne.s32.totalorder %s124, %s125
      %p134 = scmp.eq.s32.totalorder %s30, 0
      %p135 = por %p133, %p134
      %p136 = scmp.ne.s32.totalorder %s124, %s125
      %p137 = scmp.eq.s32.totalorder %s31, 1
      %p138 = por %p136, %p137
      %p140 = scmp.ne.s32.totalorder %s125, %s139
      %p141 = scmp.eq.s32.totalorder %s31, 0
      %p142 = por %p140, %p141
      %s144 = sadd.s32 %s143, 1
      %p147 = scmp.eq.s32.totalorder %s25, 1
      %p148 = scmp.ne.s32.totalorder %s143, %s145
      %p149 = scmp.eq.s32.totalorder %s25, 0
      %p150 = por %p148, %p149
      %p151 = scmp.ne.s32.totalorder %s143, %s145
      %p152 = scmp.eq.s32.totalorder %s30, 1
      %p153 = por %p151, %p152
      %p154 = scmp.ne.s32.totalorder %s145, %s146
      %p155 = scmp.eq.s32.totalorder %s30, 0
      %p156 = por %p154, %p155
      %p157 = scmp.ne.s32.totalorder %s145, %s146
      %p158 = scmp.eq.s32.totalorder %s31, 1
      %p159 = por %p157, %p158
      %p161 = scmp.ne.s32.totalorder %s146, %s160
      %p162 = scmp.eq.s32.totalorder %s31, 0
      %p163 = por %p161, %p162
      %s165 = sadd.s32 %s164, 1
      %p168 = scmp.eq.s32.totalorder %s25, 1
      %p169 = scmp.ne.s32.totalorder %s164, %s166
      %p170 = scmp.eq.s32.totalorder %s25, 0
      %p171 = por %p169, %p170
      %p172 = scmp.ne.s32.totalorder %s164, %s166
      %p173 = scmp.eq.s32.totalorder %s30, 1
      %p174 = por %p172, %p173
      %p175 = scmp.ne.s32.totalorder %s166, %s167
      %p176 = scmp.eq.s32.totalorder %s30, 0
      %p177 = por %p175, %p176
      %p178 = scmp.ne.s32.totalorder %s166, %s167
      %p179 = scmp.eq.s32.totalorder %s31, 1
      %p180 = por %p178, %p179
      %p182 = scmp.ne.s32.totalorder %s167, %s181
      %p183 = scmp.eq.s32.totalorder %s31, 0
      %p184 = por %p182, %p183
      %s186 = sadd.s32 %s185, 1
      %p189 = scmp.eq.s32.totalorder %s25, 1
      %p190 = scmp.ne.s32.totalorder %s185, %s187
      %p191 = scmp.eq.s32.totalorder %s25, 0
      %p192 = por %p190, %p191
      %p193 = scmp.ne.s32.totalorder %s185, %s187
      %p194 = scmp.eq.s32.totalorder %s30, 1
      %p195 = por %p193, %p194
      %p196 = scmp.ne.s32.totalorder %s187, %s188
      %p197 = scmp.eq.s32.totalorder %s30, 0
      %p198 = por %p196, %p197
      %p199 = scmp.ne.s32.totalorder %s187, %s188
      %p200 = scmp.eq.s32.totalorder %s31, 1
      %p201 = por %p199, %p200
      %p203 = scmp.ne.s32.totalorder %s188, %s202
      %p204 = scmp.eq.s32.totalorder %s31, 0
      %p205 = por %p203, %p204
      %s207 = sadd.s32 %s206, 1
      %p210 = scmp.eq.s32.totalorder %s25, 1
      %p211 = scmp.ne.s32.totalorder %s206, %s208
      %p212 = scmp.eq.s32.totalorder %s25, 0
      %p213 = por %p211, %p212
      %p214 = scmp.ne.s32.totalorder %s206, %s208
      %p215 = scmp.eq.s32.totalorder %s30, 1
      %p216 = por %p214, %p215
      %p217 = scmp.ne.s32.totalorder %s208, %s209
      %p218 = scmp.eq.s32.totalorder %s30, 0
      %p219 = por %p217, %p218
      %p220 = scmp.ne.s32.totalorder %s208, %s209
      %p221 = scmp.eq.s32.totalorder %s31, 1
      %p222 = por %p220, %p221
      %p224 = scmp.ne.s32.totalorder %s209, %s223
      %p225 = scmp.eq.s32.totalorder %s31, 0
      %p226 = por %p224, %p225
      %s228 = sadd.s32 %s227, 1
      %p231 = scmp.eq.s32.totalorder %s25, 1
      %p232 = scmp.ne.s32.totalorder %s227, %s229
      %p233 = scmp.eq.s32.totalorder %s25, 0
      %p234 = por %p232, %p233
      %p235 = scmp.ne.s32.totalorder %s227, %s229
      %p236 = scmp.eq.s32.totalorder %s30, 1
      %p237 = por %p235, %p236
      %p238 = scmp.ne.s32.totalorder %s229, %s230
      %p239 = scmp.eq.s32.totalorder %s30, 0
      %p240 = por %p238, %p239
      %p241 = scmp.ne.s32.totalorder %s229, %s230
      %p242 = scmp.eq.s32.totalorder %s31, 1
      %p243 = por %p241, %p242
      %p245 = scmp.ne.s32.totalorder %s230, %s244
      %p246 = scmp.eq.s32.totalorder %s31, 0
      %p247 = por %p245, %p246
      %s249 = sadd.s32 %s248, 1
      %p252 = scmp.eq.s32.totalorder %s25, 1
      %p253 = scmp.ne.s32.totalorder %s248, %s250
      %p254 = scmp.eq.s32.totalorder %s25, 0
      %p255 = por %p253, %p254
      %p256 = scmp.ne.s32.totalorder %s248, %s250
      %p257 = scmp.eq.s32.totalorder %s30, 1
      %p258 = por %p256, %p257
      %p259 = scmp.ne.s32.totalorder %s250, %s251
      %p260 = scmp.eq.s32.totalorder %s30, 0
      %p261 = por %p259, %p260
      %p262 = scmp.ne.s32.totalorder %s250, %s251
      %p263 = scmp.eq.s32.totalorder %s31, 1
      %p264 = por %p262, %p263
      %p266 = scmp.ne.s32.totalorder %s251, %s265
      %p267 = scmp.eq.s32.totalorder %s31, 0
      %p268 = por %p266, %p267
      %s270 = sadd.s32 %s269, 1
      %p273 = scmp.eq.s32.totalorder %s25, 1
      %p274 = scmp.ne.s32.totalorder %s269, %s271
      %p275 = scmp.eq.s32.totalorder %s25, 0
      %p276 = por %p274, %p275
      %p277 = scmp.ne.s32.totalorder %s269, %s271
      %p278 = scmp.eq.s32.totalorder %s30, 1
      %p279 = por %p277, %p278
      %p280 = scmp.ne.s32.totalorder %s271, %s272
      %p281 = scmp.eq.s32.totalorder %s30, 0
      %p282 = por %p280, %p281
      %p283 = scmp.ne.s32.totalorder %s271, %s272
      %p284 = scmp.eq.s32.totalorder %s31, 1
      %p285 = por %p283, %p284
      %p287 = scmp.ne.s32.totalorder %s272, %s286
      %p288 = scmp.eq.s32.totalorder %s31, 0
      %p289 = por %p287, %p288
      %s291 = sadd.s32 %s290, 1
      %p294 = scmp.eq.s32.totalorder %s25, 1
      %p295 = scmp.ne.s32.totalorder %s290, %s292
      %p296 = scmp.eq.s32.totalorder %s25, 0
      %p297 = por %p295, %p296
      %p298 = scmp.ne.s32.totalorder %s290, %s292
      %p299 = scmp.eq.s32.totalorder %s30, 1
      %p300 = por %p298, %p299
      %p301 = scmp.ne.s32.totalorder %s292, %s293
      %p302 = scmp.eq.s32.totalorder %s30, 0
      %p303 = por %p301, %p302
      %p304 = scmp.ne.s32.totalorder %s292, %s293
      %p305 = scmp.eq.s32.totalorder %s31, 1
      %p306 = por %p304, %p305
      %p308 = scmp.ne.s32.totalorder %s293, %s307
      %p309 = scmp.eq.s32.totalorder %s31, 0
      %p310 = por %p308, %p309
      %s312 = sadd.s32 %s311, 1
      %p315 = scmp.eq.s32.totalorder %s25, 1
      %p316 = scmp.ne.s32.totalorder %s311, %s313
      %p317 = scmp.eq.s32.totalorder %s25, 0
      %p318 = por %p316, %p317
      %p319 = scmp.ne.s32.totalorder %s311, %s313
      %p320 = scmp.eq.s32.totalorder %s30, 1
      %p321 = por %p319, %p320
      %p322 = scmp.ne.s32.totalorder %s313, %s314
      %p323 = scmp.eq.s32.totalorder %s30, 0
      %p324 = por %p322, %p323
      %p325 = scmp.ne.s32.totalorder %s313, %s314
      %p326 = scmp.eq.s32.totalorder %s31, 1
      %p327 = por %p325, %p326
      %p329 = scmp.ne.s32.totalorder %s314, %s328
      %p330 = scmp.eq.s32.totalorder %s31, 0
      %p331 = por %p329, %p330
      %s333 = sadd.s32 %s332, 1
      %p336 = scmp.eq.s32.totalorder %s25, 1
      %p337 = scmp.ne.s32.totalorder %s332, %s334
      %p338 = scmp.eq.s32.totalorder %s25, 0
      %p339 = por %p337, %p338
      %p340 = scmp.ne.s32.totalorder %s332, %s334
      %p341 = scmp.eq.s32.totalorder %s30, 1
      %p342 = por %p340, %p341
      %p343 = scmp.ne.s32.totalorder %s334, %s335
      %p344 = scmp.eq.s32.totalorder %s30, 0
      %p345 = por %p343, %p344
      %p346 = scmp.ne.s32.totalorder %s334, %s335
      %p347 = scmp.eq.s32.totalorder %s31, 1
      %p348 = por %p346, %p347
      %p350 = scmp.ne.s32.totalorder %s335, %s349
      %p351 = scmp.eq.s32.totalorder %s31, 0
      %p352 = por %p350, %p351
      %p353 = scmp.le.s32.totalorder 1, %s25
      %p354 = scmp.lt.s32.totalorder %s25, 3
      %p355 = pnand %p353, %p354
      %p356 = pneg %p355
      // Predicated region
      $region9: #{tpu_custom_call.1} parent=5 // pred_check
        _
      $region10: #{tpu_custom_call.1} parent=5 // pred_check_branch
        %358 = sbr.rel (%p355) target = $region12
      $region11: #{tpu_custom_call.1} parent=5 // pred_region
        %s359 = ssub.s32 %s25, 1
        // Predicated region
        $region13: #{tpu_custom_call.1} parent=11 // pred_check
          %p360 = pneg %p63
        $region14: #{tpu_custom_call.1} parent=11 // pred_check_branch
          %362 = sbr.rel (%p360) target = $region16
        $region15: #{tpu_custom_call.1} parent=11 // pred_region
          %364 = vsyncadd [#allocation5], 0
          %s365 = smul.addr %s35, 64
          %s366 = smul.addr %s365, 4
          %s367 = scalar_lea.hbm %s0, %s366
          %s368 = sshll.u32 %s367, 4
          %s369 = int_to_ptr.hbm [resolvable:$true] %s368
          %s370 = sshll.u32 [#allocation4], 4
          %s371 = int_to_ptr.vmem [resolvable:$true] %s370
          %376 = dma.hbm_to_vmem [thread:$0]  %s369, 4096, %s371, [#allocation5], 128, 128, 8
        $region16: #{tpu_custom_call.1} parent=11 // pred_fallthru
          _
        // Predicated region
        $region17: #{tpu_custom_call.1} parent=11 // pred_check
          %p377 = pneg %p114
        $region18: #{tpu_custom_call.1} parent=11 // pred_check_branch
          %379 = sbr.rel (%p377) target = $region20
        $region19: #{tpu_custom_call.1} parent=11 // pred_region
          _
        $region20: #{tpu_custom_call.1} parent=11 // pred_fallthru
          _
        // Predicated region
        $region21: #{tpu_custom_call.1} parent=11 // pred_check
          %p380 = pneg %p135
        $region22: #{tpu_custom_call.1} parent=11 // pred_check_branch
          %382 = sbr.rel (%p380) target = $region24
        $region23: #{tpu_custom_call.1} parent=11 // pred_region
          _
        $region24: #{tpu_custom_call.1} parent=11 // pred_fallthru
          _
        // Predicated region
        $region25: #{tpu_custom_call.1} parent=11 // pred_check
          %p383 = pneg %p156
        $region26: #{tpu_custom_call.1} parent=11 // pred_check_branch
          %385 = sbr.rel (%p383) target = $region28
        $region27: #{tpu_custom_call.1} parent=11 // pred_region
          %387 = vsyncadd [#allocation8], 0
          %s388 = sshll.u32 %s4, 4
          %s389 = int_to_ptr.hbm [resolvable:$true] %s388
          %s390 = sshll.u32 [#allocation9], 4
          %s391 = int_to_ptr.vmem [resolvable:$true] %s390
          %396 = dma.hbm_to_vmem [thread:$0]  %s389, 1024, %s391, [#allocation8], 64, 64, 4
        $region28: #{tpu_custom_call.1} parent=11 // pred_fallthru
          _
        // Predicated region
        $region29: #{tpu_custom_call.1} parent=11 // pred_check
          %p397 = pneg %p177
        $region30: #{tpu_custom_call.1} parent=11 // pred_check_branch
          %399 = sbr.rel (%p397) target = $region32
        $region31: #{tpu_custom_call.1} parent=11 // pred_region
          _
        $region32: #{tpu_custom_call.1} parent=11 // pred_fallthru
          _
        // Predicated region
        $region33: #{tpu_custom_call.1} parent=11 // pred_check
          %p400 = pneg %p198
        $region34: #{tpu_custom_call.1} parent=11 // pred_check_branch
          %402 = sbr.rel (%p400) target = $region36
        $region35: #{tpu_custom_call.1} parent=11 // pred_region
          _
        $region36: #{tpu_custom_call.1} parent=11 // pred_fallthru
          _
        // Predicated region
        $region37: #{tpu_custom_call.1} parent=11 // pred_check
          %p403 = pneg %p219
        $region38: #{tpu_custom_call.1} parent=11 // pred_check_branch
          %405 = sbr.rel (%p403) target = $region40
        $region39: #{tpu_custom_call.1} parent=11 // pred_region
          %407 = vsyncadd [#allocation11], 0
          %s408 = sshll.u32 %s7, 4
          %s409 = int_to_ptr.hbm [resolvable:$true] %s408
          %s410 = sshll.u32 [#allocation10], 4
          %s411 = int_to_ptr.vmem [resolvable:$true] %s410
          %416 = dma.hbm_to_vmem [thread:$0]  %s409, 2048, %s411, [#allocation11], 128, 128, 8
        $region40: #{tpu_custom_call.1} parent=11 // pred_fallthru
          _
        // Predicated region
        $region41: #{tpu_custom_call.1} parent=11 // pred_check
          %p417 = pneg %p240
        $region42: #{tpu_custom_call.1} parent=11 // pred_check_branch
          %419 = sbr.rel (%p417) target = $region44
        $region43: #{tpu_custom_call.1} parent=11 // pred_region
          _
        $region44: #{tpu_custom_call.1} parent=11 // pred_fallthru
          _
        // Predicated region
        $region45: #{tpu_custom_call.1} parent=11 // pred_check
          %p420 = pneg %p261
        $region46: #{tpu_custom_call.1} parent=11 // pred_check_branch
          %422 = sbr.rel (%p420) target = $region48
        $region47: #{tpu_custom_call.1} parent=11 // pred_region
          _
        $region48: #{tpu_custom_call.1} parent=11 // pred_fallthru
          _
        // Predicated region
        $region49: #{tpu_custom_call.1} parent=11 // pred_check
          %p423 = pneg %p282
        $region50: #{tpu_custom_call.1} parent=11 // pred_check_branch
          %425 = sbr.rel (%p423) target = $region52
        $region51: #{tpu_custom_call.1} parent=11 // pred_region
          _
        $region52: #{tpu_custom_call.1} parent=11 // pred_fallthru
          _
        // Predicated region
        $region53: #{tpu_custom_call.1} parent=11 // pred_check
          %p426 = pneg %p303
        $region54: #{tpu_custom_call.1} parent=11 // pred_check_branch
          %428 = sbr.rel (%p426) target = $region56
        $region55: #{tpu_custom_call.1} parent=11 // pred_region
          %430 = vsyncadd [#allocation11], 0
          %s431 = sshll.u32 %s11, 4
          %s432 = int_to_ptr.hbm [resolvable:$true] %s431
          %s433 = sshll.u32 [#allocation12], 4
          %s434 = int_to_ptr.vmem [resolvable:$true] %s433
          %439 = dma.hbm_to_vmem [thread:$0]  %s432, 2048, %s434, [#allocation11], 128, 128, 8
        $region56: #{tpu_custom_call.1} parent=11 // pred_fallthru
          _
        // Predicated region
        $region57: #{tpu_custom_call.1} parent=11 // pred_check
          %p440 = pneg %p324
        $region58: #{tpu_custom_call.1} parent=11 // pred_check_branch
          %442 = sbr.rel (%p440) target = $region60
        $region59: #{tpu_custom_call.1} parent=11 // pred_region
          _
        $region60: #{tpu_custom_call.1} parent=11 // pred_fallthru
          _
      $region12: #{tpu_custom_call.1} parent=5 // pred_fallthru
        _
      %p443 = scmp.lt.s32.totalorder %s25, 2
      // Predicated region
      $region61: #{tpu_custom_call.1} parent=5 // pred_check
        %p444 = pneg %p443
      $region62: #{tpu_custom_call.1} parent=5 // pred_check_branch
        %446 = sbr.rel (%p444) target = $region64
      $region63: #{tpu_custom_call.1} parent=5 // pred_region
        // Predicated region
        $region65: #{tpu_custom_call.1} parent=63 // pred_check
          %p447 = pneg %p87
        $region66: #{tpu_custom_call.1} parent=63 // pred_check_branch
          %449 = sbr.rel (%p447) target = $region68
        $region67: #{tpu_custom_call.1} parent=63 // pred_region
          %s450 = sand.u32 %s25, 1
          %s451 = scalar_lea.sflag [#allocation8], %s450
          %s452 = sand.u32 %s77, 1
          %s453 = smul.addr %s452, 128
          %s454 = scalar_lea.vmem [#allocation7], %s453
          %s455 = ssub.s32 1, %s32
          %s456 = smul.u32 %s33, %s455
          %s457 = smul.u32 32, %s456
          %459 = vsyncadd %s451, 0
          %s460 = smul.addr %s457, 4
          %s461 = scalar_lea.hbm %s1, %s460
          %s462 = sshll.u32 %s461, 4
          %s463 = int_to_ptr.hbm [resolvable:$true] %s462
          %s464 = sshll.u32 %s454, 4
          %s465 = int_to_ptr.vmem [resolvable:$true] %s464
          %470 = dma.hbm_to_vmem [thread:$0]  %s463, 2048, %s465, %s451, 64, 64, 4
        $region68: #{tpu_custom_call.1} parent=63 // pred_fallthru
          _
      $region64: #{tpu_custom_call.1} parent=5 // pred_fallthru
        _
      %p471 = scmp.le.s32.totalorder 1, %s25
      %p472 = scmp.lt.s32.totalorder %s25, 3
      %p473 = pnand %p471, %p472
      %p474 = pneg %p473
      // Predicated region
      $region69: #{tpu_custom_call.1} parent=5 // pred_check
        _
      $region70: #{tpu_custom_call.1} parent=5 // pred_check_branch
        %476 = sbr.rel (%p473) target = $region72
      $region71: #{tpu_custom_call.1} parent=5 // pred_region
        %s477 = ssub.s32 %s25, 1
        // Predicated region
        $region73: #{tpu_custom_call.1} parent=71 // pred_check
          %p478 = pneg %p63
        $region74: #{tpu_custom_call.1} parent=71 // pred_check_branch
          %480 = sbr.rel (%p478) target = $region76
        $region75: #{tpu_custom_call.1} parent=71 // pred_region
          %482 = dma.done [#allocation5], 4096
        $region76: #{tpu_custom_call.1} parent=71 // pred_fallthru
          _
        %s483 = sand.u32 %s30, 1
        %s484 = scalar_lea.sflag [#allocation8], %s483
        %s485 = sand.u32 %s80, 1
        %s486 = smul.addr %s485, 128
        %s487 = scalar_lea.vmem [#allocation7], %s486
        // Predicated region
        $region77: #{tpu_custom_call.1} parent=71 // pred_check
          %p488 = pneg %p93
        $region78: #{tpu_custom_call.1} parent=71 // pred_check_branch
          %490 = sbr.rel (%p488) target = $region80
        $region79: #{tpu_custom_call.1} parent=71 // pred_region
          %492 = dma.done %s484, 2048
        $region80: #{tpu_custom_call.1} parent=71 // pred_fallthru
          _
        // Predicated region
        $region81: #{tpu_custom_call.1} parent=71 // pred_check
          %p493 = pneg %p156
        $region82: #{tpu_custom_call.1} parent=71 // pred_check_branch
          %495 = sbr.rel (%p493) target = $region84
        $region83: #{tpu_custom_call.1} parent=71 // pred_region
          %497 = dma.done [#allocation8], 1024
        $region84: #{tpu_custom_call.1} parent=71 // pred_fallthru
          _
        // Predicated region
        $region85: #{tpu_custom_call.1} parent=71 // pred_check
          %p498 = pneg %p219
        $region86: #{tpu_custom_call.1} parent=71 // pred_check_branch
          %500 = sbr.rel (%p498) target = $region88
        $region87: #{tpu_custom_call.1} parent=71 // pred_region
          %502 = dma.done [#allocation11], 2048
        $region88: #{tpu_custom_call.1} parent=71 // pred_fallthru
          _
        // Predicated region
        $region89: #{tpu_custom_call.1} parent=71 // pred_check
          %p503 = pneg %p303
        $region90: #{tpu_custom_call.1} parent=71 // pred_check_branch
          %505 = sbr.rel (%p503) target = $region92
        $region91: #{tpu_custom_call.1} parent=71 // pred_region
          %507 = dma.done [#allocation11], 2048
        $region92: #{tpu_custom_call.1} parent=71 // pred_fallthru
          _
        %p508 = pneg %p63
        %p509 = pneg %p60
        %s510 = sand.u32 %s30, 1
        %s511 = scalar_lea.sflag [#allocation8], %s510
        %s512 = sand.u32 %s80, 1
        %s513 = smul.addr %s512, 128
        %s514 = scalar_lea.vmem [#allocation7], %s513
        %p515 = pneg %p93
        %p516 = pneg %p90
        %p517 = pneg %p114
        %p518 = pneg %p111
        %p519 = pneg %p135
        %p520 = pneg %p132
        %p521 = pneg %p156
        %p522 = pneg %p153
        %p523 = pneg %p177
        %p524 = pneg %p174
        %p525 = pneg %p198
        %p526 = pneg %p195
        %p527 = pneg %p219
        %p528 = pneg %p216
        %p529 = pneg %p240
        %p530 = pneg %p237
        %p531 = pneg %p261
        %p532 = pneg %p258
        %p533 = pneg %p282
        %p534 = pneg %p279
        %p535 = pneg %p303
        %p536 = pneg %p300
        %p537 = pneg %p324
        %p538 = pneg %p321
        %p539 = pneg %p345
        %p540 = pneg %p342
        %s541 = ssub.s32 1, %s34
        %s542 = smul.u32 %s35, %s541
        %s543 = smul.u32 32, %s542
        %p544 = scmp.eq.s32.totalorder %s35, 0
        // Predicated region
        $region93: #{tpu_custom_call.1} parent=71 // pred_check
          %p545 = pneg %p544
        $region94: #{tpu_custom_call.1} parent=71 // pred_check_branch
          %547 = sbr.rel (%p545) target = $region96
        $region95: #{tpu_custom_call.1} parent=71 // pred_region
          %548 = vst [vmem:[#allocation2] sm:$0xff] 0.0
          %549 = vst [vmem:[#allocation2 + $0x8] sm:$0xff] 0.0
          %550 = vst [vmem:[#allocation2 + $0x10] sm:$0xff] 0.0
          %551 = vst [vmem:[#allocation2 + $0x18] sm:$0xff] 0.0
          %552 = vst [vmem:[#allocation2 + $0x20] sm:$0xff] 0.0
          %553 = vst [vmem:[#allocation2 + $0x28] sm:$0xff] 0.0
          %554 = vst [vmem:[#allocation2 + $0x30] sm:$0xff] 0.0
          %555 = vst [vmem:[#allocation2 + $0x38] sm:$0xff] 0.0
          %556 = vst [vmem:[#allocation2 + $0x40] sm:$0xff] 0.0
          %557 = vst [vmem:[#allocation2 + $0x48] sm:$0xff] 0.0
          %558 = vst [vmem:[#allocation2 + $0x50] sm:$0xff] 0.0
          %559 = vst [vmem:[#allocation2 + $0x58] sm:$0xff] 0.0
          %560 = vst [vmem:[#allocation2 + $0x60] sm:$0xff] 0.0
          %561 = vst [vmem:[#allocation2 + $0x68] sm:$0xff] 0.0
          %562 = vst [vmem:[#allocation2 + $0x70] sm:$0xff] 0.0
          %563 = vst [vmem:[#allocation2 + $0x78] sm:$0xff] 0.0
          %564 = vst [vmem:[#allocation2 + $0x80] sm:$0xff] 0.0
          %565 = vst [vmem:[#allocation2 + $0x88] sm:$0xff] 0.0
          %566 = vst [vmem:[#allocation2 + $0x90] sm:$0xff] 0.0
          %567 = vst [vmem:[#allocation2 + $0x98] sm:$0xff] 0.0
          %568 = vst [vmem:[#allocation2 + $0xa0] sm:$0xff] 0.0
          %569 = vst [vmem:[#allocation2 + $0xa8] sm:$0xff] 0.0
          %570 = vst [vmem:[#allocation2 + $0xb0] sm:$0xff] 0.0
          %571 = vst [vmem:[#allocation2 + $0xb8] sm:$0xff] 0.0
          %572 = vst [vmem:[#allocation2 + $0xc0] sm:$0xff] 0.0
          %573 = vst [vmem:[#allocation2 + $0xc8] sm:$0xff] 0.0
          %574 = vst [vmem:[#allocation2 + $0xd0] sm:$0xff] 0.0
          %575 = vst [vmem:[#allocation2 + $0xd8] sm:$0xff] 0.0
          %576 = vst [vmem:[#allocation2 + $0xe0] sm:$0xff] 0.0
          %577 = vst [vmem:[#allocation2 + $0xe8] sm:$0xff] 0.0
          %578 = vst [vmem:[#allocation2 + $0xf0] sm:$0xff] 0.0
          %579 = vst [vmem:[#allocation2 + $0xf8] sm:$0xff] 0.0
        $region96: #{tpu_custom_call.1} parent=71 // pred_fallthru
          _
        %v580 = vld [vmem:[#allocation4] sm:$0xff]
        %v581 = vld [vmem:[#allocation4 + $0x8] sm:$0xff]
        %v582 = vld [vmem:[#allocation4 + $0x10] sm:$0xff]
        %v583 = vld [vmem:[#allocation4 + $0x18] sm:$0xff]
        %v584 = vld [vmem:[#allocation4 + $0x20] sm:$0xff]
        %v585 = vld [vmem:[#allocation4 + $0x28] sm:$0xff]
        %v586 = vld [vmem:[#allocation4 + $0x30] sm:$0xff]
        %v587 = vld [vmem:[#allocation4 + $0x38] sm:$0xff]
        %v588 = vld [vmem:[#allocation4 + $0x40] sm:$0xff]
        %v589 = vld [vmem:[#allocation4 + $0x48] sm:$0xff]
        %v590 = vld [vmem:[#allocation4 + $0x50] sm:$0xff]
        %v591 = vld [vmem:[#allocation4 + $0x58] sm:$0xff]
        %v592 = vld [vmem:[#allocation4 + $0x60] sm:$0xff]
        %v593 = vld [vmem:[#allocation4 + $0x68] sm:$0xff]
        %v594 = vld [vmem:[#allocation4 + $0x70] sm:$0xff]
        %v595 = vld [vmem:[#allocation4 + $0x78] sm:$0xff]
        %v596 = vld [vmem:[#allocation4 + $0x80] sm:$0xff]
        %v597 = vld [vmem:[#allocation4 + $0x88] sm:$0xff]
        %v598 = vld [vmem:[#allocation4 + $0x90] sm:$0xff]
        %v599 = vld [vmem:[#allocation4 + $0x98] sm:$0xff]
        %v600 = vld [vmem:[#allocation4 + $0xa0] sm:$0xff]
        %v601 = vld [vmem:[#allocation4 + $0xa8] sm:$0xff]
        %v602 = vld [vmem:[#allocation4 + $0xb0] sm:$0xff]
        %v603 = vld [vmem:[#allocation4 + $0xb8] sm:$0xff]
        %v604 = vld [vmem:[#allocation4 + $0xc0] sm:$0xff]
        %v605 = vld [vmem:[#allocation4 + $0xc8] sm:$0xff]
        %v606 = vld [vmem:[#allocation4 + $0xd0] sm:$0xff]
        %v607 = vld [vmem:[#allocation4 + $0xd8] sm:$0xff]
        %v608 = vld [vmem:[#allocation4 + $0xe0] sm:$0xff]
        %v609 = vld [vmem:[#allocation4 + $0xe8] sm:$0xff]
        %v610 = vld [vmem:[#allocation4 + $0xf0] sm:$0xff]
        %v611 = vld [vmem:[#allocation4 + $0xf8] sm:$0xff]
        %p612 = scmp.eq.s32.totalorder %s34, 0
        // Predicated region
        $region97: #{tpu_custom_call.1} parent=71 // pred_check
          %p613 = pneg %p612
        $region98: #{tpu_custom_call.1} parent=71 // pred_check_branch
          %615 = sbr.rel (%p613) target = $region100
        $region99: #{tpu_custom_call.1} parent=71 // pred_region
          %v616 = vld [vmem:[#allocation2] sm:$0xff]
          %v617 = vld [vmem:[#allocation2 + $0x8] sm:$0xff]
          %v618 = vld [vmem:[#allocation2 + $0x10] sm:$0xff]
          %v619 = vld [vmem:[#allocation2 + $0x18] sm:$0xff]
          %v620 = vld [vmem:[#allocation2 + $0x20] sm:$0xff]
          %v621 = vld [vmem:[#allocation2 + $0x28] sm:$0xff]
          %v622 = vld [vmem:[#allocation2 + $0x30] sm:$0xff]
          %v623 = vld [vmem:[#allocation2 + $0x38] sm:$0xff]
          %v624 = vld [vmem:[#allocation2 + $0x40] sm:$0xff]
          %v625 = vld [vmem:[#allocation2 + $0x48] sm:$0xff]
          %v626 = vld [vmem:[#allocation2 + $0x50] sm:$0xff]
          %v627 = vld [vmem:[#allocation2 + $0x58] sm:$0xff]
          %v628 = vld [vmem:[#allocation2 + $0x60] sm:$0xff]
          %v629 = vld [vmem:[#allocation2 + $0x68] sm:$0xff]
          %v630 = vld [vmem:[#allocation2 + $0x70] sm:$0xff]
          %v631 = vld [vmem:[#allocation2 + $0x78] sm:$0xff]
          %v632 = vld [vmem:[#allocation2 + $0x80] sm:$0xff]
          %v633 = vld [vmem:[#allocation2 + $0x88] sm:$0xff]
          %v634 = vld [vmem:[#allocation2 + $0x90] sm:$0xff]
          %v635 = vld [vmem:[#allocation2 + $0x98] sm:$0xff]
          %v636 = vld [vmem:[#allocation2 + $0xa0] sm:$0xff]
          %v637 = vld [vmem:[#allocation2 + $0xa8] sm:$0xff]
          %v638 = vld [vmem:[#allocation2 + $0xb0] sm:$0xff]
          %v639 = vld [vmem:[#allocation2 + $0xb8] sm:$0xff]
          %v640 = vld [vmem:[#allocation2 + $0xc0] sm:$0xff]
          %v641 = vld [vmem:[#allocation2 + $0xc8] sm:$0xff]
          %v642 = vld [vmem:[#allocation2 + $0xd0] sm:$0xff]
          %v643 = vld [vmem:[#allocation2 + $0xd8] sm:$0xff]
          %v644 = vld [vmem:[#allocation2 + $0xe0] sm:$0xff]
          %v645 = vld [vmem:[#allocation2 + $0xe8] sm:$0xff]
          %v646 = vld [vmem:[#allocation2 + $0xf0] sm:$0xff]
          %v647 = vld [vmem:[#allocation2 + $0xf8] sm:$0xff]
          %v648 = vld [vmem:[%s487] sm:$0xf]
          %v649 = vld [vmem:[%s487 + $0x4] sm:$0xf]
          %v650 = vld [vmem:[%s487 + $0x8] sm:$0xf]
          %v651 = vld [vmem:[%s487 + $0xc] sm:$0xf]
          %v652 = vld [vmem:[%s487 + $0x10] sm:$0xf]
          %v653 = vld [vmem:[%s487 + $0x14] sm:$0xf]
          %v654 = vld [vmem:[%s487 + $0x18] sm:$0xf]
          %v655 = vld [vmem:[%s487 + $0x1c] sm:$0xf]
          %v656 = vld [vmem:[%s487 + $0x20] sm:$0xf]
          %v657 = vld [vmem:[%s487 + $0x24] sm:$0xf]
          %v658 = vld [vmem:[%s487 + $0x28] sm:$0xf]
          %v659 = vld [vmem:[%s487 + $0x2c] sm:$0xf]
          %v660 = vld [vmem:[%s487 + $0x30] sm:$0xf]
          %v661 = vld [vmem:[%s487 + $0x34] sm:$0xf]
          %v662 = vld [vmem:[%s487 + $0x38] sm:$0xf]
          %v663 = vld [vmem:[%s487 + $0x3c] sm:$0xf]
          %v664 = vld [vmem:[%s487 + $0x40] sm:$0xf]
          %v665 = vld [vmem:[%s487 + $0x44] sm:$0xf]
          %v666 = vld [vmem:[%s487 + $0x48] sm:$0xf]
          %v667 = vld [vmem:[%s487 + $0x4c] sm:$0xf]
          %v668 = vld [vmem:[%s487 + $0x50] sm:$0xf]
          %v669 = vld [vmem:[%s487 + $0x54] sm:$0xf]
          %v670 = vld [vmem:[%s487 + $0x58] sm:$0xf]
          %v671 = vld [vmem:[%s487 + $0x5c] sm:$0xf]
          %v672 = vld [vmem:[%s487 + $0x60] sm:$0xf]
          %v673 = vld [vmem:[%s487 + $0x64] sm:$0xf]
          %v674 = vld [vmem:[%s487 + $0x68] sm:$0xf]
          %v675 = vld [vmem:[%s487 + $0x6c] sm:$0xf]
          %v676 = vld [vmem:[%s487 + $0x70] sm:$0xf]
          %v677 = vld [vmem:[%s487 + $0x74] sm:$0xf]
          %v678 = vld [vmem:[%s487 + $0x78] sm:$0xf]
          %v679 = vld [vmem:[%s487 + $0x7c] sm:$0xf]
          %v712 = vunpack.c.l.b16 %v580
          %v713 = vunpack.c.h.b16 %v580
          %v714 = vunpack.c.l.b16 %v581
          %v715 = vunpack.c.h.b16 %v581
          %v716 = vunpack.c.l.b16 %v582
          %v717 = vunpack.c.h.b16 %v582
          %v718 = vunpack.c.l.b16 %v583
          %v719 = vunpack.c.h.b16 %v583
          %v720 = vunpack.c.l.b16 %v584
          %v721 = vunpack.c.h.b16 %v584
          %v722 = vunpack.c.l.b16 %v585
          %v723 = vunpack.c.h.b16 %v585
          %v724 = vunpack.c.l.b16 %v586
          %v725 = vunpack.c.h.b16 %v586
          %v726 = vunpack.c.l.b16 %v587
          %v727 = vunpack.c.h.b16 %v587
          %v728 = vunpack.c.l.b16 %v588
          %v729 = vunpack.c.h.b16 %v588
          %v730 = vunpack.c.l.b16 %v589
          %v731 = vunpack.c.h.b16 %v589
          %v732 = vunpack.c.l.b16 %v590
          %v733 = vunpack.c.h.b16 %v590
          %v734 = vunpack.c.l.b16 %v591
          %v735 = vunpack.c.h.b16 %v591
          %v736 = vunpack.c.l.b16 %v592
          %v737 = vunpack.c.h.b16 %v592
          %v738 = vunpack.c.l.b16 %v593
          %v739 = vunpack.c.h.b16 %v593
          %v740 = vunpack.c.l.b16 %v594
          %v741 = vunpack.c.h.b16 %v594
          %v742 = vunpack.c.l.b16 %v595
          %v743 = vunpack.c.h.b16 %v595
          %v744 = vunpack.c.l.b16 %v596
          %v745 = vunpack.c.h.b16 %v596
          %v746 = vunpack.c.l.b16 %v597
          %v747 = vunpack.c.h.b16 %v597
          %v748 = vunpack.c.l.b16 %v598
          %v749 = vunpack.c.h.b16 %v598
          %v750 = vunpack.c.l.b16 %v599
          %v751 = vunpack.c.h.b16 %v599
          %v752 = vunpack.c.l.b16 %v600
          %v753 = vunpack.c.h.b16 %v600
          %v754 = vunpack.c.l.b16 %v601
          %v755 = vunpack.c.h.b16 %v601
          %v756 = vunpack.c.l.b16 %v602
          %v757 = vunpack.c.h.b16 %v602
          %v758 = vunpack.c.l.b16 %v603
          %v759 = vunpack.c.h.b16 %v603
          %v760 = vunpack.c.l.b16 %v604
          %v761 = vunpack.c.h.b16 %v604
          %v762 = vunpack.c.l.b16 %v605
          %v763 = vunpack.c.h.b16 %v605
          %v764 = vunpack.c.l.b16 %v606
          %v765 = vunpack.c.h.b16 %v606
          %v766 = vunpack.c.l.b16 %v607
          %v767 = vunpack.c.h.b16 %v607
          %v768 = vunpack.c.l.b16 %v608
          %v769 = vunpack.c.h.b16 %v608
          %v770 = vunpack.c.l.b16 %v609
          %v771 = vunpack.c.h.b16 %v609
          %v772 = vunpack.c.l.b16 %v610
          %v773 = vunpack.c.h.b16 %v610
          %v774 = vunpack.c.l.b16 %v611
          %v775 = vunpack.c.h.b16 %v611
          %v776 = vpack.c.b16 %v714, %v712
          %v777 = vpack.c.b16 %v715, %v713
          %v778 = vpack.c.b16 %v718, %v716
          %v779 = vpack.c.b16 %v719, %v717
          %v780 = vpack.c.b16 %v722, %v720
          %v781 = vpack.c.b16 %v723, %v721
          %v782 = vpack.c.b16 %v726, %v724
          %v783 = vpack.c.b16 %v727, %v725
          %v784 = vpack.c.b16 %v730, %v728
          %v785 = vpack.c.b16 %v731, %v729
          %v786 = vpack.c.b16 %v734, %v732
          %v787 = vpack.c.b16 %v735, %v733
          %v788 = vpack.c.b16 %v738, %v736
          %v789 = vpack.c.b16 %v739, %v737
          %v790 = vpack.c.b16 %v742, %v740
          %v791 = vpack.c.b16 %v743, %v741
          %v792 = vpack.c.b16 %v746, %v744
          %v793 = vpack.c.b16 %v747, %v745
          %v794 = vpack.c.b16 %v750, %v748
          %v795 = vpack.c.b16 %v751, %v749
          %v796 = vpack.c.b16 %v754, %v752
          %v797 = vpack.c.b16 %v755, %v753
          %v798 = vpack.c.b16 %v758, %v756
          %v799 = vpack.c.b16 %v759, %v757
          %v800 = vpack.c.b16 %v762, %v760
          %v801 = vpack.c.b16 %v763, %v761
          %v802 = vpack.c.b16 %v766, %v764
          %v803 = vpack.c.b16 %v767, %v765
          %v804 = vpack.c.b16 %v770, %v768
          %v805 = vpack.c.b16 %v771, %v769
          %v806 = vpack.c.b16 %v774, %v772
          %v807 = vpack.c.b16 %v775, %v773
          %v872 = vunpack.c.l.b16 %v648
          %v873 = vunpack.c.l.b16 %v649
          %v874 = vunpack.c.l.b16 %v650
          %v875 = vunpack.c.l.b16 %v651
          %v876 = vunpack.c.l.b16 %v652
          %v877 = vunpack.c.l.b16 %v653
          %v878 = vunpack.c.l.b16 %v654
          %v879 = vunpack.c.l.b16 %v655
          %v880 = vunpack.c.l.b16 %v656
          %v881 = vunpack.c.l.b16 %v657
          %v882 = vunpack.c.l.b16 %v658
          %v883 = vunpack.c.l.b16 %v659
          %v884 = vunpack.c.l.b16 %v660
          %v885 = vunpack.c.l.b16 %v661
          %v886 = vunpack.c.l.b16 %v662
          %v887 = vunpack.c.l.b16 %v663
          %v888 = vunpack.c.l.b16 %v664
          %v889 = vunpack.c.l.b16 %v665
          %v890 = vunpack.c.l.b16 %v666
          %v891 = vunpack.c.l.b16 %v667
          %v892 = vunpack.c.l.b16 %v668
          %v893 = vunpack.c.l.b16 %v669
          %v894 = vunpack.c.l.b16 %v670
          %v895 = vunpack.c.l.b16 %v671
          %v896 = vunpack.c.l.b16 %v672
          %v897 = vunpack.c.l.b16 %v673
          %v898 = vunpack.c.l.b16 %v674
          %v899 = vunpack.c.l.b16 %v675
          %v900 = vunpack.c.l.b16 %v676
          %v901 = vunpack.c.l.b16 %v677
          %v902 = vunpack.c.l.b16 %v678
          %v903 = vunpack.c.l.b16 %v679
          %v904 = vpack.c.b16 %v873, %v872
          %v905 = vpack.c.b16 %v875, %v874
          %v906 = vpack.c.b16 %v877, %v876
          %v907 = vpack.c.b16 %v879, %v878
          %v908 = vpack.c.b16 %v881, %v880
          %v909 = vpack.c.b16 %v883, %v882
          %v910 = vpack.c.b16 %v885, %v884
          %v911 = vpack.c.b16 %v887, %v886
          %v912 = vpack.c.b16 %v889, %v888
          %v913 = vpack.c.b16 %v891, %v890
          %v914 = vpack.c.b16 %v893, %v892
          %v915 = vpack.c.b16 %v895, %v894
          %v916 = vpack.c.b16 %v897, %v896
          %v917 = vpack.c.b16 %v899, %v898
          %v918 = vpack.c.b16 %v901, %v900
          %v919 = vpack.c.b16 %v903, %v902
          %936 = vmatpush.bf16.msra.mxu0 %v911
          %937 = vmatpush.bf16.msra.mxu0 %v910
          %938 = vmatpush.bf16.msra.mxu0 %v909
          %939 = vmatpush.bf16.msra.mxu0 %v908
          %940 = vmatpush.bf16.msra.mxu0 %v907
          %941 = vmatpush.bf16.msra.mxu0 %v906
          %942 = vmatpush.bf16.msra.mxu0 %v905
          %943 = vmatpush.bf16.msra.mxu0 %v904
          %944 = vmatmul.bf16.gmra.mxu0 %v776
          %v945 = vpop.f32.mrf.mxu0
          %v946 = vadd.f32 0.0, %v945
          %v947 = vpop.f32.mrf.mxu0
          %v948 = vadd.f32 0.0, %v947
          %949 = vmatmul.bf16.gmra.mxu0 %v778
          %v950 = vpop.f32.mrf.mxu0
          %v951 = vadd.f32 0.0, %v950
          %v952 = vpop.f32.mrf.mxu0
          %v953 = vadd.f32 0.0, %v952
          %954 = vmatmul.bf16.gmra.mxu0 %v780
          %v955 = vpop.f32.mrf.mxu0
          %v956 = vadd.f32 0.0, %v955
          %v957 = vpop.f32.mrf.mxu0
          %v958 = vadd.f32 0.0, %v957
          %959 = vmatmul.bf16.gmra.mxu0 %v782
          %v960 = vpop.f32.mrf.mxu0
          %v961 = vadd.f32 0.0, %v960
          %v962 = vpop.f32.mrf.mxu0
          %v963 = vadd.f32 0.0, %v962
          %964 = vmatmul.bf16.gmra.mxu0 %v784
          %v965 = vpop.f32.mrf.mxu0
          %v966 = vadd.f32 0.0, %v965
          %v967 = vpop.f32.mrf.mxu0
          %v968 = vadd.f32 0.0, %v967
          %969 = vmatmul.bf16.gmra.mxu0 %v786
          %v970 = vpop.f32.mrf.mxu0
          %v971 = vadd.f32 0.0, %v970
          %v972 = vpop.f32.mrf.mxu0
          %v973 = vadd.f32 0.0, %v972
          %974 = vmatmul.bf16.gmra.mxu0 %v788
          %v975 = vpop.f32.mrf.mxu0
          %v976 = vadd.f32 0.0, %v975
          %v977 = vpop.f32.mrf.mxu0
          %v978 = vadd.f32 0.0, %v977
          %979 = vmatmul.bf16.gmra.mxu0 %v790
          %v980 = vpop.f32.mrf.mxu0
          %v981 = vadd.f32 0.0, %v980
          %v982 = vpop.f32.mrf.mxu0
          %v983 = vadd.f32 0.0, %v982
          %984 = vmatmul.bf16.gmra.mxu0 %v792
          %v985 = vpop.f32.mrf.mxu0
          %v986 = vadd.f32 0.0, %v985
          %v987 = vpop.f32.mrf.mxu0
          %v988 = vadd.f32 0.0, %v987
          %989 = vmatmul.bf16.gmra.mxu0 %v794
          %v990 = vpop.f32.mrf.mxu0
          %v991 = vadd.f32 0.0, %v990
          %v992 = vpop.f32.mrf.mxu0
          %v993 = vadd.f32 0.0, %v992
          %994 = vmatmul.bf16.gmra.mxu0 %v796
          %v995 = vpop.f32.mrf.mxu0
          %v996 = vadd.f32 0.0, %v995
          %v997 = vpop.f32.mrf.mxu0
          %v998 = vadd.f32 0.0, %v997
          %999 = vmatmul.bf16.gmra.mxu0 %v798
          %v1000 = vpop.f32.mrf.mxu0
          %v1001 = vadd.f32 0.0, %v1000
          %v1002 = vpop.f32.mrf.mxu0
          %v1003 = vadd.f32 0.0, %v1002
          %1004 = vmatmul.bf16.gmra.mxu0 %v800
          %v1005 = vpop.f32.mrf.mxu0
          %v1006 = vadd.f32 0.0, %v1005
          %v1007 = vpop.f32.mrf.mxu0
          %v1008 = vadd.f32 0.0, %v1007
          %1009 = vmatmul.bf16.gmra.mxu0 %v802
          %v1010 = vpop.f32.mrf.mxu0
          %v1011 = vadd.f32 0.0, %v1010
          %v1012 = vpop.f32.mrf.mxu0
          %v1013 = vadd.f32 0.0, %v1012
          %1014 = vmatmul.bf16.gmra.mxu0 %v804
          %v1015 = vpop.f32.mrf.mxu0
          %v1016 = vadd.f32 0.0, %v1015
          %v1017 = vpop.f32.mrf.mxu0
          %v1018 = vadd.f32 0.0, %v1017
          %1019 = vmatmul.bf16.gmra.mxu0 %v806
          %v1020 = vpop.f32.mrf.mxu0
          %v1021 = vadd.f32 0.0, %v1020
          %v1022 = vpop.f32.mrf.mxu0
          %v1023 = vadd.f32 0.0, %v1022
          %1024 = vdwg.mxu0
          %1025 = vmatpush.bf16.msra.mxu0 %v919
          %1026 = vmatpush.bf16.msra.mxu0 %v918
          %1027 = vmatpush.bf16.msra.mxu0 %v917
          %1028 = vmatpush.bf16.msra.mxu0 %v916
          %1029 = vmatpush.bf16.msra.mxu0 %v915
          %1030 = vmatpush.bf16.msra.mxu0 %v914
          %1031 = vmatpush.bf16.msra.mxu0 %v913
          %1032 = vmatpush.bf16.msra.mxu0 %v912
          %1033 = vmatmul.bf16.gmra.mxu0 %v777
          %v1034 = vpop.f32.mrf.mxu0
          %v1035 = vadd.f32 %v946, %v1034
          %v1036 = vpop.f32.mrf.mxu0
          %v1037 = vadd.f32 %v948, %v1036
          %1038 = vmatmul.bf16.gmra.mxu0 %v779
          %v1039 = vpop.f32.mrf.mxu0
          %v1040 = vadd.f32 %v951, %v1039
          %v1041 = vpop.f32.mrf.mxu0
          %v1042 = vadd.f32 %v953, %v1041
          %1043 = vmatmul.bf16.gmra.mxu0 %v781
          %v1044 = vpop.f32.mrf.mxu0
          %v1045 = vadd.f32 %v956, %v1044
          %v1046 = vpop.f32.mrf.mxu0
          %v1047 = vadd.f32 %v958, %v1046
          %1048 = vmatmul.bf16.gmra.mxu0 %v783
          %v1049 = vpop.f32.mrf.mxu0
          %v1050 = vadd.f32 %v961, %v1049
          %v1051 = vpop.f32.mrf.mxu0
          %v1052 = vadd.f32 %v963, %v1051
          %1053 = vmatmul.bf16.gmra.mxu0 %v785
          %v1054 = vpop.f32.mrf.mxu0
          %v1055 = vadd.f32 %v966, %v1054
          %v1056 = vpop.f32.mrf.mxu0
          %v1057 = vadd.f32 %v968, %v1056
          %1058 = vmatmul.bf16.gmra.mxu0 %v787
          %v1059 = vpop.f32.mrf.mxu0
          %v1060 = vadd.f32 %v971, %v1059
          %v1061 = vpop.f32.mrf.mxu0
          %v1062 = vadd.f32 %v973, %v1061
          %1063 = vmatmul.bf16.gmra.mxu0 %v789
          %v1064 = vpop.f32.mrf.mxu0
          %v1065 = vadd.f32 %v976, %v1064
          %v1066 = vpop.f32.mrf.mxu0
          %v1067 = vadd.f32 %v978, %v1066
          %1068 = vmatmul.bf16.gmra.mxu0 %v791
          %v1069 = vpop.f32.mrf.mxu0
          %v1070 = vadd.f32 %v981, %v1069
          %v1071 = vpop.f32.mrf.mxu0
          %v1072 = vadd.f32 %v983, %v1071
          %1073 = vmatmul.bf16.gmra.mxu0 %v793
          %v1074 = vpop.f32.mrf.mxu0
          %v1075 = vadd.f32 %v986, %v1074
          %v1076 = vpop.f32.mrf.mxu0
          %v1077 = vadd.f32 %v988, %v1076
          %1078 = vmatmul.bf16.gmra.mxu0 %v795
          %v1079 = vpop.f32.mrf.mxu0
          %v1080 = vadd.f32 %v991, %v1079
          %v1081 = vpop.f32.mrf.mxu0
          %v1082 = vadd.f32 %v993, %v1081
          %1083 = vmatmul.bf16.gmra.mxu0 %v797
          %v1084 = vpop.f32.mrf.mxu0
          %v1085 = vadd.f32 %v996, %v1084
          %v1086 = vpop.f32.mrf.mxu0
          %v1087 = vadd.f32 %v998, %v1086
          %1088 = vmatmul.bf16.gmra.mxu0 %v799
          %v1089 = vpop.f32.mrf.mxu0
          %v1090 = vadd.f32 %v1001, %v1089
          %v1091 = vpop.f32.mrf.mxu0
          %v1092 = vadd.f32 %v1003, %v1091
          %1093 = vmatmul.bf16.gmra.mxu0 %v801
          %v1094 = vpop.f32.mrf.mxu0
          %v1095 = vadd.f32 %v1006, %v1094
          %v1096 = vpop.f32.mrf.mxu0
          %v1097 = vadd.f32 %v1008, %v1096
          %1098 = vmatmul.bf16.gmra.mxu0 %v803
          %v1099 = vpop.f32.mrf.mxu0
          %v1100 = vadd.f32 %v1011, %v1099
          %v1101 = vpop.f32.mrf.mxu0
          %v1102 = vadd.f32 %v1013, %v1101
          %1103 = vmatmul.bf16.gmra.mxu0 %v805
          %v1104 = vpop.f32.mrf.mxu0
          %v1105 = vadd.f32 %v1016, %v1104
          %v1106 = vpop.f32.mrf.mxu0
          %v1107 = vadd.f32 %v1018, %v1106
          %1108 = vmatmul.bf16.gmra.mxu0 %v807
          %v1109 = vpop.f32.mrf.mxu0
          %v1110 = vadd.f32 %v1021, %v1109
          %v1111 = vpop.f32.mrf.mxu0
          %v1112 = vadd.f32 %v1023, %v1111
          %1113 = vdwg.mxu0
          %v1114 = vadd.f32 %v616, %v1035
          %v1115 = vadd.f32 %v617, %v1037
          %v1116 = vadd.f32 %v618, %v1040
          %v1117 = vadd.f32 %v619, %v1042
          %v1118 = vadd.f32 %v620, %v1045
          %v1119 = vadd.f32 %v621, %v1047
          %v1120 = vadd.f32 %v622, %v1050
          %v1121 = vadd.f32 %v623, %v1052
          %v1122 = vadd.f32 %v624, %v1055
          %v1123 = vadd.f32 %v625, %v1057
          %v1124 = vadd.f32 %v626, %v1060
          %v1125 = vadd.f32 %v627, %v1062
          %v1126 = vadd.f32 %v628, %v1065
          %v1127 = vadd.f32 %v629, %v1067
          %v1128 = vadd.f32 %v630, %v1070
          %v1129 = vadd.f32 %v631, %v1072
          %v1130 = vadd.f32 %v632, %v1075
          %v1131 = vadd.f32 %v633, %v1077
          %v1132 = vadd.f32 %v634, %v1080
          %v1133 = vadd.f32 %v635, %v1082
          %v1134 = vadd.f32 %v636, %v1085
          %v1135 = vadd.f32 %v637, %v1087
          %v1136 = vadd.f32 %v638, %v1090
          %v1137 = vadd.f32 %v639, %v1092
          %v1138 = vadd.f32 %v640, %v1095
          %v1139 = vadd.f32 %v641, %v1097
          %v1140 = vadd.f32 %v642, %v1100
          %v1141 = vadd.f32 %v643, %v1102
          %v1142 = vadd.f32 %v644, %v1105
          %v1143 = vadd.f32 %v645, %v1107
          %v1144 = vadd.f32 %v646, %v1110
          %v1145 = vadd.f32 %v647, %v1112
          %1146 = vst [vmem:[#allocation2] sm:$0xff] %v1114
          %1147 = vst [vmem:[#allocation2 + $0x8] sm:$0xff] %v1115
          %1148 = vst [vmem:[#allocation2 + $0x10] sm:$0xff] %v1116
          %1149 = vst [vmem:[#allocation2 + $0x18] sm:$0xff] %v1117
          %1150 = vst [vmem:[#allocation2 + $0x20] sm:$0xff] %v1118
          %1151 = vst [vmem:[#allocation2 + $0x28] sm:$0xff] %v1119
          %1152 = vst [vmem:[#allocation2 + $0x30] sm:$0xff] %v1120
          %1153 = vst [vmem:[#allocation2 + $0x38] sm:$0xff] %v1121
          %1154 = vst [vmem:[#allocation2 + $0x40] sm:$0xff] %v1122
          %1155 = vst [vmem:[#allocation2 + $0x48] sm:$0xff] %v1123
          %1156 = vst [vmem:[#allocation2 + $0x50] sm:$0xff] %v1124
          %1157 = vst [vmem:[#allocation2 + $0x58] sm:$0xff] %v1125
          %1158 = vst [vmem:[#allocation2 + $0x60] sm:$0xff] %v1126
          %1159 = vst [vmem:[#allocation2 + $0x68] sm:$0xff] %v1127
          %1160 = vst [vmem:[#allocation2 + $0x70] sm:$0xff] %v1128
          %1161 = vst [vmem:[#allocation2 + $0x78] sm:$0xff] %v1129
          %1162 = vst [vmem:[#allocation2 + $0x80] sm:$0xff] %v1130
          %1163 = vst [vmem:[#allocation2 + $0x88] sm:$0xff] %v1131
          %1164 = vst [vmem:[#allocation2 + $0x90] sm:$0xff] %v1132
          %1165 = vst [vmem:[#allocation2 + $0x98] sm:$0xff] %v1133
          %1166 = vst [vmem:[#allocation2 + $0xa0] sm:$0xff] %v1134
          %1167 = vst [vmem:[#allocation2 + $0xa8] sm:$0xff] %v1135
          %1168 = vst [vmem:[#allocation2 + $0xb0] sm:$0xff] %v1136
          %1169 = vst [vmem:[#allocation2 + $0xb8] sm:$0xff] %v1137
          %1170 = vst [vmem:[#allocation2 + $0xc0] sm:$0xff] %v1138
          %1171 = vst [vmem:[#allocation2 + $0xc8] sm:$0xff] %v1139
          %1172 = vst [vmem:[#allocation2 + $0xd0] sm:$0xff] %v1140
          %1173 = vst [vmem:[#allocation2 + $0xd8] sm:$0xff] %v1141
          %1174 = vst [vmem:[#allocation2 + $0xe0] sm:$0xff] %v1142
          %1175 = vst [vmem:[#allocation2 + $0xe8] sm:$0xff] %v1143
          %1176 = vst [vmem:[#allocation2 + $0xf0] sm:$0xff] %v1144
          %1177 = vst [vmem:[#allocation2 + $0xf8] sm:$0xff] %v1145
        $region100: #{tpu_custom_call.1} parent=71 // pred_fallthru
          _
        %p1178 = pnand %p612, %p544
        %p1179 = pneg %p1178
        // Predicated region
        $region101: #{tpu_custom_call.1} parent=71 // pred_check
          _
        $region102: #{tpu_custom_call.1} parent=71 // pred_check_branch
          %1181 = sbr.rel (%p1178) target = $region104
        $region103: #{tpu_custom_call.1} parent=71 // pred_region
          %v1182 = vlaneseq
          %v1183 = vshrl.u32 %v1182, 7
          %v1184 = vadd.s32 %v1183, 8
          %v1185 = vadd.s32 %v1183, 16
          %v1186 = vadd.s32 %v1183, 24
          %v1187 = vadd.s32 %v1183, 32
          %v1188 = vadd.s32 %v1183, 40
          %v1189 = vadd.s32 %v1183, 48
          %v1190 = vadd.s32 %v1183, 56
          %v1191 = vadd.s32 %v1183, 64
          %v1192 = vadd.s32 %v1183, 72
          %v1193 = vadd.s32 %v1183, 80
          %v1194 = vadd.s32 %v1183, 88
          %v1195 = vadd.s32 %v1183, 96
          %v1196 = vadd.s32 %v1183, 104
          %v1197 = vadd.s32 %v1183, 112
          %v1198 = vadd.s32 %v1183, 120
          %v1199 = vadd.s32 %v1183, 128
          %v1200 = vadd.s32 %v1183, 136
          %v1201 = vadd.s32 %v1183, 144
          %v1202 = vadd.s32 %v1183, 152
          %v1203 = vadd.s32 %v1183, 160
          %v1204 = vadd.s32 %v1183, 168
          %v1205 = vadd.s32 %v1183, 176
          %v1206 = vadd.s32 %v1183, 184
          %v1207 = vadd.s32 %v1183, 192
          %v1208 = vadd.s32 %v1183, 200
          %v1209 = vadd.s32 %v1183, 208
          %v1210 = vadd.s32 %v1183, 216
          %v1211 = vadd.s32 %v1183, 224
          %v1212 = vadd.s32 %v1183, 232
          %v1213 = vadd.s32 %v1183, 240
          %v1214 = vadd.s32 %v1183, 248
          %vm1215 = vcmp.lt.s32.totalorder %v1183, 16
          %vm1216 = vcmp.lt.s32.totalorder %v1184, 16
          %vm1217 = vcmp.lt.s32.totalorder %v1185, 16
          %vm1218 = vcmp.lt.s32.totalorder %v1186, 16
          %vm1219 = vcmp.lt.s32.totalorder %v1187, 16
          %vm1220 = vcmp.lt.s32.totalorder %v1188, 16
          %vm1221 = vcmp.lt.s32.totalorder %v1189, 16
          %vm1222 = vcmp.lt.s32.totalorder %v1190, 16
          %vm1223 = vcmp.lt.s32.totalorder %v1191, 16
          %vm1224 = vcmp.lt.s32.totalorder %v1192, 16
          %vm1225 = vcmp.lt.s32.totalorder %v1193, 16
          %vm1226 = vcmp.lt.s32.totalorder %v1194, 16
          %vm1227 = vcmp.lt.s32.totalorder %v1195, 16
          %vm1228 = vcmp.lt.s32.totalorder %v1196, 16
          %vm1229 = vcmp.lt.s32.totalorder %v1197, 16
          %vm1230 = vcmp.lt.s32.totalorder %v1198, 16
          %vm1231 = vcmp.lt.s32.totalorder %v1199, 16
          %vm1232 = vcmp.lt.s32.totalorder %v1200, 16
          %vm1233 = vcmp.lt.s32.totalorder %v1201, 16
          %vm1234 = vcmp.lt.s32.totalorder %v1202, 16
          %vm1235 = vcmp.lt.s32.totalorder %v1203, 16
          %vm1236 = vcmp.lt.s32.totalorder %v1204, 16
          %vm1237 = vcmp.lt.s32.totalorder %v1205, 16
          %vm1238 = vcmp.lt.s32.totalorder %v1206, 16
          %vm1239 = vcmp.lt.s32.totalorder %v1207, 16
          %vm1240 = vcmp.lt.s32.totalorder %v1208, 16
          %vm1241 = vcmp.lt.s32.totalorder %v1209, 16
          %vm1242 = vcmp.lt.s32.totalorder %v1210, 16
          %vm1243 = vcmp.lt.s32.totalorder %v1211, 16
          %vm1244 = vcmp.lt.s32.totalorder %v1212, 16
          %vm1245 = vcmp.lt.s32.totalorder %v1213, 16
          %vm1246 = vcmp.lt.s32.totalorder %v1214, 16
          %v1247 = vsel %vm1215, 1, 0
          %v1248 = vsel %vm1216, 1, 0
          %v1249 = vsel %vm1217, 1, 0
          %v1250 = vsel %vm1218, 1, 0
          %v1251 = vsel %vm1219, 1, 0
          %v1252 = vsel %vm1220, 1, 0
          %v1253 = vsel %vm1221, 1, 0
          %v1254 = vsel %vm1222, 1, 0
          %v1255 = vsel %vm1223, 1, 0
          %v1256 = vsel %vm1224, 1, 0
          %v1257 = vsel %vm1225, 1, 0
          %v1258 = vsel %vm1226, 1, 0
          %v1259 = vsel %vm1227, 1, 0
          %v1260 = vsel %vm1228, 1, 0
          %v1261 = vsel %vm1229, 1, 0
          %v1262 = vsel %vm1230, 1, 0
          %v1263 = vsel %vm1231, 1, 0
          %v1264 = vsel %vm1232, 1, 0
          %v1265 = vsel %vm1233, 1, 0
          %v1266 = vsel %vm1234, 1, 0
          %v1267 = vsel %vm1235, 1, 0
          %v1268 = vsel %vm1236, 1, 0
          %v1269 = vsel %vm1237, 1, 0
          %v1270 = vsel %vm1238, 1, 0
          %v1271 = vsel %vm1239, 1, 0
          %v1272 = vsel %vm1240, 1, 0
          %v1273 = vsel %vm1241, 1, 0
          %v1274 = vsel %vm1242, 1, 0
          %v1275 = vsel %vm1243, 1, 0
          %v1276 = vsel %vm1244, 1, 0
          %v1277 = vsel %vm1245, 1, 0
          %v1278 = vsel %vm1246, 1, 0
          %v1279 = vcvt.s32.f32 %v1247
          %v1280 = vcvt.s32.f32 %v1248
          %v1281 = vcvt.s32.f32 %v1249
          %v1282 = vcvt.s32.f32 %v1250
          %v1283 = vcvt.s32.f32 %v1251
          %v1284 = vcvt.s32.f32 %v1252
          %v1285 = vcvt.s32.f32 %v1253
          %v1286 = vcvt.s32.f32 %v1254
          %v1287 = vcvt.s32.f32 %v1255
          %v1288 = vcvt.s32.f32 %v1256
          %v1289 = vcvt.s32.f32 %v1257
          %v1290 = vcvt.s32.f32 %v1258
          %v1291 = vcvt.s32.f32 %v1259
          %v1292 = vcvt.s32.f32 %v1260
          %v1293 = vcvt.s32.f32 %v1261
          %v1294 = vcvt.s32.f32 %v1262
          %v1295 = vcvt.s32.f32 %v1263
          %v1296 = vcvt.s32.f32 %v1264
          %v1297 = vcvt.s32.f32 %v1265
          %v1298 = vcvt.s32.f32 %v1266
          %v1299 = vcvt.s32.f32 %v1267
          %v1300 = vcvt.s32.f32 %v1268
          %v1301 = vcvt.s32.f32 %v1269
          %v1302 = vcvt.s32.f32 %v1270
          %v1303 = vcvt.s32.f32 %v1271
          %v1304 = vcvt.s32.f32 %v1272
          %v1305 = vcvt.s32.f32 %v1273
          %v1306 = vcvt.s32.f32 %v1274
          %v1307 = vcvt.s32.f32 %v1275
          %v1308 = vcvt.s32.f32 %v1276
          %v1309 = vcvt.s32.f32 %v1277
          %v1310 = vcvt.s32.f32 %v1278
          %v1311 = vld [vmem:[#allocation2] sm:$0xff]
          %v1312 = vld [vmem:[#allocation2 + $0x8] sm:$0xff]
          %v1313 = vld [vmem:[#allocation2 + $0x10] sm:$0xff]
          %v1314 = vld [vmem:[#allocation2 + $0x18] sm:$0xff]
          %v1315 = vld [vmem:[#allocation2 + $0x20] sm:$0xff]
          %v1316 = vld [vmem:[#allocation2 + $0x28] sm:$0xff]
          %v1317 = vld [vmem:[#allocation2 + $0x30] sm:$0xff]
          %v1318 = vld [vmem:[#allocation2 + $0x38] sm:$0xff]
          %v1319 = vld [vmem:[#allocation2 + $0x40] sm:$0xff]
          %v1320 = vld [vmem:[#allocation2 + $0x48] sm:$0xff]
          %v1321 = vld [vmem:[#allocation2 + $0x50] sm:$0xff]
          %v1322 = vld [vmem:[#allocation2 + $0x58] sm:$0xff]
          %v1323 = vld [vmem:[#allocation2 + $0x60] sm:$0xff]
          %v1324 = vld [vmem:[#allocation2 + $0x68] sm:$0xff]
          %v1325 = vld [vmem:[#allocation2 + $0x70] sm:$0xff]
          %v1326 = vld [vmem:[#allocation2 + $0x78] sm:$0xff]
          %v1327 = vld [vmem:[#allocation2 + $0x80] sm:$0xff]
          %v1328 = vld [vmem:[#allocation2 + $0x88] sm:$0xff]
          %v1329 = vld [vmem:[#allocation2 + $0x90] sm:$0xff]
          %v1330 = vld [vmem:[#allocation2 + $0x98] sm:$0xff]
          %v1331 = vld [vmem:[#allocation2 + $0xa0] sm:$0xff]
          %v1332 = vld [vmem:[#allocation2 + $0xa8] sm:$0xff]
          %v1333 = vld [vmem:[#allocation2 + $0xb0] sm:$0xff]
          %v1334 = vld [vmem:[#allocation2 + $0xb8] sm:$0xff]
          %v1335 = vld [vmem:[#allocation2 + $0xc0] sm:$0xff]
          %v1336 = vld [vmem:[#allocation2 + $0xc8] sm:$0xff]
          %v1337 = vld [vmem:[#allocation2 + $0xd0] sm:$0xff]
          %v1338 = vld [vmem:[#allocation2 + $0xd8] sm:$0xff]
          %v1339 = vld [vmem:[#allocation2 + $0xe0] sm:$0xff]
          %v1340 = vld [vmem:[#allocation2 + $0xe8] sm:$0xff]
          %v1341 = vld [vmem:[#allocation2 + $0xf0] sm:$0xff]
          %v1342 = vld [vmem:[#allocation2 + $0xf8] sm:$0xff]
          %v1343 = vld [vmem:[%s2] sm:$0x1]
          %v1344 = vld [vmem:[%s3] sm:$0x1]
          %v1345 = vmul.f32 %v1311, %v1279
          %v1346 = vmul.f32 %v1312, %v1280
          %v1347 = vmul.f32 %v1313, %v1281
          %v1348 = vmul.f32 %v1314, %v1282
          %v1349 = vmul.f32 %v1315, %v1283
          %v1350 = vmul.f32 %v1316, %v1284
          %v1351 = vmul.f32 %v1317, %v1285
          %v1352 = vmul.f32 %v1318, %v1286
          %v1353 = vmul.f32 %v1319, %v1287
          %v1354 = vmul.f32 %v1320, %v1288
          %v1355 = vmul.f32 %v1321, %v1289
          %v1356 = vmul.f32 %v1322, %v1290
          %v1357 = vmul.f32 %v1323, %v1291
          %v1358 = vmul.f32 %v1324, %v1292
          %v1359 = vmul.f32 %v1325, %v1293
          %v1360 = vmul.f32 %v1326, %v1294
          %v1361 = vmul.f32 %v1327, %v1295
          %v1362 = vmul.f32 %v1328, %v1296
          %v1363 = vmul.f32 %v1329, %v1297
          %v1364 = vmul.f32 %v1330, %v1298
          %v1365 = vmul.f32 %v1331, %v1299
          %v1366 = vmul.f32 %v1332, %v1300
          %v1367 = vmul.f32 %v1333, %v1301
          %v1368 = vmul.f32 %v1334, %v1302
          %v1369 = vmul.f32 %v1335, %v1303
          %v1370 = vmul.f32 %v1336, %v1304
          %v1371 = vmul.f32 %v1337, %v1305
          %v1372 = vmul.f32 %v1338, %v1306
          %v1373 = vmul.f32 %v1339, %v1307
          %v1374 = vmul.f32 %v1340, %v1308
          %v1375 = vmul.f32 %v1341, %v1309
          %v1376 = vmul.f32 %v1342, %v1310
          %v1377 = vadd.f32 %v1345, %v1346
          %v1378 = vadd.f32 %v1377, %v1347
          %v1379 = vadd.f32 %v1378, %v1348
          %v1380 = vadd.f32 %v1379, %v1349
          %v1381 = vadd.f32 %v1380, %v1350
          %v1382 = vadd.f32 %v1381, %v1351
          %v1383 = vadd.f32 %v1382, %v1352
          %v1384 = vadd.f32 %v1383, %v1353
          %v1385 = vadd.f32 %v1384, %v1354
          %v1386 = vadd.f32 %v1385, %v1355
          %v1387 = vadd.f32 %v1386, %v1356
          %v1388 = vadd.f32 %v1387, %v1357
          %v1389 = vadd.f32 %v1388, %v1358
          %v1390 = vadd.f32 %v1389, %v1359
          %v1391 = vadd.f32 %v1390, %v1360
          %v1392 = vadd.f32 %v1391, %v1361
          %v1393 = vadd.f32 %v1392, %v1362
          %v1394 = vadd.f32 %v1393, %v1363
          %v1395 = vadd.f32 %v1394, %v1364
          %v1396 = vadd.f32 %v1395, %v1365
          %v1397 = vadd.f32 %v1396, %v1366
          %v1398 = vadd.f32 %v1397, %v1367
          %v1399 = vadd.f32 %v1398, %v1368
          %v1400 = vadd.f32 %v1399, %v1369
          %v1401 = vadd.f32 %v1400, %v1370
          %v1402 = vadd.f32 %v1401, %v1371
          %v1403 = vadd.f32 %v1402, %v1372
          %v1404 = vadd.f32 %v1403, %v1373
          %v1405 = vadd.f32 %v1404, %v1374
          %v1406 = vadd.f32 %v1405, %v1375
          %v1407 = vadd.f32 %v1406, %v1376
          %v1408 = vrot.slane %v1407, 4
          %v1409 = vadd.f32 %v1407, %v1408
          %v1410 = vrot.slane %v1409, 2
          %v1411 = vadd.f32 %v1409, %v1410
          %v1412 = vrot.slane %v1411, 1
          %v1413 = vadd.f32 %v1411, %v1412
          %v1414 = vmul.f32 %v1345, %v1311
          %v1415 = vmul.f32 %v1346, %v1312
          %v1416 = vmul.f32 %v1347, %v1313
          %v1417 = vmul.f32 %v1348, %v1314
          %v1418 = vmul.f32 %v1349, %v1315
          %v1419 = vmul.f32 %v1350, %v1316
          %v1420 = vmul.f32 %v1351, %v1317
          %v1421 = vmul.f32 %v1352, %v1318
          %v1422 = vmul.f32 %v1353, %v1319
          %v1423 = vmul.f32 %v1354, %v1320
          %v1424 = vmul.f32 %v1355, %v1321
          %v1425 = vmul.f32 %v1356, %v1322
          %v1426 = vmul.f32 %v1357, %v1323
          %v1427 = vmul.f32 %v1358, %v1324
          %v1428 = vmul.f32 %v1359, %v1325
          %v1429 = vmul.f32 %v1360, %v1326
          %v1430 = vmul.f32 %v1361, %v1327
          %v1431 = vmul.f32 %v1362, %v1328
          %v1432 = vmul.f32 %v1363, %v1329
          %v1433 = vmul.f32 %v1364, %v1330
          %v1434 = vmul.f32 %v1365, %v1331
          %v1435 = vmul.f32 %v1366, %v1332
          %v1436 = vmul.f32 %v1367, %v1333
          %v1437 = vmul.f32 %v1368, %v1334
          %v1438 = vmul.f32 %v1369, %v1335
          %v1439 = vmul.f32 %v1370, %v1336
          %v1440 = vmul.f32 %v1371, %v1337
          %v1441 = vmul.f32 %v1372, %v1338
          %v1442 = vmul.f32 %v1373, %v1339
          %v1443 = vmul.f32 %v1374, %v1340
          %v1444 = vmul.f32 %v1375, %v1341
          %v1445 = vmul.f32 %v1376, %v1342
          %v1446 = vadd.f32 %v1414, %v1415
          %v1447 = vadd.f32 %v1446, %v1416
          %v1448 = vadd.f32 %v1447, %v1417
          %v1449 = vadd.f32 %v1448, %v1418
          %v1450 = vadd.f32 %v1449, %v1419
          %v1451 = vadd.f32 %v1450, %v1420
          %v1452 = vadd.f32 %v1451, %v1421
          %v1453 = vadd.f32 %v1452, %v1422
          %v1454 = vadd.f32 %v1453, %v1423
          %v1455 = vadd.f32 %v1454, %v1424
          %v1456 = vadd.f32 %v1455, %v1425
          %v1457 = vadd.f32 %v1456, %v1426
          %v1458 = vadd.f32 %v1457, %v1427
          %v1459 = vadd.f32 %v1458, %v1428
          %v1460 = vadd.f32 %v1459, %v1429
          %v1461 = vadd.f32 %v1460, %v1430
          %v1462 = vadd.f32 %v1461, %v1431
          %v1463 = vadd.f32 %v1462, %v1432
          %v1464 = vadd.f32 %v1463, %v1433
          %v1465 = vadd.f32 %v1464, %v1434
          %v1466 = vadd.f32 %v1465, %v1435
          %v1467 = vadd.f32 %v1466, %v1436
          %v1468 = vadd.f32 %v1467, %v1437
          %v1469 = vadd.f32 %v1468, %v1438
          %v1470 = vadd.f32 %v1469, %v1439
          %v1471 = vadd.f32 %v1470, %v1440
          %v1472 = vadd.f32 %v1471, %v1441
          %v1473 = vadd.f32 %v1472, %v1442
          %v1474 = vadd.f32 %v1473, %v1443
          %v1475 = vadd.f32 %v1474, %v1444
          %v1476 = vadd.f32 %v1475, %v1445
          %v1477 = vrot.slane %v1476, 4
          %v1478 = vadd.f32 %v1476, %v1477
          %v1479 = vrot.slane %v1478, 2
          %v1480 = vadd.f32 %v1478, %v1479
          %v1481 = vrot.slane %v1480, 1
          %v1482 = vadd.f32 %v1480, %v1481
          %v1483 = vmul.f32 %v1413, 0.0625
          %v1484 = vmul.f32 %v1482, 0.0625
          %v1485 = vmul.f32 %v1483, %v1483
          %v1486 = vsub.f32 %v1484, %v1485
          %v1487 = vmax.f32 %v1486, 0.0
          %v1488 = vsub.f32 %v1311, %v1483
          %v1489 = vsub.f32 %v1312, %v1483
          %v1490 = vsub.f32 %v1313, %v1483
          %v1491 = vsub.f32 %v1314, %v1483
          %v1492 = vsub.f32 %v1315, %v1483
          %v1493 = vsub.f32 %v1316, %v1483
          %v1494 = vsub.f32 %v1317, %v1483
          %v1495 = vsub.f32 %v1318, %v1483
          %v1496 = vsub.f32 %v1319, %v1483
          %v1497 = vsub.f32 %v1320, %v1483
          %v1498 = vsub.f32 %v1321, %v1483
          %v1499 = vsub.f32 %v1322, %v1483
          %v1500 = vsub.f32 %v1323, %v1483
          %v1501 = vsub.f32 %v1324, %v1483
          %v1502 = vsub.f32 %v1325, %v1483
          %v1503 = vsub.f32 %v1326, %v1483
          %v1504 = vsub.f32 %v1327, %v1483
          %v1505 = vsub.f32 %v1328, %v1483
          %v1506 = vsub.f32 %v1329, %v1483
          %v1507 = vsub.f32 %v1330, %v1483
          %v1508 = vsub.f32 %v1331, %v1483
          %v1509 = vsub.f32 %v1332, %v1483
          %v1510 = vsub.f32 %v1333, %v1483
          %v1511 = vsub.f32 %v1334, %v1483
          %v1512 = vsub.f32 %v1335, %v1483
          %v1513 = vsub.f32 %v1336, %v1483
          %v1514 = vsub.f32 %v1337, %v1483
          %v1515 = vsub.f32 %v1338, %v1483
          %v1516 = vsub.f32 %v1339, %v1483
          %v1517 = vsub.f32 %v1340, %v1483
          %v1518 = vsub.f32 %v1341, %v1483
          %v1519 = vsub.f32 %v1342, %v1483
          %v1520 = vadd.f32 %v1487, 1e-05
          %v1521 = vrsqrt.pop %v1520
          %v1522 = vmul.f32 %v1521, %v1520
          %v1523 = vmul.f32 %v1522, %v1521
          %v1524 = vmul.f32 0.5, %v1523
          %v1525 = vsub.f32 1.5, %v1524
          %v1526 = vmul.f32 %v1521, %v1525
          %vm1527 = vweird.f32 %v1520
          %vm1528 = vweird.f32 %v1521
          %vm1529 = vmor %vm1527, %vm1528
          %v1530 = vsel %vm1529, %v1521, %v1526
          %v1531 = vmul.f32 %v1488, %v1530
          %v1532 = vmul.f32 %v1489, %v1530
          %v1533 = vmul.f32 %v1490, %v1530
          %v1534 = vmul.f32 %v1491, %v1530
          %v1535 = vmul.f32 %v1492, %v1530
          %v1536 = vmul.f32 %v1493, %v1530
          %v1537 = vmul.f32 %v1494, %v1530
          %v1538 = vmul.f32 %v1495, %v1530
          %v1539 = vmul.f32 %v1496, %v1530
          %v1540 = vmul.f32 %v1497, %v1530
          %v1541 = vmul.f32 %v1498, %v1530
          %v1542 = vmul.f32 %v1499, %v1530
          %v1543 = vmul.f32 %v1500, %v1530
          %v1544 = vmul.f32 %v1501, %v1530
          %v1545 = vmul.f32 %v1502, %v1530
          %v1546 = vmul.f32 %v1503, %v1530
          %v1547 = vmul.f32 %v1504, %v1530
          %v1548 = vmul.f32 %v1505, %v1530
          %v1549 = vmul.f32 %v1506, %v1530
          %v1550 = vmul.f32 %v1507, %v1530
          %v1551 = vmul.f32 %v1508, %v1530
          %v1552 = vmul.f32 %v1509, %v1530
          %v1553 = vmul.f32 %v1510, %v1530
          %v1554 = vmul.f32 %v1511, %v1530
          %v1555 = vmul.f32 %v1512, %v1530
          %v1556 = vmul.f32 %v1513, %v1530
          %v1557 = vmul.f32 %v1514, %v1530
          %v1558 = vmul.f32 %v1515, %v1530
          %v1559 = vmul.f32 %v1516, %v1530
          %v1560 = vmul.f32 %v1517, %v1530
          %v1561 = vmul.f32 %v1518, %v1530
          %v1562 = vmul.f32 %v1519, %v1530
          %v1564 = vperm.slane %v1343, 0
          %v1566 = vmul.f32 %v1531, %v1564
          %v1567 = vmul.f32 %v1532, %v1564
          %v1568 = vmul.f32 %v1533, %v1564
          %v1569 = vmul.f32 %v1534, %v1564
          %v1570 = vmul.f32 %v1535, %v1564
          %v1571 = vmul.f32 %v1536, %v1564
          %v1572 = vmul.f32 %v1537, %v1564
          %v1573 = vmul.f32 %v1538, %v1564
          %v1574 = vmul.f32 %v1539, %v1564
          %v1575 = vmul.f32 %v1540, %v1564
          %v1576 = vmul.f32 %v1541, %v1564
          %v1577 = vmul.f32 %v1542, %v1564
          %v1578 = vmul.f32 %v1543, %v1564
          %v1579 = vmul.f32 %v1544, %v1564
          %v1580 = vmul.f32 %v1545, %v1564
          %v1581 = vmul.f32 %v1546, %v1564
          %v1582 = vmul.f32 %v1547, %v1564
          %v1583 = vmul.f32 %v1548, %v1564
          %v1584 = vmul.f32 %v1549, %v1564
          %v1585 = vmul.f32 %v1550, %v1564
          %v1586 = vmul.f32 %v1551, %v1564
          %v1587 = vmul.f32 %v1552, %v1564
          %v1588 = vmul.f32 %v1553, %v1564
          %v1589 = vmul.f32 %v1554, %v1564
          %v1590 = vmul.f32 %v1555, %v1564
          %v1591 = vmul.f32 %v1556, %v1564
          %v1592 = vmul.f32 %v1557, %v1564
          %v1593 = vmul.f32 %v1558, %v1564
          %v1594 = vmul.f32 %v1559, %v1564
          %v1595 = vmul.f32 %v1560, %v1564
          %v1596 = vmul.f32 %v1561, %v1564
          %v1597 = vmul.f32 %v1562, %v1564
          %v1599 = vperm.slane %v1344, 0
          %v1601 = vadd.f32 %v1566, %v1599
          %v1602 = vadd.f32 %v1567, %v1599
          %v1603 = vadd.f32 %v1568, %v1599
          %v1604 = vadd.f32 %v1569, %v1599
          %v1605 = vadd.f32 %v1570, %v1599
          %v1606 = vadd.f32 %v1571, %v1599
          %v1607 = vadd.f32 %v1572, %v1599
          %v1608 = vadd.f32 %v1573, %v1599
          %v1609 = vadd.f32 %v1574, %v1599
          %v1610 = vadd.f32 %v1575, %v1599
          %v1611 = vadd.f32 %v1576, %v1599
          %v1612 = vadd.f32 %v1577, %v1599
          %v1613 = vadd.f32 %v1578, %v1599
          %v1614 = vadd.f32 %v1579, %v1599
          %v1615 = vadd.f32 %v1580, %v1599
          %v1616 = vadd.f32 %v1581, %v1599
          %v1617 = vadd.f32 %v1582, %v1599
          %v1618 = vadd.f32 %v1583, %v1599
          %v1619 = vadd.f32 %v1584, %v1599
          %v1620 = vadd.f32 %v1585, %v1599
          %v1621 = vadd.f32 %v1586, %v1599
          %v1622 = vadd.f32 %v1587, %v1599
          %v1623 = vadd.f32 %v1588, %v1599
          %v1624 = vadd.f32 %v1589, %v1599
          %v1625 = vadd.f32 %v1590, %v1599
          %v1626 = vadd.f32 %v1591, %v1599
          %v1627 = vadd.f32 %v1592, %v1599
          %v1628 = vadd.f32 %v1593, %v1599
          %v1629 = vadd.f32 %v1594, %v1599
          %v1630 = vadd.f32 %v1595, %v1599
          %v1631 = vadd.f32 %v1596, %v1599
          %v1632 = vadd.f32 %v1597, %v1599
          %v1633 = vmax.f32 %v1601, 0.0
          %v1634 = vmax.f32 %v1602, 0.0
          %v1635 = vmax.f32 %v1603, 0.0
          %v1636 = vmax.f32 %v1604, 0.0
          %v1637 = vmax.f32 %v1605, 0.0
          %v1638 = vmax.f32 %v1606, 0.0
          %v1639 = vmax.f32 %v1607, 0.0
          %v1640 = vmax.f32 %v1608, 0.0
          %v1641 = vmax.f32 %v1609, 0.0
          %v1642 = vmax.f32 %v1610, 0.0
          %v1643 = vmax.f32 %v1611, 0.0
          %v1644 = vmax.f32 %v1612, 0.0
          %v1645 = vmax.f32 %v1613, 0.0
          %v1646 = vmax.f32 %v1614, 0.0
          %v1647 = vmax.f32 %v1615, 0.0
          %v1648 = vmax.f32 %v1616, 0.0
          %v1649 = vmax.f32 %v1617, 0.0
          %v1650 = vmax.f32 %v1618, 0.0
          %v1651 = vmax.f32 %v1619, 0.0
          %v1652 = vmax.f32 %v1620, 0.0
          %v1653 = vmax.f32 %v1621, 0.0
          %v1654 = vmax.f32 %v1622, 0.0
          %v1655 = vmax.f32 %v1623, 0.0
          %v1656 = vmax.f32 %v1624, 0.0
          %v1657 = vmax.f32 %v1625, 0.0
          %v1658 = vmax.f32 %v1626, 0.0
          %v1659 = vmax.f32 %v1627, 0.0
          %v1660 = vmax.f32 %v1628, 0.0
          %v1661 = vmax.f32 %v1629, 0.0
          %v1662 = vmax.f32 %v1630, 0.0
          %v1663 = vmax.f32 %v1631, 0.0
          %v1664 = vmax.f32 %v1632, 0.0
          %v1665 = vpack.c.bf16 %v1634, %v1633
          %v1666 = vpack.c.bf16 %v1636, %v1635
          %v1667 = vpack.c.bf16 %v1638, %v1637
          %v1668 = vpack.c.bf16 %v1640, %v1639
          %v1669 = vpack.c.bf16 %v1642, %v1641
          %v1670 = vpack.c.bf16 %v1644, %v1643
          %v1671 = vpack.c.bf16 %v1646, %v1645
          %v1672 = vpack.c.bf16 %v1648, %v1647
          %v1673 = vpack.c.bf16 %v1650, %v1649
          %v1674 = vpack.c.bf16 %v1652, %v1651
          %v1675 = vpack.c.bf16 %v1654, %v1653
          %v1676 = vpack.c.bf16 %v1656, %v1655
          %v1677 = vpack.c.bf16 %v1658, %v1657
          %v1678 = vpack.c.bf16 %v1660, %v1659
          %v1679 = vpack.c.bf16 %v1662, %v1661
          %v1680 = vpack.c.bf16 %v1664, %v1663
          %v1681 = vld [vmem:[#allocation9] sm:$0xf]
          %v1682 = vld [vmem:[#allocation9 + $0x4] sm:$0xf]
          %v1683 = vld [vmem:[#allocation9 + $0x8] sm:$0xf]
          %v1684 = vld [vmem:[#allocation9 + $0xc] sm:$0xf]
          %v1685 = vld [vmem:[#allocation9 + $0x10] sm:$0xf]
          %v1686 = vld [vmem:[#allocation9 + $0x14] sm:$0xf]
          %v1687 = vld [vmem:[#allocation9 + $0x18] sm:$0xf]
          %v1688 = vld [vmem:[#allocation9 + $0x1c] sm:$0xf]
          %v1689 = vld [vmem:[#allocation9 + $0x20] sm:$0xf]
          %v1690 = vld [vmem:[#allocation9 + $0x24] sm:$0xf]
          %v1691 = vld [vmem:[#allocation9 + $0x28] sm:$0xf]
          %v1692 = vld [vmem:[#allocation9 + $0x2c] sm:$0xf]
          %v1693 = vld [vmem:[#allocation9 + $0x30] sm:$0xf]
          %v1694 = vld [vmem:[#allocation9 + $0x34] sm:$0xf]
          %v1695 = vld [vmem:[#allocation9 + $0x38] sm:$0xf]
          %v1696 = vld [vmem:[#allocation9 + $0x3c] sm:$0xf]
          %v1713 = vunpack.c.l.b16 %v1681
          %v1714 = vunpack.c.l.b16 %v1682
          %v1715 = vunpack.c.l.b16 %v1683
          %v1716 = vunpack.c.l.b16 %v1684
          %v1717 = vunpack.c.l.b16 %v1685
          %v1718 = vunpack.c.l.b16 %v1686
          %v1719 = vunpack.c.l.b16 %v1687
          %v1720 = vunpack.c.l.b16 %v1688
          %v1721 = vunpack.c.l.b16 %v1689
          %v1722 = vunpack.c.l.b16 %v1690
          %v1723 = vunpack.c.l.b16 %v1691
          %v1724 = vunpack.c.l.b16 %v1692
          %v1725 = vunpack.c.l.b16 %v1693
          %v1726 = vunpack.c.l.b16 %v1694
          %v1727 = vunpack.c.l.b16 %v1695
          %v1728 = vunpack.c.l.b16 %v1696
          %v1729 = vpack.c.b16 %v1714, %v1713
          %v1730 = vpack.c.b16 %v1716, %v1715
          %v1731 = vpack.c.b16 %v1718, %v1717
          %v1732 = vpack.c.b16 %v1720, %v1719
          %v1733 = vpack.c.b16 %v1722, %v1721
          %v1734 = vpack.c.b16 %v1724, %v1723
          %v1735 = vpack.c.b16 %v1726, %v1725
          %v1736 = vpack.c.b16 %v1728, %v1727
          %1745 = vmatpush.bf16.msra.mxu0 %v1736
          %1746 = vmatpush.bf16.msra.mxu0 %v1735
          %1747 = vmatpush.bf16.msra.mxu0 %v1734
          %1748 = vmatpush.bf16.msra.mxu0 %v1733
          %1749 = vmatpush.bf16.msra.mxu0 %v1732
          %1750 = vmatpush.bf16.msra.mxu0 %v1731
          %1751 = vmatpush.bf16.msra.mxu0 %v1730
          %1752 = vmatpush.bf16.msra.mxu0 %v1729
          %1753 = vmatmul.bf16.gmra.mxu0 %v1665
          %v1754 = vpop.f32.mrf.mxu0
          %v1755 = vadd.f32 0.0, %v1754
          %v1756 = vpop.f32.mrf.mxu0
          %v1757 = vadd.f32 0.0, %v1756
          %1758 = vmatmul.bf16.gmra.mxu0 %v1666
          %v1759 = vpop.f32.mrf.mxu0
          %v1760 = vadd.f32 0.0, %v1759
          %v1761 = vpop.f32.mrf.mxu0
          %v1762 = vadd.f32 0.0, %v1761
          %1763 = vmatmul.bf16.gmra.mxu0 %v1667
          %v1764 = vpop.f32.mrf.mxu0
          %v1765 = vadd.f32 0.0, %v1764
          %v1766 = vpop.f32.mrf.mxu0
          %v1767 = vadd.f32 0.0, %v1766
          %1768 = vmatmul.bf16.gmra.mxu0 %v1668
          %v1769 = vpop.f32.mrf.mxu0
          %v1770 = vadd.f32 0.0, %v1769
          %v1771 = vpop.f32.mrf.mxu0
          %v1772 = vadd.f32 0.0, %v1771
          %1773 = vmatmul.bf16.gmra.mxu0 %v1669
          %v1774 = vpop.f32.mrf.mxu0
          %v1775 = vadd.f32 0.0, %v1774
          %v1776 = vpop.f32.mrf.mxu0
          %v1777 = vadd.f32 0.0, %v1776
          %1778 = vmatmul.bf16.gmra.mxu0 %v1670
          %v1779 = vpop.f32.mrf.mxu0
          %v1780 = vadd.f32 0.0, %v1779
          %v1781 = vpop.f32.mrf.mxu0
          %v1782 = vadd.f32 0.0, %v1781
          %1783 = vmatmul.bf16.gmra.mxu0 %v1671
          %v1784 = vpop.f32.mrf.mxu0
          %v1785 = vadd.f32 0.0, %v1784
          %v1786 = vpop.f32.mrf.mxu0
          %v1787 = vadd.f32 0.0, %v1786
          %1788 = vmatmul.bf16.gmra.mxu0 %v1672
          %v1789 = vpop.f32.mrf.mxu0
          %v1790 = vadd.f32 0.0, %v1789
          %v1791 = vpop.f32.mrf.mxu0
          %v1792 = vadd.f32 0.0, %v1791
          %1793 = vmatmul.bf16.gmra.mxu0 %v1673
          %v1794 = vpop.f32.mrf.mxu0
          %v1795 = vadd.f32 0.0, %v1794
          %v1796 = vpop.f32.mrf.mxu0
          %v1797 = vadd.f32 0.0, %v1796
          %1798 = vmatmul.bf16.gmra.mxu0 %v1674
          %v1799 = vpop.f32.mrf.mxu0
          %v1800 = vadd.f32 0.0, %v1799
          %v1801 = vpop.f32.mrf.mxu0
          %v1802 = vadd.f32 0.0, %v1801
          %1803 = vmatmul.bf16.gmra.mxu0 %v1675
          %v1804 = vpop.f32.mrf.mxu0
          %v1805 = vadd.f32 0.0, %v1804
          %v1806 = vpop.f32.mrf.mxu0
          %v1807 = vadd.f32 0.0, %v1806
          %1808 = vmatmul.bf16.gmra.mxu0 %v1676
          %v1809 = vpop.f32.mrf.mxu0
          %v1810 = vadd.f32 0.0, %v1809
          %v1811 = vpop.f32.mrf.mxu0
          %v1812 = vadd.f32 0.0, %v1811
          %1813 = vmatmul.bf16.gmra.mxu0 %v1677
          %v1814 = vpop.f32.mrf.mxu0
          %v1815 = vadd.f32 0.0, %v1814
          %v1816 = vpop.f32.mrf.mxu0
          %v1817 = vadd.f32 0.0, %v1816
          %1818 = vmatmul.bf16.gmra.mxu0 %v1678
          %v1819 = vpop.f32.mrf.mxu0
          %v1820 = vadd.f32 0.0, %v1819
          %v1821 = vpop.f32.mrf.mxu0
          %v1822 = vadd.f32 0.0, %v1821
          %1823 = vmatmul.bf16.gmra.mxu0 %v1679
          %v1824 = vpop.f32.mrf.mxu0
          %v1825 = vadd.f32 0.0, %v1824
          %v1826 = vpop.f32.mrf.mxu0
          %v1827 = vadd.f32 0.0, %v1826
          %1828 = vmatmul.bf16.gmra.mxu0 %v1680
          %v1829 = vpop.f32.mrf.mxu0
          %v1830 = vadd.f32 0.0, %v1829
          %v1831 = vpop.f32.mrf.mxu0
          %v1832 = vadd.f32 0.0, %v1831
          %1833 = vdwg.mxu0
          %v1834 = vpack.c.bf16 %v1755, %v1755
          %v1835 = vpack.c.bf16 %v1757, %v1757
          %v1836 = vpack.c.bf16 %v1760, %v1760
          %v1837 = vpack.c.bf16 %v1762, %v1762
          %v1838 = vpack.c.bf16 %v1765, %v1765
          %v1839 = vpack.c.bf16 %v1767, %v1767
          %v1840 = vpack.c.bf16 %v1770, %v1770
          %v1841 = vpack.c.bf16 %v1772, %v1772
          %v1842 = vpack.c.bf16 %v1775, %v1775
          %v1843 = vpack.c.bf16 %v1777, %v1777
          %v1844 = vpack.c.bf16 %v1780, %v1780
          %v1845 = vpack.c.bf16 %v1782, %v1782
          %v1846 = vpack.c.bf16 %v1785, %v1785
          %v1847 = vpack.c.bf16 %v1787, %v1787
          %v1848 = vpack.c.bf16 %v1790, %v1790
          %v1849 = vpack.c.bf16 %v1792, %v1792
          %v1850 = vpack.c.bf16 %v1795, %v1795
          %v1851 = vpack.c.bf16 %v1797, %v1797
          %v1852 = vpack.c.bf16 %v1800, %v1800
          %v1853 = vpack.c.bf16 %v1802, %v1802
          %v1854 = vpack.c.bf16 %v1805, %v1805
          %v1855 = vpack.c.bf16 %v1807, %v1807
          %v1856 = vpack.c.bf16 %v1810, %v1810
          %v1857 = vpack.c.bf16 %v1812, %v1812
          %v1858 = vpack.c.bf16 %v1815, %v1815
          %v1859 = vpack.c.bf16 %v1817, %v1817
          %v1860 = vpack.c.bf16 %v1820, %v1820
          %v1861 = vpack.c.bf16 %v1822, %v1822
          %v1862 = vpack.c.bf16 %v1825, %v1825
          %v1863 = vpack.c.bf16 %v1827, %v1827
          %v1864 = vpack.c.bf16 %v1830, %v1830
          %v1865 = vpack.c.bf16 %v1832, %v1832
          %1866 = vst [vmem:[#allocation3] sm:$0xf] %v1834
          %1867 = vst [vmem:[#allocation3 + $0x4] sm:$0xf] %v1835
          %1868 = vst [vmem:[#allocation3 + $0x8] sm:$0xf] %v1836
          %1869 = vst [vmem:[#allocation3 + $0xc] sm:$0xf] %v1837
          %1870 = vst [vmem:[#allocation3 + $0x10] sm:$0xf] %v1838
          %1871 = vst [vmem:[#allocation3 + $0x14] sm:$0xf] %v1839
          %1872 = vst [vmem:[#allocation3 + $0x18] sm:$0xf] %v1840
          %1873 = vst [vmem:[#allocation3 + $0x1c] sm:$0xf] %v1841
          %1874 = vst [vmem:[#allocation3 + $0x20] sm:$0xf] %v1842
          %1875 = vst [vmem:[#allocation3 + $0x24] sm:$0xf] %v1843
          %1876 = vst [vmem:[#allocation3 + $0x28] sm:$0xf] %v1844
          %1877 = vst [vmem:[#allocation3 + $0x2c] sm:$0xf] %v1845
          %1878 = vst [vmem:[#allocation3 + $0x30] sm:$0xf] %v1846
          %1879 = vst [vmem:[#allocation3 + $0x34] sm:$0xf] %v1847
          %1880 = vst [vmem:[#allocation3 + $0x38] sm:$0xf] %v1848
          %1881 = vst [vmem:[#allocation3 + $0x3c] sm:$0xf] %v1849
          %1882 = vst [vmem:[#allocation3 + $0x40] sm:$0xf] %v1850
          %1883 = vst [vmem:[#allocation3 + $0x44] sm:$0xf] %v1851
          %1884 = vst [vmem:[#allocation3 + $0x48] sm:$0xf] %v1852
          %1885 = vst [vmem:[#allocation3 + $0x4c] sm:$0xf] %v1853
          %1886 = vst [vmem:[#allocation3 + $0x50] sm:$0xf] %v1854
          %1887 = vst [vmem:[#allocation3 + $0x54] sm:$0xf] %v1855
          %1888 = vst [vmem:[#allocation3 + $0x58] sm:$0xf] %v1856
          %1889 = vst [vmem:[#allocation3 + $0x5c] sm:$0xf] %v1857
          %1890 = vst [vmem:[#allocation3 + $0x60] sm:$0xf] %v1858
          %1891 = vst [vmem:[#allocation3 + $0x64] sm:$0xf] %v1859
          %1892 = vst [vmem:[#allocation3 + $0x68] sm:$0xf] %v1860
          %1893 = vst [vmem:[#allocation3 + $0x6c] sm:$0xf] %v1861
          %1894 = vst [vmem:[#allocation3 + $0x70] sm:$0xf] %v1862
          %1895 = vst [vmem:[#allocation3 + $0x74] sm:$0xf] %v1863
          %1896 = vst [vmem:[#allocation3 + $0x78] sm:$0xf] %v1864
          %1897 = vst [vmem:[#allocation3 + $0x7c] sm:$0xf] %v1865
        $region104: #{tpu_custom_call.1} parent=71 // pred_fallthru
          _
        %p1898 = scmp.eq.s32.totalorder %s34, 1
        // Predicated region
        $region105: #{tpu_custom_call.1} parent=71 // pred_check
          %p1899 = pneg %p1898
        $region106: #{tpu_custom_call.1} parent=71 // pred_check_branch
          %1901 = sbr.rel (%p1899) target = $region108
        $region107: #{tpu_custom_call.1} parent=71 // pred_region
          %s1902 = smul.u32 %s35, 256
          %v1903 = vld [vmem:[#allocation2] sm:$0xff]
          %v1904 = vld [vmem:[#allocation2 + $0x8] sm:$0xff]
          %v1905 = vld [vmem:[#allocation2 + $0x10] sm:$0xff]
          %v1906 = vld [vmem:[#allocation2 + $0x18] sm:$0xff]
          %v1907 = vld [vmem:[#allocation2 + $0x20] sm:$0xff]
          %v1908 = vld [vmem:[#allocation2 + $0x28] sm:$0xff]
          %v1909 = vld [vmem:[#allocation2 + $0x30] sm:$0xff]
          %v1910 = vld [vmem:[#allocation2 + $0x38] sm:$0xff]
          %v1911 = vld [vmem:[#allocation2 + $0x40] sm:$0xff]
          %v1912 = vld [vmem:[#allocation2 + $0x48] sm:$0xff]
          %v1913 = vld [vmem:[#allocation2 + $0x50] sm:$0xff]
          %v1914 = vld [vmem:[#allocation2 + $0x58] sm:$0xff]
          %v1915 = vld [vmem:[#allocation2 + $0x60] sm:$0xff]
          %v1916 = vld [vmem:[#allocation2 + $0x68] sm:$0xff]
          %v1917 = vld [vmem:[#allocation2 + $0x70] sm:$0xff]
          %v1918 = vld [vmem:[#allocation2 + $0x78] sm:$0xff]
          %v1919 = vld [vmem:[#allocation2 + $0x80] sm:$0xff]
          %v1920 = vld [vmem:[#allocation2 + $0x88] sm:$0xff]
          %v1921 = vld [vmem:[#allocation2 + $0x90] sm:$0xff]
          %v1922 = vld [vmem:[#allocation2 + $0x98] sm:$0xff]
          %v1923 = vld [vmem:[#allocation2 + $0xa0] sm:$0xff]
          %v1924 = vld [vmem:[#allocation2 + $0xa8] sm:$0xff]
          %v1925 = vld [vmem:[#allocation2 + $0xb0] sm:$0xff]
          %v1926 = vld [vmem:[#allocation2 + $0xb8] sm:$0xff]
          %v1927 = vld [vmem:[#allocation2 + $0xc0] sm:$0xff]
          %v1928 = vld [vmem:[#allocation2 + $0xc8] sm:$0xff]
          %v1929 = vld [vmem:[#allocation2 + $0xd0] sm:$0xff]
          %v1930 = vld [vmem:[#allocation2 + $0xd8] sm:$0xff]
          %v1931 = vld [vmem:[#allocation2 + $0xe0] sm:$0xff]
          %v1932 = vld [vmem:[#allocation2 + $0xe8] sm:$0xff]
          %v1933 = vld [vmem:[#allocation2 + $0xf0] sm:$0xff]
          %v1934 = vld [vmem:[#allocation2 + $0xf8] sm:$0xff]
          %s1935 = sshra.s32 %s1902, 3
          %s1936 = sand.u32 %s1902, 7
          %s1937 = smul.addr %s1935, 4
          %s1938 = scalar_lea.vmem [#allocation3], %s1937
          %v1939 = vld [vmem:[%s1938] sm:$0xf]
          %v1940 = vld [vmem:[%s1938 + $0x4] sm:$0xf]
          %v1941 = vld [vmem:[%s1938 + $0x8] sm:$0xf]
          %v1942 = vld [vmem:[%s1938 + $0xc] sm:$0xf]
          %v1943 = vld [vmem:[%s1938 + $0x10] sm:$0xf]
          %v1944 = vld [vmem:[%s1938 + $0x14] sm:$0xf]
          %v1945 = vld [vmem:[%s1938 + $0x18] sm:$0xf]
          %v1946 = vld [vmem:[%s1938 + $0x1c] sm:$0xf]
          %v1947 = vld [vmem:[%s1938 + $0x20] sm:$0xf]
          %v1948 = vld [vmem:[%s1938 + $0x24] sm:$0xf]
          %v1949 = vld [vmem:[%s1938 + $0x28] sm:$0xf]
          %v1950 = vld [vmem:[%s1938 + $0x2c] sm:$0xf]
          %v1951 = vld [vmem:[%s1938 + $0x30] sm:$0xf]
          %v1952 = vld [vmem:[%s1938 + $0x34] sm:$0xf]
          %v1953 = vld [vmem:[%s1938 + $0x38] sm:$0xf]
          %v1954 = vld [vmem:[%s1938 + $0x3c] sm:$0xf]
          %v1955 = vld [vmem:[%s1938 + $0x40] sm:$0xf]
          %v1956 = vld [vmem:[%s1938 + $0x44] sm:$0xf]
          %v1957 = vld [vmem:[%s1938 + $0x48] sm:$0xf]
          %v1958 = vld [vmem:[%s1938 + $0x4c] sm:$0xf]
          %v1959 = vld [vmem:[%s1938 + $0x50] sm:$0xf]
          %v1960 = vld [vmem:[%s1938 + $0x54] sm:$0xf]
          %v1961 = vld [vmem:[%s1938 + $0x58] sm:$0xf]
          %v1962 = vld [vmem:[%s1938 + $0x5c] sm:$0xf]
          %v1963 = vld [vmem:[%s1938 + $0x60] sm:$0xf]
          %v1964 = vld [vmem:[%s1938 + $0x64] sm:$0xf]
          %v1965 = vld [vmem:[%s1938 + $0x68] sm:$0xf]
          %v1966 = vld [vmem:[%s1938 + $0x6c] sm:$0xf]
          %v1967 = vld [vmem:[%s1938 + $0x70] sm:$0xf]
          %v1968 = vld [vmem:[%s1938 + $0x74] sm:$0xf]
          %v1969 = vld [vmem:[%s1938 + $0x78] sm:$0xf]
          %v1970 = vld [vmem:[%s1938 + $0x7c] sm:$0xf]
          %v2003 = vunpack.c.l.b16 %v580
          %v2004 = vunpack.c.h.b16 %v580
          %v2005 = vunpack.c.l.b16 %v581
          %v2006 = vunpack.c.h.b16 %v581
          %v2007 = vunpack.c.l.b16 %v582
          %v2008 = vunpack.c.h.b16 %v582
          %v2009 = vunpack.c.l.b16 %v583
          %v2010 = vunpack.c.h.b16 %v583
          %v2011 = vunpack.c.l.b16 %v584
          %v2012 = vunpack.c.h.b16 %v584
          %v2013 = vunpack.c.l.b16 %v585
          %v2014 = vunpack.c.h.b16 %v585
          %v2015 = vunpack.c.l.b16 %v586
          %v2016 = vunpack.c.h.b16 %v586
          %v2017 = vunpack.c.l.b16 %v587
          %v2018 = vunpack.c.h.b16 %v587
          %v2019 = vunpack.c.l.b16 %v588
          %v2020 = vunpack.c.h.b16 %v588
          %v2021 = vunpack.c.l.b16 %v589
          %v2022 = vunpack.c.h.b16 %v589
          %v2023 = vunpack.c.l.b16 %v590
          %v2024 = vunpack.c.h.b16 %v590
          %v2025 = vunpack.c.l.b16 %v591
          %v2026 = vunpack.c.h.b16 %v591
          %v2027 = vunpack.c.l.b16 %v592
          %v2028 = vunpack.c.h.b16 %v592
          %v2029 = vunpack.c.l.b16 %v593
          %v2030 = vunpack.c.h.b16 %v593
          %v2031 = vunpack.c.l.b16 %v594
          %v2032 = vunpack.c.h.b16 %v594
          %v2033 = vunpack.c.l.b16 %v595
          %v2034 = vunpack.c.h.b16 %v595
          %v2035 = vunpack.c.l.b16 %v596
          %v2036 = vunpack.c.h.b16 %v596
          %v2037 = vunpack.c.l.b16 %v597
          %v2038 = vunpack.c.h.b16 %v597
          %v2039 = vunpack.c.l.b16 %v598
          %v2040 = vunpack.c.h.b16 %v598
          %v2041 = vunpack.c.l.b16 %v599
          %v2042 = vunpack.c.h.b16 %v599
          %v2043 = vunpack.c.l.b16 %v600
          %v2044 = vunpack.c.h.b16 %v600
          %v2045 = vunpack.c.l.b16 %v601
          %v2046 = vunpack.c.h.b16 %v601
          %v2047 = vunpack.c.l.b16 %v602
          %v2048 = vunpack.c.h.b16 %v602
          %v2049 = vunpack.c.l.b16 %v603
          %v2050 = vunpack.c.h.b16 %v603
          %v2051 = vunpack.c.l.b16 %v604
          %v2052 = vunpack.c.h.b16 %v604
          %v2053 = vunpack.c.l.b16 %v605
          %v2054 = vunpack.c.h.b16 %v605
          %v2055 = vunpack.c.l.b16 %v606
          %v2056 = vunpack.c.h.b16 %v606
          %v2057 = vunpack.c.l.b16 %v607
          %v2058 = vunpack.c.h.b16 %v607
          %v2059 = vunpack.c.l.b16 %v608
          %v2060 = vunpack.c.h.b16 %v608
          %v2061 = vunpack.c.l.b16 %v609
          %v2062 = vunpack.c.h.b16 %v609
          %v2063 = vunpack.c.l.b16 %v610
          %v2064 = vunpack.c.h.b16 %v610
          %v2065 = vunpack.c.l.b16 %v611
          %v2066 = vunpack.c.h.b16 %v611
          %v2067 = vpack.c.b16 %v2005, %v2003
          %v2068 = vpack.c.b16 %v2006, %v2004
          %v2069 = vpack.c.b16 %v2009, %v2007
          %v2070 = vpack.c.b16 %v2010, %v2008
          %v2071 = vpack.c.b16 %v2013, %v2011
          %v2072 = vpack.c.b16 %v2014, %v2012
          %v2073 = vpack.c.b16 %v2017, %v2015
          %v2074 = vpack.c.b16 %v2018, %v2016
          %v2075 = vpack.c.b16 %v2021, %v2019
          %v2076 = vpack.c.b16 %v2022, %v2020
          %v2077 = vpack.c.b16 %v2025, %v2023
          %v2078 = vpack.c.b16 %v2026, %v2024
          %v2079 = vpack.c.b16 %v2029, %v2027
          %v2080 = vpack.c.b16 %v2030, %v2028
          %v2081 = vpack.c.b16 %v2033, %v2031
          %v2082 = vpack.c.b16 %v2034, %v2032
          %v2083 = vpack.c.b16 %v2037, %v2035
          %v2084 = vpack.c.b16 %v2038, %v2036
          %v2085 = vpack.c.b16 %v2041, %v2039
          %v2086 = vpack.c.b16 %v2042, %v2040
          %v2087 = vpack.c.b16 %v2045, %v2043
          %v2088 = vpack.c.b16 %v2046, %v2044
          %v2089 = vpack.c.b16 %v2049, %v2047
          %v2090 = vpack.c.b16 %v2050, %v2048
          %v2091 = vpack.c.b16 %v2053, %v2051
          %v2092 = vpack.c.b16 %v2054, %v2052
          %v2093 = vpack.c.b16 %v2057, %v2055
          %v2094 = vpack.c.b16 %v2058, %v2056
          %v2095 = vpack.c.b16 %v2061, %v2059
          %v2096 = vpack.c.b16 %v2062, %v2060
          %v2097 = vpack.c.b16 %v2065, %v2063
          %v2098 = vpack.c.b16 %v2066, %v2064
          %v2163 = vunpack.c.l.b16 %v1939
          %v2164 = vunpack.c.l.b16 %v1940
          %v2165 = vunpack.c.l.b16 %v1941
          %v2166 = vunpack.c.l.b16 %v1942
          %v2167 = vunpack.c.l.b16 %v1943
          %v2168 = vunpack.c.l.b16 %v1944
          %v2169 = vunpack.c.l.b16 %v1945
          %v2170 = vunpack.c.l.b16 %v1946
          %v2171 = vunpack.c.l.b16 %v1947
          %v2172 = vunpack.c.l.b16 %v1948
          %v2173 = vunpack.c.l.b16 %v1949
          %v2174 = vunpack.c.l.b16 %v1950
          %v2175 = vunpack.c.l.b16 %v1951
          %v2176 = vunpack.c.l.b16 %v1952
          %v2177 = vunpack.c.l.b16 %v1953
          %v2178 = vunpack.c.l.b16 %v1954
          %v2179 = vunpack.c.l.b16 %v1955
          %v2180 = vunpack.c.l.b16 %v1956
          %v2181 = vunpack.c.l.b16 %v1957
          %v2182 = vunpack.c.l.b16 %v1958
          %v2183 = vunpack.c.l.b16 %v1959
          %v2184 = vunpack.c.l.b16 %v1960
          %v2185 = vunpack.c.l.b16 %v1961
          %v2186 = vunpack.c.l.b16 %v1962
          %v2187 = vunpack.c.l.b16 %v1963
          %v2188 = vunpack.c.l.b16 %v1964
          %v2189 = vunpack.c.l.b16 %v1965
          %v2190 = vunpack.c.l.b16 %v1966
          %v2191 = vunpack.c.l.b16 %v1967
          %v2192 = vunpack.c.l.b16 %v1968
          %v2193 = vunpack.c.l.b16 %v1969
          %v2194 = vunpack.c.l.b16 %v1970
          %v2195 = vpack.c.b16 %v2164, %v2163
          %v2196 = vpack.c.b16 %v2166, %v2165
          %v2197 = vpack.c.b16 %v2168, %v2167
          %v2198 = vpack.c.b16 %v2170, %v2169
          %v2199 = vpack.c.b16 %v2172, %v2171
          %v2200 = vpack.c.b16 %v2174, %v2173
          %v2201 = vpack.c.b16 %v2176, %v2175
          %v2202 = vpack.c.b16 %v2178, %v2177
          %v2203 = vpack.c.b16 %v2180, %v2179
          %v2204 = vpack.c.b16 %v2182, %v2181
          %v2205 = vpack.c.b16 %v2184, %v2183
          %v2206 = vpack.c.b16 %v2186, %v2185
          %v2207 = vpack.c.b16 %v2188, %v2187
          %v2208 = vpack.c.b16 %v2190, %v2189
          %v2209 = vpack.c.b16 %v2192, %v2191
          %v2210 = vpack.c.b16 %v2194, %v2193
          %2227 = vmatpush.bf16.msra.mxu0 %v2202
          %2228 = vmatpush.bf16.msra.mxu0 %v2201
          %2229 = vmatpush.bf16.msra.mxu0 %v2200
          %2230 = vmatpush.bf16.msra.mxu0 %v2199
          %2231 = vmatpush.bf16.msra.mxu0 %v2198
          %2232 = vmatpush.bf16.msra.mxu0 %v2197
          %2233 = vmatpush.bf16.msra.mxu0 %v2196
          %2234 = vmatpush.bf16.msra.mxu0 %v2195
          %2235 = vmatmul.bf16.gmra.mxu0 %v2067
          %v2236 = vpop.f32.mrf.mxu0
          %v2237 = vadd.f32 0.0, %v2236
          %v2238 = vpop.f32.mrf.mxu0
          %v2239 = vadd.f32 0.0, %v2238
          %2240 = vmatmul.bf16.gmra.mxu0 %v2069
          %v2241 = vpop.f32.mrf.mxu0
          %v2242 = vadd.f32 0.0, %v2241
          %v2243 = vpop.f32.mrf.mxu0
          %v2244 = vadd.f32 0.0, %v2243
          %2245 = vmatmul.bf16.gmra.mxu0 %v2071
          %v2246 = vpop.f32.mrf.mxu0
          %v2247 = vadd.f32 0.0, %v2246
          %v2248 = vpop.f32.mrf.mxu0
          %v2249 = vadd.f32 0.0, %v2248
          %2250 = vmatmul.bf16.gmra.mxu0 %v2073
          %v2251 = vpop.f32.mrf.mxu0
          %v2252 = vadd.f32 0.0, %v2251
          %v2253 = vpop.f32.mrf.mxu0
          %v2254 = vadd.f32 0.0, %v2253
          %2255 = vmatmul.bf16.gmra.mxu0 %v2075
          %v2256 = vpop.f32.mrf.mxu0
          %v2257 = vadd.f32 0.0, %v2256
          %v2258 = vpop.f32.mrf.mxu0
          %v2259 = vadd.f32 0.0, %v2258
          %2260 = vmatmul.bf16.gmra.mxu0 %v2077
          %v2261 = vpop.f32.mrf.mxu0
          %v2262 = vadd.f32 0.0, %v2261
          %v2263 = vpop.f32.mrf.mxu0
          %v2264 = vadd.f32 0.0, %v2263
          %2265 = vmatmul.bf16.gmra.mxu0 %v2079
          %v2266 = vpop.f32.mrf.mxu0
          %v2267 = vadd.f32 0.0, %v2266
          %v2268 = vpop.f32.mrf.mxu0
          %v2269 = vadd.f32 0.0, %v2268
          %2270 = vmatmul.bf16.gmra.mxu0 %v2081
          %v2271 = vpop.f32.mrf.mxu0
          %v2272 = vadd.f32 0.0, %v2271
          %v2273 = vpop.f32.mrf.mxu0
          %v2274 = vadd.f32 0.0, %v2273
          %2275 = vmatmul.bf16.gmra.mxu0 %v2083
          %v2276 = vpop.f32.mrf.mxu0
          %v2277 = vadd.f32 0.0, %v2276
          %v2278 = vpop.f32.mrf.mxu0
          %v2279 = vadd.f32 0.0, %v2278
          %2280 = vmatmul.bf16.gmra.mxu0 %v2085
          %v2281 = vpop.f32.mrf.mxu0
          %v2282 = vadd.f32 0.0, %v2281
          %v2283 = vpop.f32.mrf.mxu0
          %v2284 = vadd.f32 0.0, %v2283
          %2285 = vmatmul.bf16.gmra.mxu0 %v2087
          %v2286 = vpop.f32.mrf.mxu0
          %v2287 = vadd.f32 0.0, %v2286
          %v2288 = vpop.f32.mrf.mxu0
          %v2289 = vadd.f32 0.0, %v2288
          %2290 = vmatmul.bf16.gmra.mxu0 %v2089
          %v2291 = vpop.f32.mrf.mxu0
          %v2292 = vadd.f32 0.0, %v2291
          %v2293 = vpop.f32.mrf.mxu0
          %v2294 = vadd.f32 0.0, %v2293
          %2295 = vmatmul.bf16.gmra.mxu0 %v2091
          %v2296 = vpop.f32.mrf.mxu0
          %v2297 = vadd.f32 0.0, %v2296
          %v2298 = vpop.f32.mrf.mxu0
          %v2299 = vadd.f32 0.0, %v2298
          %2300 = vmatmul.bf16.gmra.mxu0 %v2093
          %v2301 = vpop.f32.mrf.mxu0
          %v2302 = vadd.f32 0.0, %v2301
          %v2303 = vpop.f32.mrf.mxu0
          %v2304 = vadd.f32 0.0, %v2303
          %2305 = vmatmul.bf16.gmra.mxu0 %v2095
          %v2306 = vpop.f32.mrf.mxu0
          %v2307 = vadd.f32 0.0, %v2306
          %v2308 = vpop.f32.mrf.mxu0
          %v2309 = vadd.f32 0.0, %v2308
          %2310 = vmatmul.bf16.gmra.mxu0 %v2097
          %v2311 = vpop.f32.mrf.mxu0
          %v2312 = vadd.f32 0.0, %v2311
          %v2313 = vpop.f32.mrf.mxu0
          %v2314 = vadd.f32 0.0, %v2313
          %2315 = vdwg.mxu0
          %2316 = vmatpush.bf16.msra.mxu0 %v2210
          %2317 = vmatpush.bf16.msra.mxu0 %v2209
          %2318 = vmatpush.bf16.msra.mxu0 %v2208
          %2319 = vmatpush.bf16.msra.mxu0 %v2207
          %2320 = vmatpush.bf16.msra.mxu0 %v2206
          %2321 = vmatpush.bf16.msra.mxu0 %v2205
          %2322 = vmatpush.bf16.msra.mxu0 %v2204
          %2323 = vmatpush.bf16.msra.mxu0 %v2203
          %2324 = vmatmul.bf16.gmra.mxu0 %v2068
          %v2325 = vpop.f32.mrf.mxu0
          %v2326 = vadd.f32 %v2237, %v2325
          %v2327 = vpop.f32.mrf.mxu0
          %v2328 = vadd.f32 %v2239, %v2327
          %2329 = vmatmul.bf16.gmra.mxu0 %v2070
          %v2330 = vpop.f32.mrf.mxu0
          %v2331 = vadd.f32 %v2242, %v2330
          %v2332 = vpop.f32.mrf.mxu0
          %v2333 = vadd.f32 %v2244, %v2332
          %2334 = vmatmul.bf16.gmra.mxu0 %v2072
          %v2335 = vpop.f32.mrf.mxu0
          %v2336 = vadd.f32 %v2247, %v2335
          %v2337 = vpop.f32.mrf.mxu0
          %v2338 = vadd.f32 %v2249, %v2337
          %2339 = vmatmul.bf16.gmra.mxu0 %v2074
          %v2340 = vpop.f32.mrf.mxu0
          %v2341 = vadd.f32 %v2252, %v2340
          %v2342 = vpop.f32.mrf.mxu0
          %v2343 = vadd.f32 %v2254, %v2342
          %2344 = vmatmul.bf16.gmra.mxu0 %v2076
          %v2345 = vpop.f32.mrf.mxu0
          %v2346 = vadd.f32 %v2257, %v2345
          %v2347 = vpop.f32.mrf.mxu0
          %v2348 = vadd.f32 %v2259, %v2347
          %2349 = vmatmul.bf16.gmra.mxu0 %v2078
          %v2350 = vpop.f32.mrf.mxu0
          %v2351 = vadd.f32 %v2262, %v2350
          %v2352 = vpop.f32.mrf.mxu0
          %v2353 = vadd.f32 %v2264, %v2352
          %2354 = vmatmul.bf16.gmra.mxu0 %v2080
          %v2355 = vpop.f32.mrf.mxu0
          %v2356 = vadd.f32 %v2267, %v2355
          %v2357 = vpop.f32.mrf.mxu0
          %v2358 = vadd.f32 %v2269, %v2357
          %2359 = vmatmul.bf16.gmra.mxu0 %v2082
          %v2360 = vpop.f32.mrf.mxu0
          %v2361 = vadd.f32 %v2272, %v2360
          %v2362 = vpop.f32.mrf.mxu0
          %v2363 = vadd.f32 %v2274, %v2362
          %2364 = vmatmul.bf16.gmra.mxu0 %v2084
          %v2365 = vpop.f32.mrf.mxu0
          %v2366 = vadd.f32 %v2277, %v2365
          %v2367 = vpop.f32.mrf.mxu0
          %v2368 = vadd.f32 %v2279, %v2367
          %2369 = vmatmul.bf16.gmra.mxu0 %v2086
          %v2370 = vpop.f32.mrf.mxu0
          %v2371 = vadd.f32 %v2282, %v2370
          %v2372 = vpop.f32.mrf.mxu0
          %v2373 = vadd.f32 %v2284, %v2372
          %2374 = vmatmul.bf16.gmra.mxu0 %v2088
          %v2375 = vpop.f32.mrf.mxu0
          %v2376 = vadd.f32 %v2287, %v2375
          %v2377 = vpop.f32.mrf.mxu0
          %v2378 = vadd.f32 %v2289, %v2377
          %2379 = vmatmul.bf16.gmra.mxu0 %v2090
          %v2380 = vpop.f32.mrf.mxu0
          %v2381 = vadd.f32 %v2292, %v2380
          %v2382 = vpop.f32.mrf.mxu0
          %v2383 = vadd.f32 %v2294, %v2382
          %2384 = vmatmul.bf16.gmra.mxu0 %v2092
          %v2385 = vpop.f32.mrf.mxu0
          %v2386 = vadd.f32 %v2297, %v2385
          %v2387 = vpop.f32.mrf.mxu0
          %v2388 = vadd.f32 %v2299, %v2387
          %2389 = vmatmul.bf16.gmra.mxu0 %v2094
          %v2390 = vpop.f32.mrf.mxu0
          %v2391 = vadd.f32 %v2302, %v2390
          %v2392 = vpop.f32.mrf.mxu0
          %v2393 = vadd.f32 %v2304, %v2392
          %2394 = vmatmul.bf16.gmra.mxu0 %v2096
          %v2395 = vpop.f32.mrf.mxu0
          %v2396 = vadd.f32 %v2307, %v2395
          %v2397 = vpop.f32.mrf.mxu0
          %v2398 = vadd.f32 %v2309, %v2397
          %2399 = vmatmul.bf16.gmra.mxu0 %v2098
          %v2400 = vpop.f32.mrf.mxu0
          %v2401 = vadd.f32 %v2312, %v2400
          %v2402 = vpop.f32.mrf.mxu0
          %v2403 = vadd.f32 %v2314, %v2402
          %2404 = vdwg.mxu0
          %v2405 = vadd.f32 %v1903, %v2326
          %v2406 = vadd.f32 %v1904, %v2328
          %v2407 = vadd.f32 %v1905, %v2331
          %v2408 = vadd.f32 %v1906, %v2333
          %v2409 = vadd.f32 %v1907, %v2336
          %v2410 = vadd.f32 %v1908, %v2338
          %v2411 = vadd.f32 %v1909, %v2341
          %v2412 = vadd.f32 %v1910, %v2343
          %v2413 = vadd.f32 %v1911, %v2346
          %v2414 = vadd.f32 %v1912, %v2348
          %v2415 = vadd.f32 %v1913, %v2351
          %v2416 = vadd.f32 %v1914, %v2353
          %v2417 = vadd.f32 %v1915, %v2356
          %v2418 = vadd.f32 %v1916, %v2358
          %v2419 = vadd.f32 %v1917, %v2361
          %v2420 = vadd.f32 %v1918, %v2363
          %v2421 = vadd.f32 %v1919, %v2366
          %v2422 = vadd.f32 %v1920, %v2368
          %v2423 = vadd.f32 %v1921, %v2371
          %v2424 = vadd.f32 %v1922, %v2373
          %v2425 = vadd.f32 %v1923, %v2376
          %v2426 = vadd.f32 %v1924, %v2378
          %v2427 = vadd.f32 %v1925, %v2381
          %v2428 = vadd.f32 %v1926, %v2383
          %v2429 = vadd.f32 %v1927, %v2386
          %v2430 = vadd.f32 %v1928, %v2388
          %v2431 = vadd.f32 %v1929, %v2391
          %v2432 = vadd.f32 %v1930, %v2393
          %v2433 = vadd.f32 %v1931, %v2396
          %v2434 = vadd.f32 %v1932, %v2398
          %v2435 = vadd.f32 %v1933, %v2401
          %v2436 = vadd.f32 %v1934, %v2403
          %2437 = vst [vmem:[#allocation2] sm:$0xff] %v2405
          %2438 = vst [vmem:[#allocation2 + $0x8] sm:$0xff] %v2406
          %2439 = vst [vmem:[#allocation2 + $0x10] sm:$0xff] %v2407
          %2440 = vst [vmem:[#allocation2 + $0x18] sm:$0xff] %v2408
          %2441 = vst [vmem:[#allocation2 + $0x20] sm:$0xff] %v2409
          %2442 = vst [vmem:[#allocation2 + $0x28] sm:$0xff] %v2410
          %2443 = vst [vmem:[#allocation2 + $0x30] sm:$0xff] %v2411
          %2444 = vst [vmem:[#allocation2 + $0x38] sm:$0xff] %v2412
          %2445 = vst [vmem:[#allocation2 + $0x40] sm:$0xff] %v2413
          %2446 = vst [vmem:[#allocation2 + $0x48] sm:$0xff] %v2414
          %2447 = vst [vmem:[#allocation2 + $0x50] sm:$0xff] %v2415
          %2448 = vst [vmem:[#allocation2 + $0x58] sm:$0xff] %v2416
          %2449 = vst [vmem:[#allocation2 + $0x60] sm:$0xff] %v2417
          %2450 = vst [vmem:[#allocation2 + $0x68] sm:$0xff] %v2418
          %2451 = vst [vmem:[#allocation2 + $0x70] sm:$0xff] %v2419
          %2452 = vst [vmem:[#allocation2 + $0x78] sm:$0xff] %v2420
          %2453 = vst [vmem:[#allocation2 + $0x80] sm:$0xff] %v2421
          %2454 = vst [vmem:[#allocation2 + $0x88] sm:$0xff] %v2422
          %2455 = vst [vmem:[#allocation2 + $0x90] sm:$0xff] %v2423
          %2456 = vst [vmem:[#allocation2 + $0x98] sm:$0xff] %v2424
          %2457 = vst [vmem:[#allocation2 + $0xa0] sm:$0xff] %v2425
          %2458 = vst [vmem:[#allocation2 + $0xa8] sm:$0xff] %v2426
          %2459 = vst [vmem:[#allocation2 + $0xb0] sm:$0xff] %v2427
          %2460 = vst [vmem:[#allocation2 + $0xb8] sm:$0xff] %v2428
          %2461 = vst [vmem:[#allocation2 + $0xc0] sm:$0xff] %v2429
          %2462 = vst [vmem:[#allocation2 + $0xc8] sm:$0xff] %v2430
          %2463 = vst [vmem:[#allocation2 + $0xd0] sm:$0xff] %v2431
          %2464 = vst [vmem:[#allocation2 + $0xd8] sm:$0xff] %v2432
          %2465 = vst [vmem:[#allocation2 + $0xe0] sm:$0xff] %v2433
          %2466 = vst [vmem:[#allocation2 + $0xe8] sm:$0xff] %v2434
          %2467 = vst [vmem:[#allocation2 + $0xf0] sm:$0xff] %v2435
          %2468 = vst [vmem:[#allocation2 + $0xf8] sm:$0xff] %v2436
        $region108: #{tpu_custom_call.1} parent=71 // pred_fallthru
          _
        %p2469 = pnand %p1898, %p544
        %p2470 = pneg %p2469
        // Predicated region
        $region109: #{tpu_custom_call.1} parent=71 // pred_check
          _
        $region110: #{tpu_custom_call.1} parent=71 // pred_check_branch
          %2472 = sbr.rel (%p2469) target = $region112
        $region111: #{tpu_custom_call.1} parent=71 // pred_region
          %v2473 = vlaneseq
          %v2474 = vshrl.u32 %v2473, 7
          %v2475 = vadd.s32 %v2474, 8
          %v2476 = vadd.s32 %v2474, 16
          %v2477 = vadd.s32 %v2474, 24
          %v2478 = vadd.s32 %v2474, 32
          %v2479 = vadd.s32 %v2474, 40
          %v2480 = vadd.s32 %v2474, 48
          %v2481 = vadd.s32 %v2474, 56
          %v2482 = vadd.s32 %v2474, 64
          %v2483 = vadd.s32 %v2474, 72
          %v2484 = vadd.s32 %v2474, 80
          %v2485 = vadd.s32 %v2474, 88
          %v2486 = vadd.s32 %v2474, 96
          %v2487 = vadd.s32 %v2474, 104
          %v2488 = vadd.s32 %v2474, 112
          %v2489 = vadd.s32 %v2474, 120
          %v2490 = vadd.s32 %v2474, 128
          %v2491 = vadd.s32 %v2474, 136
          %v2492 = vadd.s32 %v2474, 144
          %v2493 = vadd.s32 %v2474, 152
          %v2494 = vadd.s32 %v2474, 160
          %v2495 = vadd.s32 %v2474, 168
          %v2496 = vadd.s32 %v2474, 176
          %v2497 = vadd.s32 %v2474, 184
          %v2498 = vadd.s32 %v2474, 192
          %v2499 = vadd.s32 %v2474, 200
          %v2500 = vadd.s32 %v2474, 208
          %v2501 = vadd.s32 %v2474, 216
          %v2502 = vadd.s32 %v2474, 224
          %v2503 = vadd.s32 %v2474, 232
          %v2504 = vadd.s32 %v2474, 240
          %v2505 = vadd.s32 %v2474, 248
          %vm2506 = vcmp.lt.s32.totalorder %v2474, 16
          %vm2507 = vcmp.lt.s32.totalorder %v2475, 16
          %vm2508 = vcmp.lt.s32.totalorder %v2476, 16
          %vm2509 = vcmp.lt.s32.totalorder %v2477, 16
          %vm2510 = vcmp.lt.s32.totalorder %v2478, 16
          %vm2511 = vcmp.lt.s32.totalorder %v2479, 16
          %vm2512 = vcmp.lt.s32.totalorder %v2480, 16
          %vm2513 = vcmp.lt.s32.totalorder %v2481, 16
          %vm2514 = vcmp.lt.s32.totalorder %v2482, 16
          %vm2515 = vcmp.lt.s32.totalorder %v2483, 16
          %vm2516 = vcmp.lt.s32.totalorder %v2484, 16
          %vm2517 = vcmp.lt.s32.totalorder %v2485, 16
          %vm2518 = vcmp.lt.s32.totalorder %v2486, 16
          %vm2519 = vcmp.lt.s32.totalorder %v2487, 16
          %vm2520 = vcmp.lt.s32.totalorder %v2488, 16
          %vm2521 = vcmp.lt.s32.totalorder %v2489, 16
          %vm2522 = vcmp.lt.s32.totalorder %v2490, 16
          %vm2523 = vcmp.lt.s32.totalorder %v2491, 16
          %vm2524 = vcmp.lt.s32.totalorder %v2492, 16
          %vm2525 = vcmp.lt.s32.totalorder %v2493, 16
          %vm2526 = vcmp.lt.s32.totalorder %v2494, 16
          %vm2527 = vcmp.lt.s32.totalorder %v2495, 16
          %vm2528 = vcmp.lt.s32.totalorder %v2496, 16
          %vm2529 = vcmp.lt.s32.totalorder %v2497, 16
          %vm2530 = vcmp.lt.s32.totalorder %v2498, 16
          %vm2531 = vcmp.lt.s32.totalorder %v2499, 16
          %vm2532 = vcmp.lt.s32.totalorder %v2500, 16
          %vm2533 = vcmp.lt.s32.totalorder %v2501, 16
          %vm2534 = vcmp.lt.s32.totalorder %v2502, 16
          %vm2535 = vcmp.lt.s32.totalorder %v2503, 16
          %vm2536 = vcmp.lt.s32.totalorder %v2504, 16
          %vm2537 = vcmp.lt.s32.totalorder %v2505, 16
          %v2538 = vsel %vm2506, 1, 0
          %v2539 = vsel %vm2507, 1, 0
          %v2540 = vsel %vm2508, 1, 0
          %v2541 = vsel %vm2509, 1, 0
          %v2542 = vsel %vm2510, 1, 0
          %v2543 = vsel %vm2511, 1, 0
          %v2544 = vsel %vm2512, 1, 0
          %v2545 = vsel %vm2513, 1, 0
          %v2546 = vsel %vm2514, 1, 0
          %v2547 = vsel %vm2515, 1, 0
          %v2548 = vsel %vm2516, 1, 0
          %v2549 = vsel %vm2517, 1, 0
          %v2550 = vsel %vm2518, 1, 0
          %v2551 = vsel %vm2519, 1, 0
          %v2552 = vsel %vm2520, 1, 0
          %v2553 = vsel %vm2521, 1, 0
          %v2554 = vsel %vm2522, 1, 0
          %v2555 = vsel %vm2523, 1, 0
          %v2556 = vsel %vm2524, 1, 0
          %v2557 = vsel %vm2525, 1, 0
          %v2558 = vsel %vm2526, 1, 0
          %v2559 = vsel %vm2527, 1, 0
          %v2560 = vsel %vm2528, 1, 0
          %v2561 = vsel %vm2529, 1, 0
          %v2562 = vsel %vm2530, 1, 0
          %v2563 = vsel %vm2531, 1, 0
          %v2564 = vsel %vm2532, 1, 0
          %v2565 = vsel %vm2533, 1, 0
          %v2566 = vsel %vm2534, 1, 0
          %v2567 = vsel %vm2535, 1, 0
          %v2568 = vsel %vm2536, 1, 0
          %v2569 = vsel %vm2537, 1, 0
          %v2570 = vcvt.s32.f32 %v2538
          %v2571 = vcvt.s32.f32 %v2539
          %v2572 = vcvt.s32.f32 %v2540
          %v2573 = vcvt.s32.f32 %v2541
          %v2574 = vcvt.s32.f32 %v2542
          %v2575 = vcvt.s32.f32 %v2543
          %v2576 = vcvt.s32.f32 %v2544
          %v2577 = vcvt.s32.f32 %v2545
          %v2578 = vcvt.s32.f32 %v2546
          %v2579 = vcvt.s32.f32 %v2547
          %v2580 = vcvt.s32.f32 %v2548
          %v2581 = vcvt.s32.f32 %v2549
          %v2582 = vcvt.s32.f32 %v2550
          %v2583 = vcvt.s32.f32 %v2551
          %v2584 = vcvt.s32.f32 %v2552
          %v2585 = vcvt.s32.f32 %v2553
          %v2586 = vcvt.s32.f32 %v2554
          %v2587 = vcvt.s32.f32 %v2555
          %v2588 = vcvt.s32.f32 %v2556
          %v2589 = vcvt.s32.f32 %v2557
          %v2590 = vcvt.s32.f32 %v2558
          %v2591 = vcvt.s32.f32 %v2559
          %v2592 = vcvt.s32.f32 %v2560
          %v2593 = vcvt.s32.f32 %v2561
          %v2594 = vcvt.s32.f32 %v2562
          %v2595 = vcvt.s32.f32 %v2563
          %v2596 = vcvt.s32.f32 %v2564
          %v2597 = vcvt.s32.f32 %v2565
          %v2598 = vcvt.s32.f32 %v2566
          %v2599 = vcvt.s32.f32 %v2567
          %v2600 = vcvt.s32.f32 %v2568
          %v2601 = vcvt.s32.f32 %v2569
          %v2602 = vld [vmem:[#allocation2] sm:$0xff]
          %v2603 = vld [vmem:[#allocation2 + $0x8] sm:$0xff]
          %v2604 = vld [vmem:[#allocation2 + $0x10] sm:$0xff]
          %v2605 = vld [vmem:[#allocation2 + $0x18] sm:$0xff]
          %v2606 = vld [vmem:[#allocation2 + $0x20] sm:$0xff]
          %v2607 = vld [vmem:[#allocation2 + $0x28] sm:$0xff]
          %v2608 = vld [vmem:[#allocation2 + $0x30] sm:$0xff]
          %v2609 = vld [vmem:[#allocation2 + $0x38] sm:$0xff]
          %v2610 = vld [vmem:[#allocation2 + $0x40] sm:$0xff]
          %v2611 = vld [vmem:[#allocation2 + $0x48] sm:$0xff]
          %v2612 = vld [vmem:[#allocation2 + $0x50] sm:$0xff]
          %v2613 = vld [vmem:[#allocation2 + $0x58] sm:$0xff]
          %v2614 = vld [vmem:[#allocation2 + $0x60] sm:$0xff]
          %v2615 = vld [vmem:[#allocation2 + $0x68] sm:$0xff]
          %v2616 = vld [vmem:[#allocation2 + $0x70] sm:$0xff]
          %v2617 = vld [vmem:[#allocation2 + $0x78] sm:$0xff]
          %v2618 = vld [vmem:[#allocation2 + $0x80] sm:$0xff]
          %v2619 = vld [vmem:[#allocation2 + $0x88] sm:$0xff]
          %v2620 = vld [vmem:[#allocation2 + $0x90] sm:$0xff]
          %v2621 = vld [vmem:[#allocation2 + $0x98] sm:$0xff]
          %v2622 = vld [vmem:[#allocation2 + $0xa0] sm:$0xff]
          %v2623 = vld [vmem:[#allocation2 + $0xa8] sm:$0xff]
          %v2624 = vld [vmem:[#allocation2 + $0xb0] sm:$0xff]
          %v2625 = vld [vmem:[#allocation2 + $0xb8] sm:$0xff]
          %v2626 = vld [vmem:[#allocation2 + $0xc0] sm:$0xff]
          %v2627 = vld [vmem:[#allocation2 + $0xc8] sm:$0xff]
          %v2628 = vld [vmem:[#allocation2 + $0xd0] sm:$0xff]
          %v2629 = vld [vmem:[#allocation2 + $0xd8] sm:$0xff]
          %v2630 = vld [vmem:[#allocation2 + $0xe0] sm:$0xff]
          %v2631 = vld [vmem:[#allocation2 + $0xe8] sm:$0xff]
          %v2632 = vld [vmem:[#allocation2 + $0xf0] sm:$0xff]
          %v2633 = vld [vmem:[#allocation2 + $0xf8] sm:$0xff]
          %v2634 = vld [vmem:[%s5] sm:$0x1]
          %v2635 = vld [vmem:[%s6] sm:$0x1]
          %v2636 = vmul.f32 %v2602, %v2570
          %v2637 = vmul.f32 %v2603, %v2571
          %v2638 = vmul.f32 %v2604, %v2572
          %v2639 = vmul.f32 %v2605, %v2573
          %v2640 = vmul.f32 %v2606, %v2574
          %v2641 = vmul.f32 %v2607, %v2575
          %v2642 = vmul.f32 %v2608, %v2576
          %v2643 = vmul.f32 %v2609, %v2577
          %v2644 = vmul.f32 %v2610, %v2578
          %v2645 = vmul.f32 %v2611, %v2579
          %v2646 = vmul.f32 %v2612, %v2580
          %v2647 = vmul.f32 %v2613, %v2581
          %v2648 = vmul.f32 %v2614, %v2582
          %v2649 = vmul.f32 %v2615, %v2583
          %v2650 = vmul.f32 %v2616, %v2584
          %v2651 = vmul.f32 %v2617, %v2585
          %v2652 = vmul.f32 %v2618, %v2586
          %v2653 = vmul.f32 %v2619, %v2587
          %v2654 = vmul.f32 %v2620, %v2588
          %v2655 = vmul.f32 %v2621, %v2589
          %v2656 = vmul.f32 %v2622, %v2590
          %v2657 = vmul.f32 %v2623, %v2591
          %v2658 = vmul.f32 %v2624, %v2592
          %v2659 = vmul.f32 %v2625, %v2593
          %v2660 = vmul.f32 %v2626, %v2594
          %v2661 = vmul.f32 %v2627, %v2595
          %v2662 = vmul.f32 %v2628, %v2596
          %v2663 = vmul.f32 %v2629, %v2597
          %v2664 = vmul.f32 %v2630, %v2598
          %v2665 = vmul.f32 %v2631, %v2599
          %v2666 = vmul.f32 %v2632, %v2600
          %v2667 = vmul.f32 %v2633, %v2601
          %v2668 = vadd.f32 %v2636, %v2637
          %v2669 = vadd.f32 %v2668, %v2638
          %v2670 = vadd.f32 %v2669, %v2639
          %v2671 = vadd.f32 %v2670, %v2640
          %v2672 = vadd.f32 %v2671, %v2641
          %v2673 = vadd.f32 %v2672, %v2642
          %v2674 = vadd.f32 %v2673, %v2643
          %v2675 = vadd.f32 %v2674, %v2644
          %v2676 = vadd.f32 %v2675, %v2645
          %v2677 = vadd.f32 %v2676, %v2646
          %v2678 = vadd.f32 %v2677, %v2647
          %v2679 = vadd.f32 %v2678, %v2648
          %v2680 = vadd.f32 %v2679, %v2649
          %v2681 = vadd.f32 %v2680, %v2650
          %v2682 = vadd.f32 %v2681, %v2651
          %v2683 = vadd.f32 %v2682, %v2652
          %v2684 = vadd.f32 %v2683, %v2653
          %v2685 = vadd.f32 %v2684, %v2654
          %v2686 = vadd.f32 %v2685, %v2655
          %v2687 = vadd.f32 %v2686, %v2656
          %v2688 = vadd.f32 %v2687, %v2657
          %v2689 = vadd.f32 %v2688, %v2658
          %v2690 = vadd.f32 %v2689, %v2659
          %v2691 = vadd.f32 %v2690, %v2660
          %v2692 = vadd.f32 %v2691, %v2661
          %v2693 = vadd.f32 %v2692, %v2662
          %v2694 = vadd.f32 %v2693, %v2663
          %v2695 = vadd.f32 %v2694, %v2664
          %v2696 = vadd.f32 %v2695, %v2665
          %v2697 = vadd.f32 %v2696, %v2666
          %v2698 = vadd.f32 %v2697, %v2667
          %v2699 = vrot.slane %v2698, 4
          %v2700 = vadd.f32 %v2698, %v2699
          %v2701 = vrot.slane %v2700, 2
          %v2702 = vadd.f32 %v2700, %v2701
          %v2703 = vrot.slane %v2702, 1
          %v2704 = vadd.f32 %v2702, %v2703
          %v2705 = vmul.f32 %v2636, %v2602
          %v2706 = vmul.f32 %v2637, %v2603
          %v2707 = vmul.f32 %v2638, %v2604
          %v2708 = vmul.f32 %v2639, %v2605
          %v2709 = vmul.f32 %v2640, %v2606
          %v2710 = vmul.f32 %v2641, %v2607
          %v2711 = vmul.f32 %v2642, %v2608
          %v2712 = vmul.f32 %v2643, %v2609
          %v2713 = vmul.f32 %v2644, %v2610
          %v2714 = vmul.f32 %v2645, %v2611
          %v2715 = vmul.f32 %v2646, %v2612
          %v2716 = vmul.f32 %v2647, %v2613
          %v2717 = vmul.f32 %v2648, %v2614
          %v2718 = vmul.f32 %v2649, %v2615
          %v2719 = vmul.f32 %v2650, %v2616
          %v2720 = vmul.f32 %v2651, %v2617
          %v2721 = vmul.f32 %v2652, %v2618
          %v2722 = vmul.f32 %v2653, %v2619
          %v2723 = vmul.f32 %v2654, %v2620
          %v2724 = vmul.f32 %v2655, %v2621
          %v2725 = vmul.f32 %v2656, %v2622
          %v2726 = vmul.f32 %v2657, %v2623
          %v2727 = vmul.f32 %v2658, %v2624
          %v2728 = vmul.f32 %v2659, %v2625
          %v2729 = vmul.f32 %v2660, %v2626
          %v2730 = vmul.f32 %v2661, %v2627
          %v2731 = vmul.f32 %v2662, %v2628
          %v2732 = vmul.f32 %v2663, %v2629
          %v2733 = vmul.f32 %v2664, %v2630
          %v2734 = vmul.f32 %v2665, %v2631
          %v2735 = vmul.f32 %v2666, %v2632
          %v2736 = vmul.f32 %v2667, %v2633
          %v2737 = vadd.f32 %v2705, %v2706
          %v2738 = vadd.f32 %v2737, %v2707
          %v2739 = vadd.f32 %v2738, %v2708
          %v2740 = vadd.f32 %v2739, %v2709
          %v2741 = vadd.f32 %v2740, %v2710
          %v2742 = vadd.f32 %v2741, %v2711
          %v2743 = vadd.f32 %v2742, %v2712
          %v2744 = vadd.f32 %v2743, %v2713
          %v2745 = vadd.f32 %v2744, %v2714
          %v2746 = vadd.f32 %v2745, %v2715
          %v2747 = vadd.f32 %v2746, %v2716
          %v2748 = vadd.f32 %v2747, %v2717
          %v2749 = vadd.f32 %v2748, %v2718
          %v2750 = vadd.f32 %v2749, %v2719
          %v2751 = vadd.f32 %v2750, %v2720
          %v2752 = vadd.f32 %v2751, %v2721
          %v2753 = vadd.f32 %v2752, %v2722
          %v2754 = vadd.f32 %v2753, %v2723
          %v2755 = vadd.f32 %v2754, %v2724
          %v2756 = vadd.f32 %v2755, %v2725
          %v2757 = vadd.f32 %v2756, %v2726
          %v2758 = vadd.f32 %v2757, %v2727
          %v2759 = vadd.f32 %v2758, %v2728
          %v2760 = vadd.f32 %v2759, %v2729
          %v2761 = vadd.f32 %v2760, %v2730
          %v2762 = vadd.f32 %v2761, %v2731
          %v2763 = vadd.f32 %v2762, %v2732
          %v2764 = vadd.f32 %v2763, %v2733
          %v2765 = vadd.f32 %v2764, %v2734
          %v2766 = vadd.f32 %v2765, %v2735
          %v2767 = vadd.f32 %v2766, %v2736
          %v2768 = vrot.slane %v2767, 4
          %v2769 = vadd.f32 %v2767, %v2768
          %v2770 = vrot.slane %v2769, 2
          %v2771 = vadd.f32 %v2769, %v2770
          %v2772 = vrot.slane %v2771, 1
          %v2773 = vadd.f32 %v2771, %v2772
          %v2774 = vmul.f32 %v2704, 0.0625
          %v2775 = vmul.f32 %v2773, 0.0625
          %v2776 = vmul.f32 %v2774, %v2774
          %v2777 = vsub.f32 %v2775, %v2776
          %v2778 = vmax.f32 %v2777, 0.0
          %v2779 = vsub.f32 %v2602, %v2774
          %v2780 = vsub.f32 %v2603, %v2774
          %v2781 = vsub.f32 %v2604, %v2774
          %v2782 = vsub.f32 %v2605, %v2774
          %v2783 = vsub.f32 %v2606, %v2774
          %v2784 = vsub.f32 %v2607, %v2774
          %v2785 = vsub.f32 %v2608, %v2774
          %v2786 = vsub.f32 %v2609, %v2774
          %v2787 = vsub.f32 %v2610, %v2774
          %v2788 = vsub.f32 %v2611, %v2774
          %v2789 = vsub.f32 %v2612, %v2774
          %v2790 = vsub.f32 %v2613, %v2774
          %v2791 = vsub.f32 %v2614, %v2774
          %v2792 = vsub.f32 %v2615, %v2774
          %v2793 = vsub.f32 %v2616, %v2774
          %v2794 = vsub.f32 %v2617, %v2774
          %v2795 = vsub.f32 %v2618, %v2774
          %v2796 = vsub.f32 %v2619, %v2774
          %v2797 = vsub.f32 %v2620, %v2774
          %v2798 = vsub.f32 %v2621, %v2774
          %v2799 = vsub.f32 %v2622, %v2774
          %v2800 = vsub.f32 %v2623, %v2774
          %v2801 = vsub.f32 %v2624, %v2774
          %v2802 = vsub.f32 %v2625, %v2774
          %v2803 = vsub.f32 %v2626, %v2774
          %v2804 = vsub.f32 %v2627, %v2774
          %v2805 = vsub.f32 %v2628, %v2774
          %v2806 = vsub.f32 %v2629, %v2774
          %v2807 = vsub.f32 %v2630, %v2774
          %v2808 = vsub.f32 %v2631, %v2774
          %v2809 = vsub.f32 %v2632, %v2774
          %v2810 = vsub.f32 %v2633, %v2774
          %v2811 = vadd.f32 %v2778, 1e-05
          %v2812 = vrsqrt.pop %v2811
          %v2813 = vmul.f32 %v2812, %v2811
          %v2814 = vmul.f32 %v2813, %v2812
          %v2815 = vmul.f32 0.5, %v2814
          %v2816 = vsub.f32 1.5, %v2815
          %v2817 = vmul.f32 %v2812, %v2816
          %vm2818 = vweird.f32 %v2811
          %vm2819 = vweird.f32 %v2812
          %vm2820 = vmor %vm2818, %vm2819
          %v2821 = vsel %vm2820, %v2812, %v2817
          %v2822 = vmul.f32 %v2779, %v2821
          %v2823 = vmul.f32 %v2780, %v2821
          %v2824 = vmul.f32 %v2781, %v2821
          %v2825 = vmul.f32 %v2782, %v2821
          %v2826 = vmul.f32 %v2783, %v2821
          %v2827 = vmul.f32 %v2784, %v2821
          %v2828 = vmul.f32 %v2785, %v2821
          %v2829 = vmul.f32 %v2786, %v2821
          %v2830 = vmul.f32 %v2787, %v2821
          %v2831 = vmul.f32 %v2788, %v2821
          %v2832 = vmul.f32 %v2789, %v2821
          %v2833 = vmul.f32 %v2790, %v2821
          %v2834 = vmul.f32 %v2791, %v2821
          %v2835 = vmul.f32 %v2792, %v2821
          %v2836 = vmul.f32 %v2793, %v2821
          %v2837 = vmul.f32 %v2794, %v2821
          %v2838 = vmul.f32 %v2795, %v2821
          %v2839 = vmul.f32 %v2796, %v2821
          %v2840 = vmul.f32 %v2797, %v2821
          %v2841 = vmul.f32 %v2798, %v2821
          %v2842 = vmul.f32 %v2799, %v2821
          %v2843 = vmul.f32 %v2800, %v2821
          %v2844 = vmul.f32 %v2801, %v2821
          %v2845 = vmul.f32 %v2802, %v2821
          %v2846 = vmul.f32 %v2803, %v2821
          %v2847 = vmul.f32 %v2804, %v2821
          %v2848 = vmul.f32 %v2805, %v2821
          %v2849 = vmul.f32 %v2806, %v2821
          %v2850 = vmul.f32 %v2807, %v2821
          %v2851 = vmul.f32 %v2808, %v2821
          %v2852 = vmul.f32 %v2809, %v2821
          %v2853 = vmul.f32 %v2810, %v2821
          %v2855 = vperm.slane %v2634, 0
          %v2857 = vmul.f32 %v2822, %v2855
          %v2858 = vmul.f32 %v2823, %v2855
          %v2859 = vmul.f32 %v2824, %v2855
          %v2860 = vmul.f32 %v2825, %v2855
          %v2861 = vmul.f32 %v2826, %v2855
          %v2862 = vmul.f32 %v2827, %v2855
          %v2863 = vmul.f32 %v2828, %v2855
          %v2864 = vmul.f32 %v2829, %v2855
          %v2865 = vmul.f32 %v2830, %v2855
          %v2866 = vmul.f32 %v2831, %v2855
          %v2867 = vmul.f32 %v2832, %v2855
          %v2868 = vmul.f32 %v2833, %v2855
          %v2869 = vmul.f32 %v2834, %v2855
          %v2870 = vmul.f32 %v2835, %v2855
          %v2871 = vmul.f32 %v2836, %v2855
          %v2872 = vmul.f32 %v2837, %v2855
          %v2873 = vmul.f32 %v2838, %v2855
          %v2874 = vmul.f32 %v2839, %v2855
          %v2875 = vmul.f32 %v2840, %v2855
          %v2876 = vmul.f32 %v2841, %v2855
          %v2877 = vmul.f32 %v2842, %v2855
          %v2878 = vmul.f32 %v2843, %v2855
          %v2879 = vmul.f32 %v2844, %v2855
          %v2880 = vmul.f32 %v2845, %v2855
          %v2881 = vmul.f32 %v2846, %v2855
          %v2882 = vmul.f32 %v2847, %v2855
          %v2883 = vmul.f32 %v2848, %v2855
          %v2884 = vmul.f32 %v2849, %v2855
          %v2885 = vmul.f32 %v2850, %v2855
          %v2886 = vmul.f32 %v2851, %v2855
          %v2887 = vmul.f32 %v2852, %v2855
          %v2888 = vmul.f32 %v2853, %v2855
          %v2890 = vperm.slane %v2635, 0
          %v2892 = vadd.f32 %v2857, %v2890
          %v2893 = vadd.f32 %v2858, %v2890
          %v2894 = vadd.f32 %v2859, %v2890
          %v2895 = vadd.f32 %v2860, %v2890
          %v2896 = vadd.f32 %v2861, %v2890
          %v2897 = vadd.f32 %v2862, %v2890
          %v2898 = vadd.f32 %v2863, %v2890
          %v2899 = vadd.f32 %v2864, %v2890
          %v2900 = vadd.f32 %v2865, %v2890
          %v2901 = vadd.f32 %v2866, %v2890
          %v2902 = vadd.f32 %v2867, %v2890
          %v2903 = vadd.f32 %v2868, %v2890
          %v2904 = vadd.f32 %v2869, %v2890
          %v2905 = vadd.f32 %v2870, %v2890
          %v2906 = vadd.f32 %v2871, %v2890
          %v2907 = vadd.f32 %v2872, %v2890
          %v2908 = vadd.f32 %v2873, %v2890
          %v2909 = vadd.f32 %v2874, %v2890
          %v2910 = vadd.f32 %v2875, %v2890
          %v2911 = vadd.f32 %v2876, %v2890
          %v2912 = vadd.f32 %v2877, %v2890
          %v2913 = vadd.f32 %v2878, %v2890
          %v2914 = vadd.f32 %v2879, %v2890
          %v2915 = vadd.f32 %v2880, %v2890
          %v2916 = vadd.f32 %v2881, %v2890
          %v2917 = vadd.f32 %v2882, %v2890
          %v2918 = vadd.f32 %v2883, %v2890
          %v2919 = vadd.f32 %v2884, %v2890
          %v2920 = vadd.f32 %v2885, %v2890
          %v2921 = vadd.f32 %v2886, %v2890
          %v2922 = vadd.f32 %v2887, %v2890
          %v2923 = vadd.f32 %v2888, %v2890
          %v2924 = vmax.f32 %v2892, 0.0
          %v2925 = vmax.f32 %v2893, 0.0
          %v2926 = vmax.f32 %v2894, 0.0
          %v2927 = vmax.f32 %v2895, 0.0
          %v2928 = vmax.f32 %v2896, 0.0
          %v2929 = vmax.f32 %v2897, 0.0
          %v2930 = vmax.f32 %v2898, 0.0
          %v2931 = vmax.f32 %v2899, 0.0
          %v2932 = vmax.f32 %v2900, 0.0
          %v2933 = vmax.f32 %v2901, 0.0
          %v2934 = vmax.f32 %v2902, 0.0
          %v2935 = vmax.f32 %v2903, 0.0
          %v2936 = vmax.f32 %v2904, 0.0
          %v2937 = vmax.f32 %v2905, 0.0
          %v2938 = vmax.f32 %v2906, 0.0
          %v2939 = vmax.f32 %v2907, 0.0
          %v2940 = vmax.f32 %v2908, 0.0
          %v2941 = vmax.f32 %v2909, 0.0
          %v2942 = vmax.f32 %v2910, 0.0
          %v2943 = vmax.f32 %v2911, 0.0
          %v2944 = vmax.f32 %v2912, 0.0
          %v2945 = vmax.f32 %v2913, 0.0
          %v2946 = vmax.f32 %v2914, 0.0
          %v2947 = vmax.f32 %v2915, 0.0
          %v2948 = vmax.f32 %v2916, 0.0
          %v2949 = vmax.f32 %v2917, 0.0
          %v2950 = vmax.f32 %v2918, 0.0
          %v2951 = vmax.f32 %v2919, 0.0
          %v2952 = vmax.f32 %v2920, 0.0
          %v2953 = vmax.f32 %v2921, 0.0
          %v2954 = vmax.f32 %v2922, 0.0
          %v2955 = vmax.f32 %v2923, 0.0
          %v2956 = vld [vmem:[#allocation10] sm:$0xff]
          %v2957 = vld [vmem:[#allocation10 + $0x8] sm:$0xff]
          %v2958 = vld [vmem:[#allocation10 + $0x10] sm:$0xff]
          %v2959 = vld [vmem:[#allocation10 + $0x18] sm:$0xff]
          %v2960 = vld [vmem:[#allocation10 + $0x20] sm:$0xff]
          %v2961 = vld [vmem:[#allocation10 + $0x28] sm:$0xff]
          %v2962 = vld [vmem:[#allocation10 + $0x30] sm:$0xff]
          %v2963 = vld [vmem:[#allocation10 + $0x38] sm:$0xff]
          %v2964 = vld [vmem:[#allocation10 + $0x40] sm:$0xff]
          %v2965 = vld [vmem:[#allocation10 + $0x48] sm:$0xff]
          %v2966 = vld [vmem:[#allocation10 + $0x50] sm:$0xff]
          %v2967 = vld [vmem:[#allocation10 + $0x58] sm:$0xff]
          %v2968 = vld [vmem:[#allocation10 + $0x60] sm:$0xff]
          %v2969 = vld [vmem:[#allocation10 + $0x68] sm:$0xff]
          %v2970 = vld [vmem:[#allocation10 + $0x70] sm:$0xff]
          %v2971 = vld [vmem:[#allocation10 + $0x78] sm:$0xff]
          %v2972 = vld [vmem:[%s8] sm:$0x1]
          %v2974 = vperm.slane %v2972, 0
          %2976 = vmatpush.msra.mxu0 %v2971
          %2977 = vmatpush.msra.mxu0 %v2970
          %2978 = vmatpush.msra.mxu0 %v2969
          %2979 = vmatpush.msra.mxu0 %v2968
          %2980 = vmatpush.msra.mxu0 %v2967
          %2981 = vmatpush.msra.mxu0 %v2966
          %2982 = vmatpush.msra.mxu0 %v2965
          %2983 = vmatpush.msra.mxu0 %v2964
          %2984 = vmatpush.msra.mxu0 %v2963
          %2985 = vmatpush.msra.mxu0 %v2962
          %2986 = vmatpush.msra.mxu0 %v2961
          %2987 = vmatpush.msra.mxu0 %v2960
          %2988 = vmatpush.msra.mxu0 %v2959
          %2989 = vmatpush.msra.mxu0 %v2958
          %2990 = vmatpush.msra.mxu0 %v2957
          %2991 = vmatpush.msra.mxu0 %v2956
          %2992 = vmatmul.f32.gmra.mxu0 %v2924
          %v2993 = vpop.f32.mrf.mxu0
          %v2994 = vadd.f32 %v2974, %v2993
          %2995 = vmatmul.f32.gmra.mxu0 %v2925
          %v2996 = vpop.f32.mrf.mxu0
          %v2997 = vadd.f32 %v2974, %v2996
          %2998 = vmatmul.f32.gmra.mxu0 %v2926
          %v2999 = vpop.f32.mrf.mxu0
          %v3000 = vadd.f32 %v2974, %v2999
          %3001 = vmatmul.f32.gmra.mxu0 %v2927
          %v3002 = vpop.f32.mrf.mxu0
          %v3003 = vadd.f32 %v2974, %v3002
          %3004 = vmatmul.f32.gmra.mxu0 %v2928
          %v3005 = vpop.f32.mrf.mxu0
          %v3006 = vadd.f32 %v2974, %v3005
          %3007 = vmatmul.f32.gmra.mxu0 %v2929
          %v3008 = vpop.f32.mrf.mxu0
          %v3009 = vadd.f32 %v2974, %v3008
          %3010 = vmatmul.f32.gmra.mxu0 %v2930
          %v3011 = vpop.f32.mrf.mxu0
          %v3012 = vadd.f32 %v2974, %v3011
          %3013 = vmatmul.f32.gmra.mxu0 %v2931
          %v3014 = vpop.f32.mrf.mxu0
          %v3015 = vadd.f32 %v2974, %v3014
          %3016 = vmatmul.f32.gmra.mxu0 %v2932
          %v3017 = vpop.f32.mrf.mxu0
          %v3018 = vadd.f32 %v2974, %v3017
          %3019 = vmatmul.f32.gmra.mxu0 %v2933
          %v3020 = vpop.f32.mrf.mxu0
          %v3021 = vadd.f32 %v2974, %v3020
          %3022 = vmatmul.f32.gmra.mxu0 %v2934
          %v3023 = vpop.f32.mrf.mxu0
          %v3024 = vadd.f32 %v2974, %v3023
          %3025 = vmatmul.f32.gmra.mxu0 %v2935
          %v3026 = vpop.f32.mrf.mxu0
          %v3027 = vadd.f32 %v2974, %v3026
          %3028 = vmatmul.f32.gmra.mxu0 %v2936
          %v3029 = vpop.f32.mrf.mxu0
          %v3030 = vadd.f32 %v2974, %v3029
          %3031 = vmatmul.f32.gmra.mxu0 %v2937
          %v3032 = vpop.f32.mrf.mxu0
          %v3033 = vadd.f32 %v2974, %v3032
          %3034 = vmatmul.f32.gmra.mxu0 %v2938
          %v3035 = vpop.f32.mrf.mxu0
          %v3036 = vadd.f32 %v2974, %v3035
          %3037 = vmatmul.f32.gmra.mxu0 %v2939
          %v3038 = vpop.f32.mrf.mxu0
          %v3039 = vadd.f32 %v2974, %v3038
          %3040 = vmatmul.f32.gmra.mxu0 %v2940
          %v3041 = vpop.f32.mrf.mxu0
          %v3042 = vadd.f32 %v2974, %v3041
          %3043 = vmatmul.f32.gmra.mxu0 %v2941
          %v3044 = vpop.f32.mrf.mxu0
          %v3045 = vadd.f32 %v2974, %v3044
          %3046 = vmatmul.f32.gmra.mxu0 %v2942
          %v3047 = vpop.f32.mrf.mxu0
          %v3048 = vadd.f32 %v2974, %v3047
          %3049 = vmatmul.f32.gmra.mxu0 %v2943
          %v3050 = vpop.f32.mrf.mxu0
          %v3051 = vadd.f32 %v2974, %v3050
          %3052 = vmatmul.f32.gmra.mxu0 %v2944
          %v3053 = vpop.f32.mrf.mxu0
          %v3054 = vadd.f32 %v2974, %v3053
          %3055 = vmatmul.f32.gmra.mxu0 %v2945
          %v3056 = vpop.f32.mrf.mxu0
          %v3057 = vadd.f32 %v2974, %v3056
          %3058 = vmatmul.f32.gmra.mxu0 %v2946
          %v3059 = vpop.f32.mrf.mxu0
          %v3060 = vadd.f32 %v2974, %v3059
          %3061 = vmatmul.f32.gmra.mxu0 %v2947
          %v3062 = vpop.f32.mrf.mxu0
          %v3063 = vadd.f32 %v2974, %v3062
          %3064 = vmatmul.f32.gmra.mxu0 %v2948
          %v3065 = vpop.f32.mrf.mxu0
          %v3066 = vadd.f32 %v2974, %v3065
          %3067 = vmatmul.f32.gmra.mxu0 %v2949
          %v3068 = vpop.f32.mrf.mxu0
          %v3069 = vadd.f32 %v2974, %v3068
          %3070 = vmatmul.f32.gmra.mxu0 %v2950
          %v3071 = vpop.f32.mrf.mxu0
          %v3072 = vadd.f32 %v2974, %v3071
          %3073 = vmatmul.f32.gmra.mxu0 %v2951
          %v3074 = vpop.f32.mrf.mxu0
          %v3075 = vadd.f32 %v2974, %v3074
          %3076 = vmatmul.f32.gmra.mxu0 %v2952
          %v3077 = vpop.f32.mrf.mxu0
          %v3078 = vadd.f32 %v2974, %v3077
          %3079 = vmatmul.f32.gmra.mxu0 %v2953
          %v3080 = vpop.f32.mrf.mxu0
          %v3081 = vadd.f32 %v2974, %v3080
          %3082 = vmatmul.f32.gmra.mxu0 %v2954
          %v3083 = vpop.f32.mrf.mxu0
          %v3084 = vadd.f32 %v2974, %v3083
          %3085 = vmatmul.f32.gmra.mxu0 %v2955
          %v3086 = vpop.f32.mrf.mxu0
          %v3087 = vadd.f32 %v2974, %v3086
          %3088 = vdwg.mxu0
          %v3089 = vmax.f32 %v2994, 0.0
          %v3090 = vmax.f32 %v2997, 0.0
          %v3091 = vmax.f32 %v3000, 0.0
          %v3092 = vmax.f32 %v3003, 0.0
          %v3093 = vmax.f32 %v3006, 0.0
          %v3094 = vmax.f32 %v3009, 0.0
          %v3095 = vmax.f32 %v3012, 0.0
          %v3096 = vmax.f32 %v3015, 0.0
          %v3097 = vmax.f32 %v3018, 0.0
          %v3098 = vmax.f32 %v3021, 0.0
          %v3099 = vmax.f32 %v3024, 0.0
          %v3100 = vmax.f32 %v3027, 0.0
          %v3101 = vmax.f32 %v3030, 0.0
          %v3102 = vmax.f32 %v3033, 0.0
          %v3103 = vmax.f32 %v3036, 0.0
          %v3104 = vmax.f32 %v3039, 0.0
          %v3105 = vmax.f32 %v3042, 0.0
          %v3106 = vmax.f32 %v3045, 0.0
          %v3107 = vmax.f32 %v3048, 0.0
          %v3108 = vmax.f32 %v3051, 0.0
          %v3109 = vmax.f32 %v3054, 0.0
          %v3110 = vmax.f32 %v3057, 0.0
          %v3111 = vmax.f32 %v3060, 0.0
          %v3112 = vmax.f32 %v3063, 0.0
          %v3113 = vmax.f32 %v3066, 0.0
          %v3114 = vmax.f32 %v3069, 0.0
          %v3115 = vmax.f32 %v3072, 0.0
          %v3116 = vmax.f32 %v3075, 0.0
          %v3117 = vmax.f32 %v3078, 0.0
          %v3118 = vmax.f32 %v3081, 0.0
          %v3119 = vmax.f32 %v3084, 0.0
          %v3120 = vmax.f32 %v3087, 0.0
          %v3121 = vld [vmem:[%s9] sm:$0x1]
          %v3122 = vld [vmem:[%s10] sm:$0x1]
          %v3123 = vmul.f32 %v3089, %v2570
          %v3124 = vmul.f32 %v3090, %v2571
          %v3125 = vmul.f32 %v3091, %v2572
          %v3126 = vmul.f32 %v3092, %v2573
          %v3127 = vmul.f32 %v3093, %v2574
          %v3128 = vmul.f32 %v3094, %v2575
          %v3129 = vmul.f32 %v3095, %v2576
          %v3130 = vmul.f32 %v3096, %v2577
          %v3131 = vmul.f32 %v3097, %v2578
          %v3132 = vmul.f32 %v3098, %v2579
          %v3133 = vmul.f32 %v3099, %v2580
          %v3134 = vmul.f32 %v3100, %v2581
          %v3135 = vmul.f32 %v3101, %v2582
          %v3136 = vmul.f32 %v3102, %v2583
          %v3137 = vmul.f32 %v3103, %v2584
          %v3138 = vmul.f32 %v3104, %v2585
          %v3139 = vmul.f32 %v3105, %v2586
          %v3140 = vmul.f32 %v3106, %v2587
          %v3141 = vmul.f32 %v3107, %v2588
          %v3142 = vmul.f32 %v3108, %v2589
          %v3143 = vmul.f32 %v3109, %v2590
          %v3144 = vmul.f32 %v3110, %v2591
          %v3145 = vmul.f32 %v3111, %v2592
          %v3146 = vmul.f32 %v3112, %v2593
          %v3147 = vmul.f32 %v3113, %v2594
          %v3148 = vmul.f32 %v3114, %v2595
          %v3149 = vmul.f32 %v3115, %v2596
          %v3150 = vmul.f32 %v3116, %v2597
          %v3151 = vmul.f32 %v3117, %v2598
          %v3152 = vmul.f32 %v3118, %v2599
          %v3153 = vmul.f32 %v3119, %v2600
          %v3154 = vmul.f32 %v3120, %v2601
          %v3155 = vadd.f32 %v3123, %v3124
          %v3156 = vadd.f32 %v3155, %v3125
          %v3157 = vadd.f32 %v3156, %v3126
          %v3158 = vadd.f32 %v3157, %v3127
          %v3159 = vadd.f32 %v3158, %v3128
          %v3160 = vadd.f32 %v3159, %v3129
          %v3161 = vadd.f32 %v3160, %v3130
          %v3162 = vadd.f32 %v3161, %v3131
          %v3163 = vadd.f32 %v3162, %v3132
          %v3164 = vadd.f32 %v3163, %v3133
          %v3165 = vadd.f32 %v3164, %v3134
          %v3166 = vadd.f32 %v3165, %v3135
          %v3167 = vadd.f32 %v3166, %v3136
          %v3168 = vadd.f32 %v3167, %v3137
          %v3169 = vadd.f32 %v3168, %v3138
          %v3170 = vadd.f32 %v3169, %v3139
          %v3171 = vadd.f32 %v3170, %v3140
          %v3172 = vadd.f32 %v3171, %v3141
          %v3173 = vadd.f32 %v3172, %v3142
          %v3174 = vadd.f32 %v3173, %v3143
          %v3175 = vadd.f32 %v3174, %v3144
          %v3176 = vadd.f32 %v3175, %v3145
          %v3177 = vadd.f32 %v3176, %v3146
          %v3178 = vadd.f32 %v3177, %v3147
          %v3179 = vadd.f32 %v3178, %v3148
          %v3180 = vadd.f32 %v3179, %v3149
          %v3181 = vadd.f32 %v3180, %v3150
          %v3182 = vadd.f32 %v3181, %v3151
          %v3183 = vadd.f32 %v3182, %v3152
          %v3184 = vadd.f32 %v3183, %v3153
          %v3185 = vadd.f32 %v3184, %v3154
          %v3186 = vrot.slane %v3185, 4
          %v3187 = vadd.f32 %v3185, %v3186
          %v3188 = vrot.slane %v3187, 2
          %v3189 = vadd.f32 %v3187, %v3188
          %v3190 = vrot.slane %v3189, 1
          %v3191 = vadd.f32 %v3189, %v3190
          %v3192 = vmul.f32 %v3123, %v3089
          %v3193 = vmul.f32 %v3124, %v3090
          %v3194 = vmul.f32 %v3125, %v3091
          %v3195 = vmul.f32 %v3126, %v3092
          %v3196 = vmul.f32 %v3127, %v3093
          %v3197 = vmul.f32 %v3128, %v3094
          %v3198 = vmul.f32 %v3129, %v3095
          %v3199 = vmul.f32 %v3130, %v3096
          %v3200 = vmul.f32 %v3131, %v3097
          %v3201 = vmul.f32 %v3132, %v3098
          %v3202 = vmul.f32 %v3133, %v3099
          %v3203 = vmul.f32 %v3134, %v3100
          %v3204 = vmul.f32 %v3135, %v3101
          %v3205 = vmul.f32 %v3136, %v3102
          %v3206 = vmul.f32 %v3137, %v3103
          %v3207 = vmul.f32 %v3138, %v3104
          %v3208 = vmul.f32 %v3139, %v3105
          %v3209 = vmul.f32 %v3140, %v3106
          %v3210 = vmul.f32 %v3141, %v3107
          %v3211 = vmul.f32 %v3142, %v3108
          %v3212 = vmul.f32 %v3143, %v3109
          %v3213 = vmul.f32 %v3144, %v3110
          %v3214 = vmul.f32 %v3145, %v3111
          %v3215 = vmul.f32 %v3146, %v3112
          %v3216 = vmul.f32 %v3147, %v3113
          %v3217 = vmul.f32 %v3148, %v3114
          %v3218 = vmul.f32 %v3149, %v3115
          %v3219 = vmul.f32 %v3150, %v3116
          %v3220 = vmul.f32 %v3151, %v3117
          %v3221 = vmul.f32 %v3152, %v3118
          %v3222 = vmul.f32 %v3153, %v3119
          %v3223 = vmul.f32 %v3154, %v3120
          %v3224 = vadd.f32 %v3192, %v3193
          %v3225 = vadd.f32 %v3224, %v3194
          %v3226 = vadd.f32 %v3225, %v3195
          %v3227 = vadd.f32 %v3226, %v3196
          %v3228 = vadd.f32 %v3227, %v3197
          %v3229 = vadd.f32 %v3228, %v3198
          %v3230 = vadd.f32 %v3229, %v3199
          %v3231 = vadd.f32 %v3230, %v3200
          %v3232 = vadd.f32 %v3231, %v3201
          %v3233 = vadd.f32 %v3232, %v3202
          %v3234 = vadd.f32 %v3233, %v3203
          %v3235 = vadd.f32 %v3234, %v3204
          %v3236 = vadd.f32 %v3235, %v3205
          %v3237 = vadd.f32 %v3236, %v3206
          %v3238 = vadd.f32 %v3237, %v3207
          %v3239 = vadd.f32 %v3238, %v3208
          %v3240 = vadd.f32 %v3239, %v3209
          %v3241 = vadd.f32 %v3240, %v3210
          %v3242 = vadd.f32 %v3241, %v3211
          %v3243 = vadd.f32 %v3242, %v3212
          %v3244 = vadd.f32 %v3243, %v3213
          %v3245 = vadd.f32 %v3244, %v3214
          %v3246 = vadd.f32 %v3245, %v3215
          %v3247 = vadd.f32 %v3246, %v3216
          %v3248 = vadd.f32 %v3247, %v3217
          %v3249 = vadd.f32 %v3248, %v3218
          %v3250 = vadd.f32 %v3249, %v3219
          %v3251 = vadd.f32 %v3250, %v3220
          %v3252 = vadd.f32 %v3251, %v3221
          %v3253 = vadd.f32 %v3252, %v3222
          %v3254 = vadd.f32 %v3253, %v3223
          %v3255 = vrot.slane %v3254, 4
          %v3256 = vadd.f32 %v3254, %v3255
          %v3257 = vrot.slane %v3256, 2
          %v3258 = vadd.f32 %v3256, %v3257
          %v3259 = vrot.slane %v3258, 1
          %v3260 = vadd.f32 %v3258, %v3259
          %v3261 = vmul.f32 %v3191, 0.0625
          %v3262 = vmul.f32 %v3260, 0.0625
          %v3263 = vmul.f32 %v3261, %v3261
          %v3264 = vsub.f32 %v3262, %v3263
          %v3265 = vmax.f32 %v3264, 0.0
          %v3266 = vsub.f32 %v3089, %v3261
          %v3267 = vsub.f32 %v3090, %v3261
          %v3268 = vsub.f32 %v3091, %v3261
          %v3269 = vsub.f32 %v3092, %v3261
          %v3270 = vsub.f32 %v3093, %v3261
          %v3271 = vsub.f32 %v3094, %v3261
          %v3272 = vsub.f32 %v3095, %v3261
          %v3273 = vsub.f32 %v3096, %v3261
          %v3274 = vsub.f32 %v3097, %v3261
          %v3275 = vsub.f32 %v3098, %v3261
          %v3276 = vsub.f32 %v3099, %v3261
          %v3277 = vsub.f32 %v3100, %v3261
          %v3278 = vsub.f32 %v3101, %v3261
          %v3279 = vsub.f32 %v3102, %v3261
          %v3280 = vsub.f32 %v3103, %v3261
          %v3281 = vsub.f32 %v3104, %v3261
          %v3282 = vsub.f32 %v3105, %v3261
          %v3283 = vsub.f32 %v3106, %v3261
          %v3284 = vsub.f32 %v3107, %v3261
          %v3285 = vsub.f32 %v3108, %v3261
          %v3286 = vsub.f32 %v3109, %v3261
          %v3287 = vsub.f32 %v3110, %v3261
          %v3288 = vsub.f32 %v3111, %v3261
          %v3289 = vsub.f32 %v3112, %v3261
          %v3290 = vsub.f32 %v3113, %v3261
          %v3291 = vsub.f32 %v3114, %v3261
          %v3292 = vsub.f32 %v3115, %v3261
          %v3293 = vsub.f32 %v3116, %v3261
          %v3294 = vsub.f32 %v3117, %v3261
          %v3295 = vsub.f32 %v3118, %v3261
          %v3296 = vsub.f32 %v3119, %v3261
          %v3297 = vsub.f32 %v3120, %v3261
          %v3298 = vadd.f32 %v3265, 1e-05
          %v3299 = vrsqrt.pop %v3298
          %v3300 = vmul.f32 %v3299, %v3298
          %v3301 = vmul.f32 %v3300, %v3299
          %v3302 = vmul.f32 0.5, %v3301
          %v3303 = vsub.f32 1.5, %v3302
          %v3304 = vmul.f32 %v3299, %v3303
          %vm3305 = vweird.f32 %v3298
          %vm3306 = vweird.f32 %v3299
          %vm3307 = vmor %vm3305, %vm3306
          %v3308 = vsel %vm3307, %v3299, %v3304
          %v3309 = vmul.f32 %v3266, %v3308
          %v3310 = vmul.f32 %v3267, %v3308
          %v3311 = vmul.f32 %v3268, %v3308
          %v3312 = vmul.f32 %v3269, %v3308
          %v3313 = vmul.f32 %v3270, %v3308
          %v3314 = vmul.f32 %v3271, %v3308
          %v3315 = vmul.f32 %v3272, %v3308
          %v3316 = vmul.f32 %v3273, %v3308
          %v3317 = vmul.f32 %v3274, %v3308
          %v3318 = vmul.f32 %v3275, %v3308
          %v3319 = vmul.f32 %v3276, %v3308
          %v3320 = vmul.f32 %v3277, %v3308
          %v3321 = vmul.f32 %v3278, %v3308
          %v3322 = vmul.f32 %v3279, %v3308
          %v3323 = vmul.f32 %v3280, %v3308
          %v3324 = vmul.f32 %v3281, %v3308
          %v3325 = vmul.f32 %v3282, %v3308
          %v3326 = vmul.f32 %v3283, %v3308
          %v3327 = vmul.f32 %v3284, %v3308
          %v3328 = vmul.f32 %v3285, %v3308
          %v3329 = vmul.f32 %v3286, %v3308
          %v3330 = vmul.f32 %v3287, %v3308
          %v3331 = vmul.f32 %v3288, %v3308
          %v3332 = vmul.f32 %v3289, %v3308
          %v3333 = vmul.f32 %v3290, %v3308
          %v3334 = vmul.f32 %v3291, %v3308
          %v3335 = vmul.f32 %v3292, %v3308
          %v3336 = vmul.f32 %v3293, %v3308
          %v3337 = vmul.f32 %v3294, %v3308
          %v3338 = vmul.f32 %v3295, %v3308
          %v3339 = vmul.f32 %v3296, %v3308
          %v3340 = vmul.f32 %v3297, %v3308
          %v3342 = vperm.slane %v3121, 0
          %v3344 = vmul.f32 %v3309, %v3342
          %v3345 = vmul.f32 %v3310, %v3342
          %v3346 = vmul.f32 %v3311, %v3342
          %v3347 = vmul.f32 %v3312, %v3342
          %v3348 = vmul.f32 %v3313, %v3342
          %v3349 = vmul.f32 %v3314, %v3342
          %v3350 = vmul.f32 %v3315, %v3342
          %v3351 = vmul.f32 %v3316, %v3342
          %v3352 = vmul.f32 %v3317, %v3342
          %v3353 = vmul.f32 %v3318, %v3342
          %v3354 = vmul.f32 %v3319, %v3342
          %v3355 = vmul.f32 %v3320, %v3342
          %v3356 = vmul.f32 %v3321, %v3342
          %v3357 = vmul.f32 %v3322, %v3342
          %v3358 = vmul.f32 %v3323, %v3342
          %v3359 = vmul.f32 %v3324, %v3342
          %v3360 = vmul.f32 %v3325, %v3342
          %v3361 = vmul.f32 %v3326, %v3342
          %v3362 = vmul.f32 %v3327, %v3342
          %v3363 = vmul.f32 %v3328, %v3342
          %v3364 = vmul.f32 %v3329, %v3342
          %v3365 = vmul.f32 %v3330, %v3342
          %v3366 = vmul.f32 %v3331, %v3342
          %v3367 = vmul.f32 %v3332, %v3342
          %v3368 = vmul.f32 %v3333, %v3342
          %v3369 = vmul.f32 %v3334, %v3342
          %v3370 = vmul.f32 %v3335, %v3342
          %v3371 = vmul.f32 %v3336, %v3342
          %v3372 = vmul.f32 %v3337, %v3342
          %v3373 = vmul.f32 %v3338, %v3342
          %v3374 = vmul.f32 %v3339, %v3342
          %v3375 = vmul.f32 %v3340, %v3342
          %v3377 = vperm.slane %v3122, 0
          %v3379 = vadd.f32 %v3344, %v3377
          %v3380 = vadd.f32 %v3345, %v3377
          %v3381 = vadd.f32 %v3346, %v3377
          %v3382 = vadd.f32 %v3347, %v3377
          %v3383 = vadd.f32 %v3348, %v3377
          %v3384 = vadd.f32 %v3349, %v3377
          %v3385 = vadd.f32 %v3350, %v3377
          %v3386 = vadd.f32 %v3351, %v3377
          %v3387 = vadd.f32 %v3352, %v3377
          %v3388 = vadd.f32 %v3353, %v3377
          %v3389 = vadd.f32 %v3354, %v3377
          %v3390 = vadd.f32 %v3355, %v3377
          %v3391 = vadd.f32 %v3356, %v3377
          %v3392 = vadd.f32 %v3357, %v3377
          %v3393 = vadd.f32 %v3358, %v3377
          %v3394 = vadd.f32 %v3359, %v3377
          %v3395 = vadd.f32 %v3360, %v3377
          %v3396 = vadd.f32 %v3361, %v3377
          %v3397 = vadd.f32 %v3362, %v3377
          %v3398 = vadd.f32 %v3363, %v3377
          %v3399 = vadd.f32 %v3364, %v3377
          %v3400 = vadd.f32 %v3365, %v3377
          %v3401 = vadd.f32 %v3366, %v3377
          %v3402 = vadd.f32 %v3367, %v3377
          %v3403 = vadd.f32 %v3368, %v3377
          %v3404 = vadd.f32 %v3369, %v3377
          %v3405 = vadd.f32 %v3370, %v3377
          %v3406 = vadd.f32 %v3371, %v3377
          %v3407 = vadd.f32 %v3372, %v3377
          %v3408 = vadd.f32 %v3373, %v3377
          %v3409 = vadd.f32 %v3374, %v3377
          %v3410 = vadd.f32 %v3375, %v3377
          %v3411 = vld [vmem:[#allocation12] sm:$0xff]
          %v3412 = vld [vmem:[#allocation12 + $0x8] sm:$0xff]
          %v3413 = vld [vmem:[#allocation12 + $0x10] sm:$0xff]
          %v3414 = vld [vmem:[#allocation12 + $0x18] sm:$0xff]
          %v3415 = vld [vmem:[#allocation12 + $0x20] sm:$0xff]
          %v3416 = vld [vmem:[#allocation12 + $0x28] sm:$0xff]
          %v3417 = vld [vmem:[#allocation12 + $0x30] sm:$0xff]
          %v3418 = vld [vmem:[#allocation12 + $0x38] sm:$0xff]
          %v3419 = vld [vmem:[#allocation12 + $0x40] sm:$0xff]
          %v3420 = vld [vmem:[#allocation12 + $0x48] sm:$0xff]
          %v3421 = vld [vmem:[#allocation12 + $0x50] sm:$0xff]
          %v3422 = vld [vmem:[#allocation12 + $0x58] sm:$0xff]
          %v3423 = vld [vmem:[#allocation12 + $0x60] sm:$0xff]
          %v3424 = vld [vmem:[#allocation12 + $0x68] sm:$0xff]
          %v3425 = vld [vmem:[#allocation12 + $0x70] sm:$0xff]
          %v3426 = vld [vmem:[#allocation12 + $0x78] sm:$0xff]
          %v3427 = vld [vmem:[%s12] sm:$0x1]
          %v3429 = vperm.slane %v3427, 0
          %3431 = vmatpush.msra.mxu0 %v3426
          %3432 = vmatpush.msra.mxu0 %v3425
          %3433 = vmatpush.msra.mxu0 %v3424
          %3434 = vmatpush.msra.mxu0 %v3423
          %3435 = vmatpush.msra.mxu0 %v3422
          %3436 = vmatpush.msra.mxu0 %v3421
          %3437 = vmatpush.msra.mxu0 %v3420
          %3438 = vmatpush.msra.mxu0 %v3419
          %3439 = vmatpush.msra.mxu0 %v3418
          %3440 = vmatpush.msra.mxu0 %v3417
          %3441 = vmatpush.msra.mxu0 %v3416
          %3442 = vmatpush.msra.mxu0 %v3415
          %3443 = vmatpush.msra.mxu0 %v3414
          %3444 = vmatpush.msra.mxu0 %v3413
          %3445 = vmatpush.msra.mxu0 %v3412
          %3446 = vmatpush.msra.mxu0 %v3411
          %3447 = vmatmul.f32.gmra.mxu0 %v3379
          %v3448 = vpop.f32.mrf.mxu0
          %v3449 = vadd.f32 %v3429, %v3448
          %3450 = vmatmul.f32.gmra.mxu0 %v3380
          %v3451 = vpop.f32.mrf.mxu0
          %v3452 = vadd.f32 %v3429, %v3451
          %3453 = vmatmul.f32.gmra.mxu0 %v3381
          %v3454 = vpop.f32.mrf.mxu0
          %v3455 = vadd.f32 %v3429, %v3454
          %3456 = vmatmul.f32.gmra.mxu0 %v3382
          %v3457 = vpop.f32.mrf.mxu0
          %v3458 = vadd.f32 %v3429, %v3457
          %3459 = vmatmul.f32.gmra.mxu0 %v3383
          %v3460 = vpop.f32.mrf.mxu0
          %v3461 = vadd.f32 %v3429, %v3460
          %3462 = vmatmul.f32.gmra.mxu0 %v3384
          %v3463 = vpop.f32.mrf.mxu0
          %v3464 = vadd.f32 %v3429, %v3463
          %3465 = vmatmul.f32.gmra.mxu0 %v3385
          %v3466 = vpop.f32.mrf.mxu0
          %v3467 = vadd.f32 %v3429, %v3466
          %3468 = vmatmul.f32.gmra.mxu0 %v3386
          %v3469 = vpop.f32.mrf.mxu0
          %v3470 = vadd.f32 %v3429, %v3469
          %3471 = vmatmul.f32.gmra.mxu0 %v3387
          %v3472 = vpop.f32.mrf.mxu0
          %v3473 = vadd.f32 %v3429, %v3472
          %3474 = vmatmul.f32.gmra.mxu0 %v3388
          %v3475 = vpop.f32.mrf.mxu0
          %v3476 = vadd.f32 %v3429, %v3475
          %3477 = vmatmul.f32.gmra.mxu0 %v3389
          %v3478 = vpop.f32.mrf.mxu0
          %v3479 = vadd.f32 %v3429, %v3478
          %3480 = vmatmul.f32.gmra.mxu0 %v3390
          %v3481 = vpop.f32.mrf.mxu0
          %v3482 = vadd.f32 %v3429, %v3481
          %3483 = vmatmul.f32.gmra.mxu0 %v3391
          %v3484 = vpop.f32.mrf.mxu0
          %v3485 = vadd.f32 %v3429, %v3484
          %3486 = vmatmul.f32.gmra.mxu0 %v3392
          %v3487 = vpop.f32.mrf.mxu0
          %v3488 = vadd.f32 %v3429, %v3487
          %3489 = vmatmul.f32.gmra.mxu0 %v3393
          %v3490 = vpop.f32.mrf.mxu0
          %v3491 = vadd.f32 %v3429, %v3490
          %3492 = vmatmul.f32.gmra.mxu0 %v3394
          %v3493 = vpop.f32.mrf.mxu0
          %v3494 = vadd.f32 %v3429, %v3493
          %3495 = vmatmul.f32.gmra.mxu0 %v3395
          %v3496 = vpop.f32.mrf.mxu0
          %v3497 = vadd.f32 %v3429, %v3496
          %3498 = vmatmul.f32.gmra.mxu0 %v3396
          %v3499 = vpop.f32.mrf.mxu0
          %v3500 = vadd.f32 %v3429, %v3499
          %3501 = vmatmul.f32.gmra.mxu0 %v3397
          %v3502 = vpop.f32.mrf.mxu0
          %v3503 = vadd.f32 %v3429, %v3502
          %3504 = vmatmul.f32.gmra.mxu0 %v3398
          %v3505 = vpop.f32.mrf.mxu0
          %v3506 = vadd.f32 %v3429, %v3505
          %3507 = vmatmul.f32.gmra.mxu0 %v3399
          %v3508 = vpop.f32.mrf.mxu0
          %v3509 = vadd.f32 %v3429, %v3508
          %3510 = vmatmul.f32.gmra.mxu0 %v3400
          %v3511 = vpop.f32.mrf.mxu0
          %v3512 = vadd.f32 %v3429, %v3511
          %3513 = vmatmul.f32.gmra.mxu0 %v3401
          %v3514 = vpop.f32.mrf.mxu0
          %v3515 = vadd.f32 %v3429, %v3514
          %3516 = vmatmul.f32.gmra.mxu0 %v3402
          %v3517 = vpop.f32.mrf.mxu0
          %v3518 = vadd.f32 %v3429, %v3517
          %3519 = vmatmul.f32.gmra.mxu0 %v3403
          %v3520 = vpop.f32.mrf.mxu0
          %v3521 = vadd.f32 %v3429, %v3520
          %3522 = vmatmul.f32.gmra.mxu0 %v3404
          %v3523 = vpop.f32.mrf.mxu0
          %v3524 = vadd.f32 %v3429, %v3523
          %3525 = vmatmul.f32.gmra.mxu0 %v3405
          %v3526 = vpop.f32.mrf.mxu0
          %v3527 = vadd.f32 %v3429, %v3526
          %3528 = vmatmul.f32.gmra.mxu0 %v3406
          %v3529 = vpop.f32.mrf.mxu0
          %v3530 = vadd.f32 %v3429, %v3529
          %3531 = vmatmul.f32.gmra.mxu0 %v3407
          %v3532 = vpop.f32.mrf.mxu0
          %v3533 = vadd.f32 %v3429, %v3532
          %3534 = vmatmul.f32.gmra.mxu0 %v3408
          %v3535 = vpop.f32.mrf.mxu0
          %v3536 = vadd.f32 %v3429, %v3535
          %3537 = vmatmul.f32.gmra.mxu0 %v3409
          %v3538 = vpop.f32.mrf.mxu0
          %v3539 = vadd.f32 %v3429, %v3538
          %3540 = vmatmul.f32.gmra.mxu0 %v3410
          %v3541 = vpop.f32.mrf.mxu0
          %v3542 = vadd.f32 %v3429, %v3541
          %3543 = vdwg.mxu0
          %v3544 = vlaneseq
          %v3545 = vand.u32 %v3544, 127
          %vm3546 = vcmp.lt.s32.totalorder %v3545, 4
          %v3547 = vsel %vm3546, %v3449, -1e+30
          %v3548 = vsel %vm3546, %v3452, -1e+30
          %v3549 = vsel %vm3546, %v3455, -1e+30
          %v3550 = vsel %vm3546, %v3458, -1e+30
          %v3551 = vsel %vm3546, %v3461, -1e+30
          %v3552 = vsel %vm3546, %v3464, -1e+30
          %v3553 = vsel %vm3546, %v3467, -1e+30
          %v3554 = vsel %vm3546, %v3470, -1e+30
          %v3555 = vsel %vm3546, %v3473, -1e+30
          %v3556 = vsel %vm3546, %v3476, -1e+30
          %v3557 = vsel %vm3546, %v3479, -1e+30
          %v3558 = vsel %vm3546, %v3482, -1e+30
          %v3559 = vsel %vm3546, %v3485, -1e+30
          %v3560 = vsel %vm3546, %v3488, -1e+30
          %v3561 = vsel %vm3546, %v3491, -1e+30
          %v3562 = vsel %vm3546, %v3494, -1e+30
          %v3563 = vsel %vm3546, %v3497, -1e+30
          %v3564 = vsel %vm3546, %v3500, -1e+30
          %v3565 = vsel %vm3546, %v3503, -1e+30
          %v3566 = vsel %vm3546, %v3506, -1e+30
          %v3567 = vsel %vm3546, %v3509, -1e+30
          %v3568 = vsel %vm3546, %v3512, -1e+30
          %v3569 = vsel %vm3546, %v3515, -1e+30
          %v3570 = vsel %vm3546, %v3518, -1e+30
          %v3571 = vsel %vm3546, %v3521, -1e+30
          %v3572 = vsel %vm3546, %v3524, -1e+30
          %v3573 = vsel %vm3546, %v3527, -1e+30
          %v3574 = vsel %vm3546, %v3530, -1e+30
          %v3575 = vsel %vm3546, %v3533, -1e+30
          %v3576 = vsel %vm3546, %v3536, -1e+30
          %v3577 = vsel %vm3546, %v3539, -1e+30
          %v3578 = vsel %vm3546, %v3542, -1e+30
          %3579 = vmax.xlane.f32.xlu0 %v3547
          %v3580 = vpop.xlane.xlu0 %3579
          %3581 = vmax.xlane.f32.xlu0 %v3548
          %v3582 = vpop.xlane.xlu0 %3581
          %3583 = vmax.xlane.f32.xlu0 %v3549
          %v3584 = vpop.xlane.xlu0 %3583
          %3585 = vmax.xlane.f32.xlu0 %v3550
          %v3586 = vpop.xlane.xlu0 %3585
          %3587 = vmax.xlane.f32.xlu0 %v3551
          %v3588 = vpop.xlane.xlu0 %3587
          %3589 = vmax.xlane.f32.xlu0 %v3552
          %v3590 = vpop.xlane.xlu0 %3589
          %3591 = vmax.xlane.f32.xlu0 %v3553
          %v3592 = vpop.xlane.xlu0 %3591
          %3593 = vmax.xlane.f32.xlu0 %v3554
          %v3594 = vpop.xlane.xlu0 %3593
          %3595 = vmax.xlane.f32.xlu0 %v3555
          %v3596 = vpop.xlane.xlu0 %3595
          %3597 = vmax.xlane.f32.xlu0 %v3556
          %v3598 = vpop.xlane.xlu0 %3597
          %3599 = vmax.xlane.f32.xlu0 %v3557
          %v3600 = vpop.xlane.xlu0 %3599
          %3601 = vmax.xlane.f32.xlu0 %v3558
          %v3602 = vpop.xlane.xlu0 %3601
          %3603 = vmax.xlane.f32.xlu0 %v3559
          %v3604 = vpop.xlane.xlu0 %3603
          %3605 = vmax.xlane.f32.xlu0 %v3560
          %v3606 = vpop.xlane.xlu0 %3605
          %3607 = vmax.xlane.f32.xlu0 %v3561
          %v3608 = vpop.xlane.xlu0 %3607
          %3609 = vmax.xlane.f32.xlu0 %v3562
          %v3610 = vpop.xlane.xlu0 %3609
          %3611 = vmax.xlane.f32.xlu0 %v3563
          %v3612 = vpop.xlane.xlu0 %3611
          %3613 = vmax.xlane.f32.xlu0 %v3564
          %v3614 = vpop.xlane.xlu0 %3613
          %3615 = vmax.xlane.f32.xlu0 %v3565
          %v3616 = vpop.xlane.xlu0 %3615
          %3617 = vmax.xlane.f32.xlu0 %v3566
          %v3618 = vpop.xlane.xlu0 %3617
          %3619 = vmax.xlane.f32.xlu0 %v3567
          %v3620 = vpop.xlane.xlu0 %3619
          %3621 = vmax.xlane.f32.xlu0 %v3568
          %v3622 = vpop.xlane.xlu0 %3621
          %3623 = vmax.xlane.f32.xlu0 %v3569
          %v3624 = vpop.xlane.xlu0 %3623
          %3625 = vmax.xlane.f32.xlu0 %v3570
          %v3626 = vpop.xlane.xlu0 %3625
          %3627 = vmax.xlane.f32.xlu0 %v3571
          %v3628 = vpop.xlane.xlu0 %3627
          %3629 = vmax.xlane.f32.xlu0 %v3572
          %v3630 = vpop.xlane.xlu0 %3629
          %3631 = vmax.xlane.f32.xlu0 %v3573
          %v3632 = vpop.xlane.xlu0 %3631
          %3633 = vmax.xlane.f32.xlu0 %v3574
          %v3634 = vpop.xlane.xlu0 %3633
          %3635 = vmax.xlane.f32.xlu0 %v3575
          %v3636 = vpop.xlane.xlu0 %3635
          %3637 = vmax.xlane.f32.xlu0 %v3576
          %v3638 = vpop.xlane.xlu0 %3637
          %3639 = vmax.xlane.f32.xlu0 %v3577
          %v3640 = vpop.xlane.xlu0 %3639
          %3641 = vmax.xlane.f32.xlu0 %v3578
          %v3642 = vpop.xlane.xlu0 %3641
          %v3643 = vsub.f32 %v3547, %v3580
          %v3644 = vsub.f32 %v3548, %v3582
          %v3645 = vsub.f32 %v3549, %v3584
          %v3646 = vsub.f32 %v3550, %v3586
          %v3647 = vsub.f32 %v3551, %v3588
          %v3648 = vsub.f32 %v3552, %v3590
          %v3649 = vsub.f32 %v3553, %v3592
          %v3650 = vsub.f32 %v3554, %v3594
          %v3651 = vsub.f32 %v3555, %v3596
          %v3652 = vsub.f32 %v3556, %v3598
          %v3653 = vsub.f32 %v3557, %v3600
          %v3654 = vsub.f32 %v3558, %v3602
          %v3655 = vsub.f32 %v3559, %v3604
          %v3656 = vsub.f32 %v3560, %v3606
          %v3657 = vsub.f32 %v3561, %v3608
          %v3658 = vsub.f32 %v3562, %v3610
          %v3659 = vsub.f32 %v3563, %v3612
          %v3660 = vsub.f32 %v3564, %v3614
          %v3661 = vsub.f32 %v3565, %v3616
          %v3662 = vsub.f32 %v3566, %v3618
          %v3663 = vsub.f32 %v3567, %v3620
          %v3664 = vsub.f32 %v3568, %v3622
          %v3665 = vsub.f32 %v3569, %v3624
          %v3666 = vsub.f32 %v3570, %v3626
          %v3667 = vsub.f32 %v3571, %v3628
          %v3668 = vsub.f32 %v3572, %v3630
          %v3669 = vsub.f32 %v3573, %v3632
          %v3670 = vsub.f32 %v3574, %v3634
          %v3671 = vsub.f32 %v3575, %v3636
          %v3672 = vsub.f32 %v3576, %v3638
          %v3673 = vsub.f32 %v3577, %v3640
          %v3674 = vsub.f32 %v3578, %v3642
          %v3675 = vmul.f32 %v3643, 1.442695
          %v3676 = vpow.pop %v3675
          %v3677 = vmul.f32 %v3644, 1.442695
          %v3678 = vpow.pop %v3677
          %v3679 = vmul.f32 %v3645, 1.442695
          %v3680 = vpow.pop %v3679
          %v3681 = vmul.f32 %v3646, 1.442695
          %v3682 = vpow.pop %v3681
          %v3683 = vmul.f32 %v3647, 1.442695
          %v3684 = vpow.pop %v3683
          %v3685 = vmul.f32 %v3648, 1.442695
          %v3686 = vpow.pop %v3685
          %v3687 = vmul.f32 %v3649, 1.442695
          %v3688 = vpow.pop %v3687
          %v3689 = vmul.f32 %v3650, 1.442695
          %v3690 = vpow.pop %v3689
          %v3691 = vmul.f32 %v3651, 1.442695
          %v3692 = vpow.pop %v3691
          %v3693 = vmul.f32 %v3652, 1.442695
          %v3694 = vpow.pop %v3693
          %v3695 = vmul.f32 %v3653, 1.442695
          %v3696 = vpow.pop %v3695
          %v3697 = vmul.f32 %v3654, 1.442695
          %v3698 = vpow.pop %v3697
          %v3699 = vmul.f32 %v3655, 1.442695
          %v3700 = vpow.pop %v3699
          %v3701 = vmul.f32 %v3656, 1.442695
          %v3702 = vpow.pop %v3701
          %v3703 = vmul.f32 %v3657, 1.442695
          %v3704 = vpow.pop %v3703
          %v3705 = vmul.f32 %v3658, 1.442695
          %v3706 = vpow.pop %v3705
          %v3707 = vmul.f32 %v3659, 1.442695
          %v3708 = vpow.pop %v3707
          %v3709 = vmul.f32 %v3660, 1.442695
          %v3710 = vpow.pop %v3709
          %v3711 = vmul.f32 %v3661, 1.442695
          %v3712 = vpow.pop %v3711
          %v3713 = vmul.f32 %v3662, 1.442695
          %v3714 = vpow.pop %v3713
          %v3715 = vmul.f32 %v3663, 1.442695
          %v3716 = vpow.pop %v3715
          %v3717 = vmul.f32 %v3664, 1.442695
          %v3718 = vpow.pop %v3717
          %v3719 = vmul.f32 %v3665, 1.442695
          %v3720 = vpow.pop %v3719
          %v3721 = vmul.f32 %v3666, 1.442695
          %v3722 = vpow.pop %v3721
          %v3723 = vmul.f32 %v3667, 1.442695
          %v3724 = vpow.pop %v3723
          %v3725 = vmul.f32 %v3668, 1.442695
          %v3726 = vpow.pop %v3725
          %v3727 = vmul.f32 %v3669, 1.442695
          %v3728 = vpow.pop %v3727
          %v3729 = vmul.f32 %v3670, 1.442695
          %v3730 = vpow.pop %v3729
          %v3731 = vmul.f32 %v3671, 1.442695
          %v3732 = vpow.pop %v3731
          %v3733 = vmul.f32 %v3672, 1.442695
          %v3734 = vpow.pop %v3733
          %v3735 = vmul.f32 %v3673, 1.442695
          %v3736 = vpow.pop %v3735
          %v3737 = vmul.f32 %v3674, 1.442695
          %v3738 = vpow.pop %v3737
          %3739 = vadd.xlane.f32.xlu0 %v3676
          %v3740 = vpop.xlane.xlu0 %3739
          %3741 = vadd.xlane.f32.xlu0 %v3678
          %v3742 = vpop.xlane.xlu0 %3741
          %3743 = vadd.xlane.f32.xlu0 %v3680
          %v3744 = vpop.xlane.xlu0 %3743
          %3745 = vadd.xlane.f32.xlu0 %v3682
          %v3746 = vpop.xlane.xlu0 %3745
          %3747 = vadd.xlane.f32.xlu0 %v3684
          %v3748 = vpop.xlane.xlu0 %3747
          %3749 = vadd.xlane.f32.xlu0 %v3686
          %v3750 = vpop.xlane.xlu0 %3749
          %3751 = vadd.xlane.f32.xlu0 %v3688
          %v3752 = vpop.xlane.xlu0 %3751
          %3753 = vadd.xlane.f32.xlu0 %v3690
          %v3754 = vpop.xlane.xlu0 %3753
          %3755 = vadd.xlane.f32.xlu0 %v3692
          %v3756 = vpop.xlane.xlu0 %3755
          %3757 = vadd.xlane.f32.xlu0 %v3694
          %v3758 = vpop.xlane.xlu0 %3757
          %3759 = vadd.xlane.f32.xlu0 %v3696
          %v3760 = vpop.xlane.xlu0 %3759
          %3761 = vadd.xlane.f32.xlu0 %v3698
          %v3762 = vpop.xlane.xlu0 %3761
          %3763 = vadd.xlane.f32.xlu0 %v3700
          %v3764 = vpop.xlane.xlu0 %3763
          %3765 = vadd.xlane.f32.xlu0 %v3702
          %v3766 = vpop.xlane.xlu0 %3765
          %3767 = vadd.xlane.f32.xlu0 %v3704
          %v3768 = vpop.xlane.xlu0 %3767
          %3769 = vadd.xlane.f32.xlu0 %v3706
          %v3770 = vpop.xlane.xlu0 %3769
          %3771 = vadd.xlane.f32.xlu0 %v3708
          %v3772 = vpop.xlane.xlu0 %3771
          %3773 = vadd.xlane.f32.xlu0 %v3710
          %v3774 = vpop.xlane.xlu0 %3773
          %3775 = vadd.xlane.f32.xlu0 %v3712
          %v3776 = vpop.xlane.xlu0 %3775
          %3777 = vadd.xlane.f32.xlu0 %v3714
          %v3778 = vpop.xlane.xlu0 %3777
          %3779 = vadd.xlane.f32.xlu0 %v3716
          %v3780 = vpop.xlane.xlu0 %3779
          %3781 = vadd.xlane.f32.xlu0 %v3718
          %v3782 = vpop.xlane.xlu0 %3781
          %3783 = vadd.xlane.f32.xlu0 %v3720
          %v3784 = vpop.xlane.xlu0 %3783
          %3785 = vadd.xlane.f32.xlu0 %v3722
          %v3786 = vpop.xlane.xlu0 %3785
          %3787 = vadd.xlane.f32.xlu0 %v3724
          %v3788 = vpop.xlane.xlu0 %3787
          %3789 = vadd.xlane.f32.xlu0 %v3726
          %v3790 = vpop.xlane.xlu0 %3789
          %3791 = vadd.xlane.f32.xlu0 %v3728
          %v3792 = vpop.xlane.xlu0 %3791
          %3793 = vadd.xlane.f32.xlu0 %v3730
          %v3794 = vpop.xlane.xlu0 %3793
          %3795 = vadd.xlane.f32.xlu0 %v3732
          %v3796 = vpop.xlane.xlu0 %3795
          %3797 = vadd.xlane.f32.xlu0 %v3734
          %v3798 = vpop.xlane.xlu0 %3797
          %3799 = vadd.xlane.f32.xlu0 %v3736
          %v3800 = vpop.xlane.xlu0 %3799
          %3801 = vadd.xlane.f32.xlu0 %v3738
          %v3802 = vpop.xlane.xlu0 %3801
          %v3803 = vlog2.pop %v3740
          %v3804 = vmul.f32 %v3803, 0.6931472
          %v3805 = vlog2.pop %v3742
          %v3806 = vmul.f32 %v3805, 0.6931472
          %v3807 = vlog2.pop %v3744
          %v3808 = vmul.f32 %v3807, 0.6931472
          %v3809 = vlog2.pop %v3746
          %v3810 = vmul.f32 %v3809, 0.6931472
          %v3811 = vlog2.pop %v3748
          %v3812 = vmul.f32 %v3811, 0.6931472
          %v3813 = vlog2.pop %v3750
          %v3814 = vmul.f32 %v3813, 0.6931472
          %v3815 = vlog2.pop %v3752
          %v3816 = vmul.f32 %v3815, 0.6931472
          %v3817 = vlog2.pop %v3754
          %v3818 = vmul.f32 %v3817, 0.6931472
          %v3819 = vlog2.pop %v3756
          %v3820 = vmul.f32 %v3819, 0.6931472
          %v3821 = vlog2.pop %v3758
          %v3822 = vmul.f32 %v3821, 0.6931472
          %v3823 = vlog2.pop %v3760
          %v3824 = vmul.f32 %v3823, 0.6931472
          %v3825 = vlog2.pop %v3762
          %v3826 = vmul.f32 %v3825, 0.6931472
          %v3827 = vlog2.pop %v3764
          %v3828 = vmul.f32 %v3827, 0.6931472
          %v3829 = vlog2.pop %v3766
          %v3830 = vmul.f32 %v3829, 0.6931472
          %v3831 = vlog2.pop %v3768
          %v3832 = vmul.f32 %v3831, 0.6931472
          %v3833 = vlog2.pop %v3770
          %v3834 = vmul.f32 %v3833, 0.6931472
          %v3835 = vlog2.pop %v3772
          %v3836 = vmul.f32 %v3835, 0.6931472
          %v3837 = vlog2.pop %v3774
          %v3838 = vmul.f32 %v3837, 0.6931472
          %v3839 = vlog2.pop %v3776
          %v3840 = vmul.f32 %v3839, 0.6931472
          %v3841 = vlog2.pop %v3778
          %v3842 = vmul.f32 %v3841, 0.6931472
          %v3843 = vlog2.pop %v3780
          %v3844 = vmul.f32 %v3843, 0.6931472
          %v3845 = vlog2.pop %v3782
          %v3846 = vmul.f32 %v3845, 0.6931472
          %v3847 = vlog2.pop %v3784
          %v3848 = vmul.f32 %v3847, 0.6931472
          %v3849 = vlog2.pop %v3786
          %v3850 = vmul.f32 %v3849, 0.6931472
          %v3851 = vlog2.pop %v3788
          %v3852 = vmul.f32 %v3851, 0.6931472
          %v3853 = vlog2.pop %v3790
          %v3854 = vmul.f32 %v3853, 0.6931472
          %v3855 = vlog2.pop %v3792
          %v3856 = vmul.f32 %v3855, 0.6931472
          %v3857 = vlog2.pop %v3794
          %v3858 = vmul.f32 %v3857, 0.6931472
          %v3859 = vlog2.pop %v3796
          %v3860 = vmul.f32 %v3859, 0.6931472
          %v3861 = vlog2.pop %v3798
          %v3862 = vmul.f32 %v3861, 0.6931472
          %v3863 = vlog2.pop %v3800
          %v3864 = vmul.f32 %v3863, 0.6931472
          %v3865 = vlog2.pop %v3802
          %v3866 = vmul.f32 %v3865, 0.6931472
          %v3867 = vadd.f32 %v3804, %v3580
          %v3868 = vadd.f32 %v3806, %v3582
          %v3869 = vadd.f32 %v3808, %v3584
          %v3870 = vadd.f32 %v3810, %v3586
          %v3871 = vadd.f32 %v3812, %v3588
          %v3872 = vadd.f32 %v3814, %v3590
          %v3873 = vadd.f32 %v3816, %v3592
          %v3874 = vadd.f32 %v3818, %v3594
          %v3875 = vadd.f32 %v3820, %v3596
          %v3876 = vadd.f32 %v3822, %v3598
          %v3877 = vadd.f32 %v3824, %v3600
          %v3878 = vadd.f32 %v3826, %v3602
          %v3879 = vadd.f32 %v3828, %v3604
          %v3880 = vadd.f32 %v3830, %v3606
          %v3881 = vadd.f32 %v3832, %v3608
          %v3882 = vadd.f32 %v3834, %v3610
          %v3883 = vadd.f32 %v3836, %v3612
          %v3884 = vadd.f32 %v3838, %v3614
          %v3885 = vadd.f32 %v3840, %v3616
          %v3886 = vadd.f32 %v3842, %v3618
          %v3887 = vadd.f32 %v3844, %v3620
          %v3888 = vadd.f32 %v3846, %v3622
          %v3889 = vadd.f32 %v3848, %v3624
          %v3890 = vadd.f32 %v3850, %v3626
          %v3891 = vadd.f32 %v3852, %v3628
          %v3892 = vadd.f32 %v3854, %v3630
          %v3893 = vadd.f32 %v3856, %v3632
          %v3894 = vadd.f32 %v3858, %v3634
          %v3895 = vadd.f32 %v3860, %v3636
          %v3896 = vadd.f32 %v3862, %v3638
          %v3897 = vadd.f32 %v3864, %v3640
          %v3898 = vadd.f32 %v3866, %v3642
          %v3899 = vsub.f32 %v3547, %v3867
          %v3900 = vsub.f32 %v3548, %v3868
          %v3901 = vsub.f32 %v3549, %v3869
          %v3902 = vsub.f32 %v3550, %v3870
          %v3903 = vsub.f32 %v3551, %v3871
          %v3904 = vsub.f32 %v3552, %v3872
          %v3905 = vsub.f32 %v3553, %v3873
          %v3906 = vsub.f32 %v3554, %v3874
          %v3907 = vsub.f32 %v3555, %v3875
          %v3908 = vsub.f32 %v3556, %v3876
          %v3909 = vsub.f32 %v3557, %v3877
          %v3910 = vsub.f32 %v3558, %v3878
          %v3911 = vsub.f32 %v3559, %v3879
          %v3912 = vsub.f32 %v3560, %v3880
          %v3913 = vsub.f32 %v3561, %v3881
          %v3914 = vsub.f32 %v3562, %v3882
          %v3915 = vsub.f32 %v3563, %v3883
          %v3916 = vsub.f32 %v3564, %v3884
          %v3917 = vsub.f32 %v3565, %v3885
          %v3918 = vsub.f32 %v3566, %v3886
          %v3919 = vsub.f32 %v3567, %v3887
          %v3920 = vsub.f32 %v3568, %v3888
          %v3921 = vsub.f32 %v3569, %v3889
          %v3922 = vsub.f32 %v3570, %v3890
          %v3923 = vsub.f32 %v3571, %v3891
          %v3924 = vsub.f32 %v3572, %v3892
          %v3925 = vsub.f32 %v3573, %v3893
          %v3926 = vsub.f32 %v3574, %v3894
          %v3927 = vsub.f32 %v3575, %v3895
          %v3928 = vsub.f32 %v3576, %v3896
          %v3929 = vsub.f32 %v3577, %v3897
          %v3930 = vsub.f32 %v3578, %v3898
          %3931 = vst [vmem:[#allocation13] sm:$0xff] %v3899
          %3932 = vst [vmem:[#allocation13 + $0x8] sm:$0xff] %v3900
          %3933 = vst [vmem:[#allocation13 + $0x10] sm:$0xff] %v3901
          %3934 = vst [vmem:[#allocation13 + $0x18] sm:$0xff] %v3902
          %3935 = vst [vmem:[#allocation13 + $0x20] sm:$0xff] %v3903
          %3936 = vst [vmem:[#allocation13 + $0x28] sm:$0xff] %v3904
          %3937 = vst [vmem:[#allocation13 + $0x30] sm:$0xff] %v3905
          %3938 = vst [vmem:[#allocation13 + $0x38] sm:$0xff] %v3906
          %3939 = vst [vmem:[#allocation13 + $0x40] sm:$0xff] %v3907
          %3940 = vst [vmem:[#allocation13 + $0x48] sm:$0xff] %v3908
          %3941 = vst [vmem:[#allocation13 + $0x50] sm:$0xff] %v3909
          %3942 = vst [vmem:[#allocation13 + $0x58] sm:$0xff] %v3910
          %3943 = vst [vmem:[#allocation13 + $0x60] sm:$0xff] %v3911
          %3944 = vst [vmem:[#allocation13 + $0x68] sm:$0xff] %v3912
          %3945 = vst [vmem:[#allocation13 + $0x70] sm:$0xff] %v3913
          %3946 = vst [vmem:[#allocation13 + $0x78] sm:$0xff] %v3914
          %3947 = vst [vmem:[#allocation13 + $0x80] sm:$0xff] %v3915
          %3948 = vst [vmem:[#allocation13 + $0x88] sm:$0xff] %v3916
          %3949 = vst [vmem:[#allocation13 + $0x90] sm:$0xff] %v3917
          %3950 = vst [vmem:[#allocation13 + $0x98] sm:$0xff] %v3918
          %3951 = vst [vmem:[#allocation13 + $0xa0] sm:$0xff] %v3919
          %3952 = vst [vmem:[#allocation13 + $0xa8] sm:$0xff] %v3920
          %3953 = vst [vmem:[#allocation13 + $0xb0] sm:$0xff] %v3921
          %3954 = vst [vmem:[#allocation13 + $0xb8] sm:$0xff] %v3922
          %3955 = vst [vmem:[#allocation13 + $0xc0] sm:$0xff] %v3923
          %3956 = vst [vmem:[#allocation13 + $0xc8] sm:$0xff] %v3924
          %3957 = vst [vmem:[#allocation13 + $0xd0] sm:$0xff] %v3925
          %3958 = vst [vmem:[#allocation13 + $0xd8] sm:$0xff] %v3926
          %3959 = vst [vmem:[#allocation13 + $0xe0] sm:$0xff] %v3927
          %3960 = vst [vmem:[#allocation13 + $0xe8] sm:$0xff] %v3928
          %3961 = vst [vmem:[#allocation13 + $0xf0] sm:$0xff] %v3929
          %3962 = vst [vmem:[#allocation13 + $0xf8] sm:$0xff] %v3930
        $region112: #{tpu_custom_call.1} parent=71 // pred_fallthru
          _
        // Predicated region
        $region113: #{tpu_custom_call.1} parent=71 // pred_check
          %p3963 = pneg %p342
        $region114: #{tpu_custom_call.1} parent=71 // pred_check_branch
          %3965 = sbr.rel (%p3963) target = $region116
        $region115: #{tpu_custom_call.1} parent=71 // pred_region
          %3967 = vsyncadd [#allocation6], 0
          %s3968 = sshll.u32 [#allocation13], 4
          %s3969 = int_to_ptr.vmem [resolvable:$true] %s3968
          %s3970 = sshll.u32 %s13, 4
          %s3971 = int_to_ptr.hbm [resolvable:$true] %s3970
          %3976 = dma.vmem_to_hbm [thread:$0]  %s3969, 4096, %s3971, [#allocation6], 128, 128, 8
        $region116: #{tpu_custom_call.1} parent=71 // pred_fallthru
          _
        // Predicated region
        $region117: #{tpu_custom_call.1} parent=71 // pred_check
          %p3977 = pneg %p342
        $region118: #{tpu_custom_call.1} parent=71 // pred_check_branch
          %3979 = sbr.rel (%p3977) target = $region120
        $region119: #{tpu_custom_call.1} parent=71 // pred_region
          %3981 = dma.done [#allocation6], 4096
        $region120: #{tpu_custom_call.1} parent=71 // pred_fallthru
          _
      $region72: #{tpu_custom_call.1} parent=5 // pred_fallthru
        _
      %p3982 = scmp.le.s32.totalorder 2, %s25
      // Predicated region
      $region121: #{tpu_custom_call.1} parent=5 // pred_check
        %p3983 = pneg %p3982
      $region122: #{tpu_custom_call.1} parent=5 // pred_check_branch
        %3985 = sbr.rel (%p3983) target = $region124
      $region123: #{tpu_custom_call.1} parent=5 // pred_region
        %s3986 = ssub.s32 %s25, 2
      $region124: #{tpu_custom_call.1} parent=5 // pred_fallthru
        _
    $region6: #{tpu_custom_call.1} parent=1 // loop_footer
      %s29 = sadd.s32 1, %s25
    $region7: #{tpu_custom_call.1} parent=1 // loop_footer_branch
      %24 = sbr.rel target = $region3
    $region8: #{tpu_custom_call.1} parent=1 // loop_exit
      _
    %3987 = vsyncpa [#allocation5], 1
    %s3988 = scalar_lea.sflag [#allocation5], 1
    %3989 = vsyncpa %s3988, 1
    %3990 = vsyncpa [#allocation8], 1
    %s3991 = scalar_lea.sflag [#allocation8], 1
    %3992 = vsyncpa %s3991, 1
    %3993 = vsyncpa [#allocation11], 1
    %3994 = vsyncpa [#allocation6], 1
    %s3995 = scalar_lea.sflag [#allocation6], 1
    %3996 = vsyncpa %s3995, 1

</llo_original>
